<compile_context>
chip_gen: v5e
topology: v5e:2x2
jax: 0.10.0
libtpu: 0.0.40
codegen_flags: <defaults>
</compile_context>

<pallas_src>
import jax
import jax.numpy as jnp
from jax.experimental import pallas as pl
from jax.experimental.pallas import tpu as pltpu


def coupling_kernel(x_ref,
                    wf1_ref, bf1_ref, wf2_ref, bf2_ref,
                    wg1_ref, bg1_ref, wg2_ref, bg2_ref,
                    y_ref):
    half = x_ref.shape[-1] // 2
    mm = wf1_ref.dtype                       # bf16 MXU operand dtype

    # Direct lane-aligned ref slices (half % 128 == 0): no full-tile
    # materialization; activations stay bf16 until the MXU / residual.
    x1 = x_ref[:, :half]                     # bf16 (residual only)
    x2 = x_ref[:, half:]                     # bf16 (MXU operand + residual)

    # F(X_2): Linear -> GELU -> Linear   (bf16 MXU operands, f32 accumulate)
    h = jnp.dot(x2, wf1_ref[...], preferred_element_type=jnp.float32)
    h = jax.nn.gelu(h + bf1_ref[...])
    f = jnp.dot(h.astype(mm), wf2_ref[...],
                preferred_element_type=jnp.float32) + bf2_ref[...]
    y1 = (x1.astype(jnp.float32) + f).astype(y_ref.dtype)   # Y_1 = X_1 + F(X_2)

    # G(Y_1): Linear -> GELU -> Linear
    h2 = jnp.dot(y1.astype(mm), wg1_ref[...], preferred_element_type=jnp.float32)
    h2 = jax.nn.gelu(h2 + bg1_ref[...])
    g = jnp.dot(h2.astype(mm), wg2_ref[...],
                preferred_element_type=jnp.float32) + bg2_ref[...]
    y2 = (x2.astype(jnp.float32) + g).astype(y_ref.dtype)   # Y_2 = X_2 + G(Y_1)

    # Lane-aligned (half % 128 == 0) unmasked stores into the two column
    # halves of one (tm, D) output block.
    y_ref[:, :half] = y1
    y_ref[:, half:] = y2


def _choose_row_tile(M, *, tm_max=1024, tm_min=128, min_steps=8):
    """Row tile: multiple of 8, never below tm_min (M is padded up instead of
    degrading the tile), and small enough that the grid has ~min_steps steps
    for the BlockSpec pipeline (and both v7x TensorCores) to overlap."""
    tm = -(-M // min_steps)                      # aim for >= min_steps grid steps
    tm = max(tm_min, min(tm_max, tm))
    tm = max(8, (tm // 8) * 8)                   # multiple of 8
    return min(tm, max(8, -(-M // 8) * 8))       # never exceed (padded) M


def coupling_block(x, params, *, tm=None,
                   compute_dtype=jnp.bfloat16, io_dtype=jnp.bfloat16):
    """Forward pass of CouplingBlock: Y1 = X1 + F(X2); Y2 = X2 + G(Y1).

    x: (B, S, D), D even, D//2 and hidden multiples of 128.  Activations
    travel HBM<->VMEM in `io_dtype` (bf16 default: kernel is HBM-bound, so
    halving activation bytes is the main win); residual adds / GELU in f32.
    Returns (B, S, D) in `io_dtype`.
    """
    B, S, D = x.shape
    assert D % 2 == 0
    half = D // 2
    assert half % 128 == 0, "feature half must be lane-aligned (multiple of 128)"

    wf1, bf1, wf2, bf2, wg1, bg1, wg2, bg2 = params
    hidden = wf1.shape[1]
    assert hidden % 128 == 0, "hidden must be lane-aligned (multiple of 128)"

    M = B * S
    tm = _choose_row_tile(M) if tm is None else tm
    assert tm % 8 == 0
    m_pad = -(-M // tm) * tm
    grid = (m_pad // tm,)

    # Activations to bf16 once (halves HBM traffic); weights pre-cast once.
    xf = x.reshape(M, D).astype(io_dtype)
    if m_pad != M:
        xf = jnp.pad(xf, ((0, m_pad - M), (0, 0)))

    wf1c, wf2c = wf1.astype(compute_dtype), wf2.astype(compute_dtype)
    wg1c, wg2c = wg1.astype(compute_dtype), wg2.astype(compute_dtype)

    row_spec = pl.BlockSpec((tm, D), lambda i: (i, 0))

    def resident(r, c):
        # Constant block index -> same block revisited every step (no re-DMA).
        # TODO(synk): for much larger `hidden`, add pipeline_mode=pl.Buffered(1)
        # here to drop the (useless) second buffer of each resident operand.
        return pl.BlockSpec((r, c), lambda i: (0, 0))

    # Right-sized VMEM budget (~2x estimated footprint + slack), floor 16 MiB,
    # always well under v7x's 64 MiB physical VMEM.
    iosz = jnp.dtype(io_dtype).itemsize
    wsz = jnp.dtype(compute_dtype).itemsize
    est = (2 * 2 * tm * D * iosz                    # in + out tiles, double-buffered
           + 2 * 4 * half * hidden * wsz            # resident weights, double-buffered
           + 6 * tm * max(hidden, half) * 4)        # f32 intermediates (generous)
    vmem_limit = int(min(56 * 1024 * 1024,
                         max(16 * 1024 * 1024, 2 * est + 4 * 1024 * 1024)))

    y = pl.pallas_call(
        coupling_kernel,
        out_shape=jax.ShapeDtypeStruct((m_pad, D), io_dtype),
        grid=grid,
        in_specs=[row_spec,
                  resident(half, hidden), resident(1, hidden),
                  resident(hidden, half), resident(1, half),
                  resident(half, hidden), resident(1, hidden),
                  resident(hidden, half), resident(1, half)],
        out_specs=row_spec,
        # Y fully overwrites X block-for-block (same index_map, same dtype):
        # reuse the HBM buffer -- the memory win of a reversible layer.
        input_output_aliases={0: 0},
        compiler_params=pltpu.CompilerParams(
            dimension_semantics=("parallel",),
            vmem_limit_bytes=vmem_limit),
    )(xf, wf1c, bf1, wf2c, bf2, wg1c, bg1, wg2c, bg2)

    if m_pad != M:
        y = y[:M]
    return y.reshape(B, S, D)


def init_params(key, half, hidden):
    ks = jax.random.split(key, 8)
    scale1 = 1.0 / jnp.sqrt(half)
    scale2 = 1.0 / jnp.sqrt(hidden)
    wf1 = jax.random.normal(ks[0], (half, hidden), jnp.float32) * scale1
    bf1 = jax.random.normal(ks[1], (1, hidden), jnp.float32) * 0.01
    wf2 = jax.random.normal(ks[2], (hidden, half), jnp.float32) * scale2
    bf2 = jax.random.normal(ks[3], (1, half), jnp.float32) * 0.01
    wg1 = jax.random.normal(ks[4], (half, hidden), jnp.float32) * scale1
    bg1 = jax.random.normal(ks[5], (1, hidden), jnp.float32) * 0.01
    wg2 = jax.random.normal(ks[6], (hidden, half), jnp.float32) * scale2
    bg2 = jax.random.normal(ks[7], (1, half), jnp.float32) * 0.01
    return (wf1, bf1, wf2, bf2, wg1, bg1, wg2, bg2)


def reference_forward(x, params, *, compute_dtype=jnp.bfloat16,
                      io_dtype=jnp.bfloat16):
    """Pure-JAX reference mirroring CouplingBlock.forward with the same
    bf16 activation I/O, bf16 MXU operands and f32 accumulation/residuals
    as the kernel."""
    wf1, bf1, wf2, bf2, wg1, bg1, wg2, bg2 = params
    half = x.shape[-1] // 2
    xc = x.astype(io_dtype)
    x1, x2 = xc[..., :half], xc[..., half:]

    def mlp(z, w1, b1, w2, b2):
        h = jnp.dot(z.astype(compute_dtype), w1.astype(compute_dtype),
                    preferred_element_type=jnp.float32)
        h = jax.nn.gelu(h + b1[0])
        return jnp.dot(h.astype(compute_dtype), w2.astype(compute_dtype),
                       preferred_element_type=jnp.float32) + b2[0]

    y1 = (x1.astype(jnp.float32) + mlp(x2, wf1, bf1, wf2, bf2)).astype(io_dtype)
    y2 = (x2.astype(jnp.float32) + mlp(y1, wg1, bg1, wg2, bg2)).astype(io_dtype)
    return jnp.concatenate([y1, y2], axis=-1)


# TODO(synk): the custom InvertibleCouplingLayer backward (memory flushing /
# reversible activation recomputation) is an autograd-memory optimization with
# no forward-semantics effect; only the forward pass is implemented here.
# Note: jax.nn.gelu uses the tanh approximation (PyTorch nn.GELU default is
# exact erf); kernel and reference use the same approximation.
# Note: with half=128 the contraction only half-fills the 256x256 MXU on
# v6e/v7x; irrelevant while HBM-bound, but pick half/hidden as multiples of
# 256 there if the model grows to compute-bound sizes.

if __name__ == "__main__":
    # d_model = 256 -> lane-aligned halves of 128; M = B*S = 2048 rows ->
    # eight 256-row grid steps (pipeline overlap, and >=4 steps per v7x TC).
    B, S, D = 2, 1024, 256
    HIDDEN = 256
    key = jax.random.PRNGKey(0)
    kx, kp = jax.random.split(key)
    x = jax.random.normal(kx, (B, S, D), jnp.float32)
    params = init_params(kp, D // 2, HIDDEN)

    out = coupling_block(x, params)
    out = jax.block_until_ready(out)

    ref = reference_forward(x, params)
    assert out.shape == (B, S, D)
    assert out.dtype == ref.dtype
    out_f = out.astype(jnp.float32)
    ref_f = ref.astype(jnp.float32)
    max_err = float(jnp.max(jnp.abs(out_f - ref_f)))
    assert jnp.allclose(out_f, ref_f, atol=5e-2, rtol=2e-2), \
        f"mismatch vs JAX reference (max abs err {max_err})"
    print("KERNEL_OK")
</pallas_src>

<mosaic_0001>
module attributes {stable_mosaic.version = 11 : i64} {
  func.func @coupling_kernel(%arg0: i32, %arg1: memref<256x256xbf16, #tpu.memory_space<vmem>>, %arg2: memref<128x256xbf16, #tpu.memory_space<vmem>>, %arg3: memref<1x256xf32, #tpu.memory_space<vmem>>, %arg4: memref<256x128xbf16, #tpu.memory_space<vmem>>, %arg5: memref<1x128xf32, #tpu.memory_space<vmem>>, %arg6: memref<128x256xbf16, #tpu.memory_space<vmem>>, %arg7: memref<1x256xf32, #tpu.memory_space<vmem>>, %arg8: memref<256x128xbf16, #tpu.memory_space<vmem>>, %arg9: memref<1x128xf32, #tpu.memory_space<vmem>>, %arg10: memref<256x256xbf16, #tpu.memory_space<vmem>>) attributes {dimension_semantics = [#tpu.dimension_semantics<parallel>], iteration_bounds = array<i64: 8>, scalar_prefetch = 0 : i64, scratch_operands = 0 : i64, tpu.core_type = #tpu.core_type<tc>, window_params = [{transform_indices = @transform_0, window_bounds = array<i64: 256, 256>}, {pipeline_mode = #tpu.pipeline_mode<synchronous>, transform_indices = @transform_1, window_bounds = array<i64: 128, 256>}, {pipeline_mode = #tpu.pipeline_mode<synchronous>, transform_indices = @transform_2, window_bounds = array<i64: 1, 256>}, {pipeline_mode = #tpu.pipeline_mode<synchronous>, transform_indices = @transform_3, window_bounds = array<i64: 256, 128>}, {pipeline_mode = #tpu.pipeline_mode<synchronous>, transform_indices = @transform_4, window_bounds = array<i64: 1, 128>}, {pipeline_mode = #tpu.pipeline_mode<synchronous>, transform_indices = @transform_5, window_bounds = array<i64: 128, 256>}, {pipeline_mode = #tpu.pipeline_mode<synchronous>, transform_indices = @transform_6, window_bounds = array<i64: 1, 256>}, {pipeline_mode = #tpu.pipeline_mode<synchronous>, transform_indices = @transform_7, window_bounds = array<i64: 256, 128>}, {pipeline_mode = #tpu.pipeline_mode<synchronous>, transform_indices = @transform_8, window_bounds = array<i64: 1, 128>}, {transform_indices = @transform_9, window_bounds = array<i64: 256, 256>}]} {
    %c0 = arith.constant 0 : index
    %c0_0 = arith.constant 0 : index
    %0 = vector.load %arg1[%c0, %c0_0] : memref<256x256xbf16, #tpu.memory_space<vmem>>, vector<256x128xbf16>
    %c0_1 = arith.constant 0 : index
    %c128 = arith.constant 128 : index
    %1 = vector.load %arg1[%c0_1, %c128] : memref<256x256xbf16, #tpu.memory_space<vmem>>, vector<256x128xbf16>
    %c0_2 = arith.constant 0 : index
    %c0_3 = arith.constant 0 : index
    %2 = vector.load %arg2[%c0_2, %c0_3] : memref<128x256xbf16, #tpu.memory_space<vmem>>, vector<128x256xbf16>
    %cst = arith.constant dense<0.000000e+00> : vector<256x256xf32>
    %3 = tpu.matmul %1, %2, %cst {dimension_numbers = #tpu.dot_dimension_numbers<[1], [0], [0], [1], [0, 0, 1, 1], [], []>} : vector<256x128xbf16>, vector<128x256xbf16>, vector<256x256xf32> -> vector<256x256xf32>
    %c0_4 = arith.constant 0 : index
    %c0_5 = arith.constant 0 : index
    %4 = vector.load %arg3[%c0_4, %c0_5] : memref<1x256xf32, #tpu.memory_space<vmem>>, vector<1x256xf32>
    %5 = vector.broadcast %4 : vector<1x256xf32> to vector<256x256xf32>
    %6 = arith.addf %3, %5 : vector<256x256xf32>
    %7 = arith.mulf %6, %6 : vector<256x256xf32>
    %8 = arith.mulf %6, %7 : vector<256x256xf32>
    %cst_6 = arith.constant 4.471500e-02 : f32
    %9 = vector.broadcast %cst_6 : f32 to vector<256x256xf32>
    %10 = arith.mulf %9, %8 : vector<256x256xf32>
    %11 = arith.addf %6, %10 : vector<256x256xf32>
    %cst_7 = arith.constant 0.797884583 : f32
    %12 = vector.broadcast %cst_7 : f32 to vector<256x256xf32>
    %13 = arith.mulf %12, %11 : vector<256x256xf32>
    %14 = math.tanh %13 : vector<256x256xf32>
    %cst_8 = arith.constant 1.000000e+00 : f32
    %15 = vector.broadcast %cst_8 : f32 to vector<256x256xf32>
    %16 = arith.addf %15, %14 : vector<256x256xf32>
    %cst_9 = arith.constant 5.000000e-01 : f32
    %17 = vector.broadcast %cst_9 : f32 to vector<256x256xf32>
    %18 = arith.mulf %17, %16 : vector<256x256xf32>
    %19 = arith.mulf %6, %18 : vector<256x256xf32>
    %20 = arith.truncf %19 : vector<256x256xf32> to vector<256x256xbf16>
    %c0_10 = arith.constant 0 : index
    %c0_11 = arith.constant 0 : index
    %21 = vector.load %arg4[%c0_10, %c0_11] : memref<256x128xbf16, #tpu.memory_space<vmem>>, vector<256x128xbf16>
    %cst_12 = arith.constant dense<0.000000e+00> : vector<256x128xf32>
    %22 = tpu.matmul %20, %21, %cst_12 {dimension_numbers = #tpu.dot_dimension_numbers<[1], [0], [0], [1], [0, 0, 1, 1], [], []>} : vector<256x256xbf16>, vector<256x128xbf16>, vector<256x128xf32> -> vector<256x128xf32>
    %c0_13 = arith.constant 0 : index
    %c0_14 = arith.constant 0 : index
    %23 = vector.load %arg5[%c0_13, %c0_14] : memref<1x128xf32, #tpu.memory_space<vmem>>, vector<1x128xf32>
    %24 = vector.broadcast %23 : vector<1x128xf32> to vector<256x128xf32>
    %25 = arith.addf %22, %24 : vector<256x128xf32>
    %26 = arith.extf %0 : vector<256x128xbf16> to vector<256x128xf32>
    %27 = arith.addf %26, %25 : vector<256x128xf32>
    %28 = arith.truncf %27 : vector<256x128xf32> to vector<256x128xbf16>
    %c0_15 = arith.constant 0 : index
    %c0_16 = arith.constant 0 : index
    %29 = vector.load %arg6[%c0_15, %c0_16] : memref<128x256xbf16, #tpu.memory_space<vmem>>, vector<128x256xbf16>
    %cst_17 = arith.constant dense<0.000000e+00> : vector<256x256xf32>
    %30 = tpu.matmul %28, %29, %cst_17 {dimension_numbers = #tpu.dot_dimension_numbers<[1], [0], [0], [1], [0, 0, 1, 1], [], []>} : vector<256x128xbf16>, vector<128x256xbf16>, vector<256x256xf32> -> vector<256x256xf32>
    %c0_18 = arith.constant 0 : index
    %c0_19 = arith.constant 0 : index
    %31 = vector.load %arg7[%c0_18, %c0_19] : memref<1x256xf32, #tpu.memory_space<vmem>>, vector<1x256xf32>
    %32 = vector.broadcast %31 : vector<1x256xf32> to vector<256x256xf32>
    %33 = arith.addf %30, %32 : vector<256x256xf32>
    %34 = arith.mulf %33, %33 : vector<256x256xf32>
    %35 = arith.mulf %33, %34 : vector<256x256xf32>
    %cst_20 = arith.constant 4.471500e-02 : f32
    %36 = vector.broadcast %cst_20 : f32 to vector<256x256xf32>
    %37 = arith.mulf %36, %35 : vector<256x256xf32>
    %38 = arith.addf %33, %37 : vector<256x256xf32>
    %cst_21 = arith.constant 0.797884583 : f32
    %39 = vector.broadcast %cst_21 : f32 to vector<256x256xf32>
    %40 = arith.mulf %39, %38 : vector<256x256xf32>
    %41 = math.tanh %40 : vector<256x256xf32>
    %cst_22 = arith.constant 1.000000e+00 : f32
    %42 = vector.broadcast %cst_22 : f32 to vector<256x256xf32>
    %43 = arith.addf %42, %41 : vector<256x256xf32>
    %cst_23 = arith.constant 5.000000e-01 : f32
    %44 = vector.broadcast %cst_23 : f32 to vector<256x256xf32>
    %45 = arith.mulf %44, %43 : vector<256x256xf32>
    %46 = arith.mulf %33, %45 : vector<256x256xf32>
    %47 = arith.truncf %46 : vector<256x256xf32> to vector<256x256xbf16>
    %c0_24 = arith.constant 0 : index
    %c0_25 = arith.constant 0 : index
    %48 = vector.load %arg8[%c0_24, %c0_25] : memref<256x128xbf16, #tpu.memory_space<vmem>>, vector<256x128xbf16>
    %cst_26 = arith.constant dense<0.000000e+00> : vector<256x128xf32>
    %49 = tpu.matmul %47, %48, %cst_26 {dimension_numbers = #tpu.dot_dimension_numbers<[1], [0], [0], [1], [0, 0, 1, 1], [], []>} : vector<256x256xbf16>, vector<256x128xbf16>, vector<256x128xf32> -> vector<256x128xf32>
    %c0_27 = arith.constant 0 : index
    %c0_28 = arith.constant 0 : index
    %50 = vector.load %arg9[%c0_27, %c0_28] : memref<1x128xf32, #tpu.memory_space<vmem>>, vector<1x128xf32>
    %51 = vector.broadcast %50 : vector<1x128xf32> to vector<256x128xf32>
    %52 = arith.addf %49, %51 : vector<256x128xf32>
    %53 = arith.extf %1 : vector<256x128xbf16> to vector<256x128xf32>
    %54 = arith.addf %53, %52 : vector<256x128xf32>
    %55 = arith.truncf %54 : vector<256x128xf32> to vector<256x128xbf16>
    %c0_29 = arith.constant 0 : index
    %c0_30 = arith.constant 0 : index
    %56 = vector.load %arg10[%c0_29, %c0_30] : memref<256x256xbf16, #tpu.memory_space<vmem>>, vector<256x128xbf16>
    tpu.vector_store %arg10[%c0_29, %c0_30], %28 {strides = array<i32>} : memref<256x256xbf16, #tpu.memory_space<vmem>>, vector<256x128xbf16>,
    %c0_31 = arith.constant 0 : index
    %c128_32 = arith.constant 128 : index
    %57 = vector.load %arg10[%c0_31, %c128_32] : memref<256x256xbf16, #tpu.memory_space<vmem>>, vector<256x128xbf16>
    tpu.vector_store %arg10[%c0_31, %c128_32], %55 {strides = array<i32>} : memref<256x256xbf16, #tpu.memory_space<vmem>>, vector<256x128xbf16>,
    return
  }
  func.func @transform_0(%arg0: i32) -> (i32, i32) {
    %c0_i32 = arith.constant 0 : i32
    %c0_i32_0 = arith.constant 0 : i32
    return %arg0, %c0_i32 : i32, i32
  }
  func.func @transform_1(%arg0: i32) -> (i32, i32) {
    %c0_i32 = arith.constant 0 : i32
    %c0_i32_0 = arith.constant 0 : i32
    %c0_i32_1 = arith.constant 0 : i32
    return %c0_i32, %c0_i32_0 : i32, i32
  }
  func.func @transform_2(%arg0: i32) -> (i32, i32) {
    %c0_i32 = arith.constant 0 : i32
    %c0_i32_0 = arith.constant 0 : i32
    %c0_i32_1 = arith.constant 0 : i32
    return %c0_i32, %c0_i32_0 : i32, i32
  }
  func.func @transform_3(%arg0: i32) -> (i32, i32) {
    %c0_i32 = arith.constant 0 : i32
    %c0_i32_0 = arith.constant 0 : i32
    %c0_i32_1 = arith.constant 0 : i32
    return %c0_i32, %c0_i32_0 : i32, i32
  }
  func.func @transform_4(%arg0: i32) -> (i32, i32) {
    %c0_i32 = arith.constant 0 : i32
    %c0_i32_0 = arith.constant 0 : i32
    %c0_i32_1 = arith.constant 0 : i32
    return %c0_i32, %c0_i32_0 : i32, i32
  }
  func.func @transform_5(%arg0: i32) -> (i32, i32) {
    %c0_i32 = arith.constant 0 : i32
    %c0_i32_0 = arith.constant 0 : i32
    %c0_i32_1 = arith.constant 0 : i32
    return %c0_i32, %c0_i32_0 : i32, i32
  }
  func.func @transform_6(%arg0: i32) -> (i32, i32) {
    %c0_i32 = arith.constant 0 : i32
    %c0_i32_0 = arith.constant 0 : i32
    %c0_i32_1 = arith.constant 0 : i32
    return %c0_i32, %c0_i32_0 : i32, i32
  }
  func.func @transform_7(%arg0: i32) -> (i32, i32) {
    %c0_i32 = arith.constant 0 : i32
    %c0_i32_0 = arith.constant 0 : i32
    %c0_i32_1 = arith.constant 0 : i32
    return %c0_i32, %c0_i32_0 : i32, i32
  }
  func.func @transform_8(%arg0: i32) -> (i32, i32) {
    %c0_i32 = arith.constant 0 : i32
    %c0_i32_0 = arith.constant 0 : i32
    %c0_i32_1 = arith.constant 0 : i32
    return %c0_i32, %c0_i32_0 : i32, i32
  }
  func.func @transform_9(%arg0: i32) -> (i32, i32) {
    %c0_i32 = arith.constant 0 : i32
    %c0_i32_0 = arith.constant 0 : i32
    return %arg0, %c0_i32 : i32, i32
  }
}

</mosaic_0001>

<llo_original>
// kernel: tpu_custom_call.1
$region0: #{tpu_custom_call.1}
  #allocation0 [shape = 'u32[]', space=smem, size = 0x4, offset = 0x4, fixed_abs, tag = 'smem constant byte address 0x4 - core index']
  #allocation1 [shape = 'u32[72,128]{1,0:T(1,128)}', space=vmem, size = 0x9000, scoped, tag = 'internal scratch']
  %s0 = inlined_call_operand.hbm [shape: bf16[2048,256], index: 0, kind: input, shape index: {}, may-alias: {0,9}]
  %s1 = inlined_call_operand.vmem [shape: bf16[128,256], index: 1, kind: input, shape index: {}]
  %s2 = inlined_call_operand.vmem [shape: f32[1,256], index: 2, kind: input, shape index: {}]
  %s3 = inlined_call_operand.vmem [shape: bf16[256,128], index: 3, kind: input, shape index: {}]
  %s4 = inlined_call_operand.vmem [shape: f32[1,128], index: 4, kind: input, shape index: {}]
  %s5 = inlined_call_operand.vmem [shape: bf16[128,256], index: 5, kind: input, shape index: {}]
  %s6 = inlined_call_operand.vmem [shape: f32[1,256], index: 6, kind: input, shape index: {}]
  %s7 = inlined_call_operand.vmem [shape: bf16[256,128], index: 7, kind: input, shape index: {}]
  %s8 = inlined_call_operand.vmem [shape: f32[1,128], index: 8, kind: input, shape index: {}]
  %s9 = inlined_call_operand.hbm [shape: bf16[2048,256], index: 9, kind: output, shape index: {}, may-alias: {0,9}]
  %s10 = sld [smem:[#allocation0]]
  $region73: #{tpu_custom_call.1} parent=0
    _
  %s12 = ssub.s32 1, %s10
  %s13 = scalar_select 0, %s12, %s10
  $region1: #{tpu_custom_call.1} parent=0
    #allocation2 [shape = 'u8[262144]{0}', space=vmem, size = 0x40000, scoped, tag = 'input window, operand 0']
    #allocation3 [shape = 's32[2]{0}', space=sflag, size = 0x8, scoped, tag = 'scoped memory for tpu_custom_call.1']
    #allocation4 [shape = 's32[2]{0}', space=sflag, size = 0x8, scoped, tag = 'scoped memory for tpu_custom_call.1']
    #allocation5 [shape = 'u8[262144]{0}', space=vmem, size = 0x40000, scoped, tag = 'output window, operand 0']
    %14 = vsyncpa [#allocation3], 0
    %s15 = scalar_lea.sflag [#allocation3], 1
    %16 = vsyncpa %s15, 0
    %17 = vsyncpa [#allocation4], 0
    %s18 = scalar_lea.sflag [#allocation4], 1
    %19 = vsyncpa %s18, 0
    loop: start=0, step=1, limit=10
    $region2: #{tpu_custom_call.1} parent=1 // loop_pre_header
      _
    $region3: #{tpu_custom_call.1} parent=1 // loop_header
      %s21 = sphi 0, %s25
      %p22 = scmp.ge.s32.totalorder %s21, 10
      %s31 = sphi 0, %s33
      %s34 = sphi 0, %s31
      %s35 = sphi 0, %s34
      %s51 = sphi 0, %s35
      %s55 = sphi 0, %s55
      %s57 = sphi 0, %s55
      %s58 = sphi 0, %s57
      %s72 = sphi 0, %s58
      %s76 = sphi 0, %s76
      %s78 = sphi 0, %s76
      %s79 = sphi 0, %s78
      %s93 = sphi 0, %s79
      %s97 = sphi 0, %s97
      %s99 = sphi 0, %s97
      %s100 = sphi 0, %s99
      %s114 = sphi 0, %s100
      %s118 = sphi 0, %s118
      %s120 = sphi 0, %s118
      %s121 = sphi 0, %s120
      %s135 = sphi 0, %s121
      %s139 = sphi 0, %s139
      %s141 = sphi 0, %s139
      %s142 = sphi 0, %s141
      %s156 = sphi 0, %s142
      %s160 = sphi 0, %s160
      %s162 = sphi 0, %s160
      %s163 = sphi 0, %s162
      %s177 = sphi 0, %s163
      %s181 = sphi 0, %s181
      %s183 = sphi 0, %s181
      %s184 = sphi 0, %s183
      %s198 = sphi 0, %s184
      %s202 = sphi 0, %s202
      %s204 = sphi 0, %s202
      %s205 = sphi 0, %s204
      %s219 = sphi 0, %s205
      %s225 = sphi 0, %s227
      %s228 = sphi 0, %s225
      %s229 = sphi 0, %s228
      %s245 = sphi 0, %s229
    $region4: #{tpu_custom_call.1} parent=1 // loop_header_branch
      %24 = sbr.rel (%p22) target = $region8
    $region5: #{tpu_custom_call.1} parent=1 // loop_body
      %s26 = ssub.s32 %s21, 1
      %s27 = ssub.s32 %s21, 2
      %s28 = sadd.s32 %s21, 1
      %s29 = ssub.s32 %s21, %s28
      %p30 = scmp.eq.s32.totalorder %s29, 0
      %s32 = sadd.s32 %s31, 1
      %s33 = scalar_select %p30, %s31, %s32
      %p36 = pneg %p30
      %p37 = scmp.eq.s32.totalorder %s21, 7
      %p38 = por %p36, %p37
      %p39 = scmp.ne.s32.totalorder %s31, %s34
      %p40 = scmp.eq.s32.totalorder %s21, 0
      %p41 = por %p39, %p40
      %p42 = scmp.ne.s32.totalorder %s31, %s34
      %p43 = scmp.eq.s32.totalorder %s26, 7
      %p44 = por %p42, %p43
      %p45 = scmp.ne.s32.totalorder %s34, %s35
      %p46 = scmp.eq.s32.totalorder %s26, 0
      %p47 = por %p45, %p46
      %p48 = scmp.ne.s32.totalorder %s34, %s35
      %p49 = scmp.eq.s32.totalorder %s27, 7
      %p50 = por %p48, %p49
      %p52 = scmp.ne.s32.totalorder %s35, %s51
      %p53 = scmp.eq.s32.totalorder %s27, 0
      %p54 = por %p52, %p53
      %s56 = sadd.s32 %s55, 1
      %p59 = scmp.eq.s32.totalorder %s21, 7
      %p60 = scmp.ne.s32.totalorder %s55, %s57
      %p61 = scmp.eq.s32.totalorder %s21, 0
      %p62 = por %p60, %p61
      %p63 = scmp.ne.s32.totalorder %s55, %s57
      %p64 = scmp.eq.s32.totalorder %s26, 7
      %p65 = por %p63, %p64
      %p66 = scmp.ne.s32.totalorder %s57, %s58
      %p67 = scmp.eq.s32.totalorder %s26, 0
      %p68 = por %p66, %p67
      %p69 = scmp.ne.s32.totalorder %s57, %s58
      %p70 = scmp.eq.s32.totalorder %s27, 7
      %p71 = por %p69, %p70
      %p73 = scmp.ne.s32.totalorder %s58, %s72
      %p74 = scmp.eq.s32.totalorder %s27, 0
      %p75 = por %p73, %p74
      %s77 = sadd.s32 %s76, 1
      %p80 = scmp.eq.s32.totalorder %s21, 7
      %p81 = scmp.ne.s32.totalorder %s76, %s78
      %p82 = scmp.eq.s32.totalorder %s21, 0
      %p83 = por %p81, %p82
      %p84 = scmp.ne.s32.totalorder %s76, %s78
      %p85 = scmp.eq.s32.totalorder %s26, 7
      %p86 = por %p84, %p85
      %p87 = scmp.ne.s32.totalorder %s78, %s79
      %p88 = scmp.eq.s32.totalorder %s26, 0
      %p89 = por %p87, %p88
      %p90 = scmp.ne.s32.totalorder %s78, %s79
      %p91 = scmp.eq.s32.totalorder %s27, 7
      %p92 = por %p90, %p91
      %p94 = scmp.ne.s32.totalorder %s79, %s93
      %p95 = scmp.eq.s32.totalorder %s27, 0
      %p96 = por %p94, %p95
      %s98 = sadd.s32 %s97, 1
      %p101 = scmp.eq.s32.totalorder %s21, 7
      %p102 = scmp.ne.s32.totalorder %s97, %s99
      %p103 = scmp.eq.s32.totalorder %s21, 0
      %p104 = por %p102, %p103
      %p105 = scmp.ne.s32.totalorder %s97, %s99
      %p106 = scmp.eq.s32.totalorder %s26, 7
      %p107 = por %p105, %p106
      %p108 = scmp.ne.s32.totalorder %s99, %s100
      %p109 = scmp.eq.s32.totalorder %s26, 0
      %p110 = por %p108, %p109
      %p111 = scmp.ne.s32.totalorder %s99, %s100
      %p112 = scmp.eq.s32.totalorder %s27, 7
      %p113 = por %p111, %p112
      %p115 = scmp.ne.s32.totalorder %s100, %s114
      %p116 = scmp.eq.s32.totalorder %s27, 0
      %p117 = por %p115, %p116
      %s119 = sadd.s32 %s118, 1
      %p122 = scmp.eq.s32.totalorder %s21, 7
      %p123 = scmp.ne.s32.totalorder %s118, %s120
      %p124 = scmp.eq.s32.totalorder %s21, 0
      %p125 = por %p123, %p124
      %p126 = scmp.ne.s32.totalorder %s118, %s120
      %p127 = scmp.eq.s32.totalorder %s26, 7
      %p128 = por %p126, %p127
      %p129 = scmp.ne.s32.totalorder %s120, %s121
      %p130 = scmp.eq.s32.totalorder %s26, 0
      %p131 = por %p129, %p130
      %p132 = scmp.ne.s32.totalorder %s120, %s121
      %p133 = scmp.eq.s32.totalorder %s27, 7
      %p134 = por %p132, %p133
      %p136 = scmp.ne.s32.totalorder %s121, %s135
      %p137 = scmp.eq.s32.totalorder %s27, 0
      %p138 = por %p136, %p137
      %s140 = sadd.s32 %s139, 1
      %p143 = scmp.eq.s32.totalorder %s21, 7
      %p144 = scmp.ne.s32.totalorder %s139, %s141
      %p145 = scmp.eq.s32.totalorder %s21, 0
      %p146 = por %p144, %p145
      %p147 = scmp.ne.s32.totalorder %s139, %s141
      %p148 = scmp.eq.s32.totalorder %s26, 7
      %p149 = por %p147, %p148
      %p150 = scmp.ne.s32.totalorder %s141, %s142
      %p151 = scmp.eq.s32.totalorder %s26, 0
      %p152 = por %p150, %p151
      %p153 = scmp.ne.s32.totalorder %s141, %s142
      %p154 = scmp.eq.s32.totalorder %s27, 7
      %p155 = por %p153, %p154
      %p157 = scmp.ne.s32.totalorder %s142, %s156
      %p158 = scmp.eq.s32.totalorder %s27, 0
      %p159 = por %p157, %p158
      %s161 = sadd.s32 %s160, 1
      %p164 = scmp.eq.s32.totalorder %s21, 7
      %p165 = scmp.ne.s32.totalorder %s160, %s162
      %p166 = scmp.eq.s32.totalorder %s21, 0
      %p167 = por %p165, %p166
      %p168 = scmp.ne.s32.totalorder %s160, %s162
      %p169 = scmp.eq.s32.totalorder %s26, 7
      %p170 = por %p168, %p169
      %p171 = scmp.ne.s32.totalorder %s162, %s163
      %p172 = scmp.eq.s32.totalorder %s26, 0
      %p173 = por %p171, %p172
      %p174 = scmp.ne.s32.totalorder %s162, %s163
      %p175 = scmp.eq.s32.totalorder %s27, 7
      %p176 = por %p174, %p175
      %p178 = scmp.ne.s32.totalorder %s163, %s177
      %p179 = scmp.eq.s32.totalorder %s27, 0
      %p180 = por %p178, %p179
      %s182 = sadd.s32 %s181, 1
      %p185 = scmp.eq.s32.totalorder %s21, 7
      %p186 = scmp.ne.s32.totalorder %s181, %s183
      %p187 = scmp.eq.s32.totalorder %s21, 0
      %p188 = por %p186, %p187
      %p189 = scmp.ne.s32.totalorder %s181, %s183
      %p190 = scmp.eq.s32.totalorder %s26, 7
      %p191 = por %p189, %p190
      %p192 = scmp.ne.s32.totalorder %s183, %s184
      %p193 = scmp.eq.s32.totalorder %s26, 0
      %p194 = por %p192, %p193
      %p195 = scmp.ne.s32.totalorder %s183, %s184
      %p196 = scmp.eq.s32.totalorder %s27, 7
      %p197 = por %p195, %p196
      %p199 = scmp.ne.s32.totalorder %s184, %s198
      %p200 = scmp.eq.s32.totalorder %s27, 0
      %p201 = por %p199, %p200
      %s203 = sadd.s32 %s202, 1
      %p206 = scmp.eq.s32.totalorder %s21, 7
      %p207 = scmp.ne.s32.totalorder %s202, %s204
      %p208 = scmp.eq.s32.totalorder %s21, 0
      %p209 = por %p207, %p208
      %p210 = scmp.ne.s32.totalorder %s202, %s204
      %p211 = scmp.eq.s32.totalorder %s26, 7
      %p212 = por %p210, %p211
      %p213 = scmp.ne.s32.totalorder %s204, %s205
      %p214 = scmp.eq.s32.totalorder %s26, 0
      %p215 = por %p213, %p214
      %p216 = scmp.ne.s32.totalorder %s204, %s205
      %p217 = scmp.eq.s32.totalorder %s27, 7
      %p218 = por %p216, %p217
      %p220 = scmp.ne.s32.totalorder %s205, %s219
      %p221 = scmp.eq.s32.totalorder %s27, 0
      %p222 = por %p220, %p221
      %s223 = ssub.s32 %s21, %s28
      %p224 = scmp.eq.s32.totalorder %s223, 0
      %s226 = sadd.s32 %s225, 1
      %s227 = scalar_select %p224, %s225, %s226
      %p230 = pneg %p224
      %p231 = scmp.eq.s32.totalorder %s21, 7
      %p232 = por %p230, %p231
      %p233 = scmp.ne.s32.totalorder %s225, %s228
      %p234 = scmp.eq.s32.totalorder %s21, 0
      %p235 = por %p233, %p234
      %p236 = scmp.ne.s32.totalorder %s225, %s228
      %p237 = scmp.eq.s32.totalorder %s26, 7
      %p238 = por %p236, %p237
      %p239 = scmp.ne.s32.totalorder %s228, %s229
      %p240 = scmp.eq.s32.totalorder %s26, 0
      %p241 = por %p239, %p240
      %p242 = scmp.ne.s32.totalorder %s228, %s229
      %p243 = scmp.eq.s32.totalorder %s27, 7
      %p244 = por %p242, %p243
      %p246 = scmp.ne.s32.totalorder %s229, %s245
      %p247 = scmp.eq.s32.totalorder %s27, 0
      %p248 = por %p246, %p247
      %p249 = scmp.le.s32.totalorder 1, %s21
      %p250 = scmp.lt.s32.totalorder %s21, 9
      %p251 = pnand %p249, %p250
      %p252 = pneg %p251
      // Predicated region
      $region9: #{tpu_custom_call.1} parent=5 // pred_check
        _
      $region10: #{tpu_custom_call.1} parent=5 // pred_check_branch
        %254 = sbr.rel (%p251) target = $region12
      $region11: #{tpu_custom_call.1} parent=5 // pred_region
        %s255 = ssub.s32 %s21, 1
        // Predicated region
        $region13: #{tpu_custom_call.1} parent=11 // pred_check
          %p256 = pneg %p68
        $region14: #{tpu_custom_call.1} parent=11 // pred_check_branch
          %258 = sbr.rel (%p256) target = $region16
        $region15: #{tpu_custom_call.1} parent=11 // pred_region
          _
        $region16: #{tpu_custom_call.1} parent=11 // pred_fallthru
          _
        // Predicated region
        $region17: #{tpu_custom_call.1} parent=11 // pred_check
          %p259 = pneg %p89
        $region18: #{tpu_custom_call.1} parent=11 // pred_check_branch
          %261 = sbr.rel (%p259) target = $region20
        $region19: #{tpu_custom_call.1} parent=11 // pred_region
          _
        $region20: #{tpu_custom_call.1} parent=11 // pred_fallthru
          _
        // Predicated region
        $region21: #{tpu_custom_call.1} parent=11 // pred_check
          %p262 = pneg %p110
        $region22: #{tpu_custom_call.1} parent=11 // pred_check_branch
          %264 = sbr.rel (%p262) target = $region24
        $region23: #{tpu_custom_call.1} parent=11 // pred_region
          _
        $region24: #{tpu_custom_call.1} parent=11 // pred_fallthru
          _
        // Predicated region
        $region25: #{tpu_custom_call.1} parent=11 // pred_check
          %p265 = pneg %p131
        $region26: #{tpu_custom_call.1} parent=11 // pred_check_branch
          %267 = sbr.rel (%p265) target = $region28
        $region27: #{tpu_custom_call.1} parent=11 // pred_region
          _
        $region28: #{tpu_custom_call.1} parent=11 // pred_fallthru
          _
        // Predicated region
        $region29: #{tpu_custom_call.1} parent=11 // pred_check
          %p268 = pneg %p152
        $region30: #{tpu_custom_call.1} parent=11 // pred_check_branch
          %270 = sbr.rel (%p268) target = $region32
        $region31: #{tpu_custom_call.1} parent=11 // pred_region
          _
        $region32: #{tpu_custom_call.1} parent=11 // pred_fallthru
          _
        // Predicated region
        $region33: #{tpu_custom_call.1} parent=11 // pred_check
          %p271 = pneg %p173
        $region34: #{tpu_custom_call.1} parent=11 // pred_check_branch
          %273 = sbr.rel (%p271) target = $region36
        $region35: #{tpu_custom_call.1} parent=11 // pred_region
          _
        $region36: #{tpu_custom_call.1} parent=11 // pred_fallthru
          _
        // Predicated region
        $region37: #{tpu_custom_call.1} parent=11 // pred_check
          %p274 = pneg %p194
        $region38: #{tpu_custom_call.1} parent=11 // pred_check_branch
          %276 = sbr.rel (%p274) target = $region40
        $region39: #{tpu_custom_call.1} parent=11 // pred_region
          _
        $region40: #{tpu_custom_call.1} parent=11 // pred_fallthru
          _
        // Predicated region
        $region41: #{tpu_custom_call.1} parent=11 // pred_check
          %p277 = pneg %p215
        $region42: #{tpu_custom_call.1} parent=11 // pred_check_branch
          %279 = sbr.rel (%p277) target = $region44
        $region43: #{tpu_custom_call.1} parent=11 // pred_region
          _
        $region44: #{tpu_custom_call.1} parent=11 // pred_fallthru
          _
      $region12: #{tpu_custom_call.1} parent=5 // pred_fallthru
        _
      %p280 = scmp.lt.s32.totalorder %s21, 8
      // Predicated region
      $region45: #{tpu_custom_call.1} parent=5 // pred_check
        %p281 = pneg %p280
      $region46: #{tpu_custom_call.1} parent=5 // pred_check_branch
        %283 = sbr.rel (%p281) target = $region48
      $region47: #{tpu_custom_call.1} parent=5 // pred_region
        // Predicated region
        $region49: #{tpu_custom_call.1} parent=47 // pred_check
          %p284 = pneg %p41
        $region50: #{tpu_custom_call.1} parent=47 // pred_check_branch
          %286 = sbr.rel (%p284) target = $region52
        $region51: #{tpu_custom_call.1} parent=47 // pred_region
          %s287 = sand.u32 %s31, 1
          %s288 = scalar_lea.sflag [#allocation3], %s287
          %s289 = sand.u32 %s31, 1
          %s290 = smul.addr %s289, 256
          %s291 = scalar_lea.vmem [#allocation2], %s290
          %s292 = smul.u32 32, %s21
          %294 = vsyncadd %s288, 0
          %s295 = smul.addr %s292, 2
          %s296 = smul.addr %s295, 4
          %s297 = scalar_lea.hbm %s0, %s296
          %s298 = sshll.u32 %s297, 4
          %s299 = int_to_ptr.hbm [resolvable:$true] %s298
          %s300 = sshll.u32 %s291, 4
          %s301 = int_to_ptr.vmem [resolvable:$true] %s300
          %306 = dma.hbm_to_vmem [thread:$0]  %s299, 4096, %s301, %s288, 128, 128, 8
        $region52: #{tpu_custom_call.1} parent=47 // pred_fallthru
          _
      $region48: #{tpu_custom_call.1} parent=5 // pred_fallthru
        _
      %p307 = scmp.le.s32.totalorder 1, %s21
      %p308 = scmp.lt.s32.totalorder %s21, 9
      %p309 = pnand %p307, %p308
      %p310 = pneg %p309
      // Predicated region
      $region53: #{tpu_custom_call.1} parent=5 // pred_check
        _
      $region54: #{tpu_custom_call.1} parent=5 // pred_check_branch
        %312 = sbr.rel (%p309) target = $region56
      $region55: #{tpu_custom_call.1} parent=5 // pred_region
        %s313 = ssub.s32 %s21, 1
        %s314 = sand.u32 %s34, 1
        %s315 = scalar_lea.sflag [#allocation3], %s314
        %s316 = sand.u32 %s34, 1
        %s317 = smul.addr %s316, 256
        %s318 = scalar_lea.vmem [#allocation2], %s317
        // Predicated region
        $region57: #{tpu_custom_call.1} parent=55 // pred_check
          %p319 = pneg %p47
        $region58: #{tpu_custom_call.1} parent=55 // pred_check_branch
          %321 = sbr.rel (%p319) target = $region60
        $region59: #{tpu_custom_call.1} parent=55 // pred_region
          %323 = dma.done %s315, 4096
        $region60: #{tpu_custom_call.1} parent=55 // pred_fallthru
          _
        %s324 = sand.u32 %s34, 1
        %s325 = scalar_lea.sflag [#allocation3], %s324
        %s326 = sand.u32 %s34, 1
        %s327 = smul.addr %s326, 256
        %s328 = scalar_lea.vmem [#allocation2], %s327
        %p329 = pneg %p47
        %p330 = pneg %p44
        %p331 = pneg %p68
        %p332 = pneg %p65
        %p333 = pneg %p89
        %p334 = pneg %p86
        %p335 = pneg %p110
        %p336 = pneg %p107
        %p337 = pneg %p131
        %p338 = pneg %p128
        %p339 = pneg %p152
        %p340 = pneg %p149
        %p341 = pneg %p173
        %p342 = pneg %p170
        %p343 = pneg %p194
        %p344 = pneg %p191
        %p345 = pneg %p215
        %p346 = pneg %p212
        %p347 = pneg %p241
        %p348 = pneg %p238
        %s349 = sand.u32 %s228, 1
        %s350 = scalar_lea.sflag [#allocation4], %s349
        %s351 = sand.u32 %s228, 1
        %s352 = smul.addr %s351, 256
        %s353 = scalar_lea.vmem [#allocation5], %s352
        %s354 = smul.u32 32, %s26
        %s355 = smul.u32 32, %s26
        %v356 = vld [vmem:[%s318] sm:$0xf]
        %v357 = vld [vmem:[%s318 + $0x8] sm:$0xf]
        %v358 = vld [vmem:[%s318 + $0x10] sm:$0xf]
        %v359 = vld [vmem:[%s318 + $0x18] sm:$0xf]
        %v360 = vld [vmem:[%s318 + $0x20] sm:$0xf]
        %v361 = vld [vmem:[%s318 + $0x28] sm:$0xf]
        %v362 = vld [vmem:[%s318 + $0x30] sm:$0xf]
        %v363 = vld [vmem:[%s318 + $0x38] sm:$0xf]
        %v364 = vld [vmem:[%s318 + $0x40] sm:$0xf]
        %v365 = vld [vmem:[%s318 + $0x48] sm:$0xf]
        %v366 = vld [vmem:[%s318 + $0x50] sm:$0xf]
        %v367 = vld [vmem:[%s318 + $0x58] sm:$0xf]
        %v368 = vld [vmem:[%s318 + $0x60] sm:$0xf]
        %v369 = vld [vmem:[%s318 + $0x68] sm:$0xf]
        %v370 = vld [vmem:[%s318 + $0x70] sm:$0xf]
        %v371 = vld [vmem:[%s318 + $0x78] sm:$0xf]
        %v372 = vld [vmem:[%s318 + $0x80] sm:$0xf]
        %v373 = vld [vmem:[%s318 + $0x88] sm:$0xf]
        %v374 = vld [vmem:[%s318 + $0x90] sm:$0xf]
        %v375 = vld [vmem:[%s318 + $0x98] sm:$0xf]
        %v376 = vld [vmem:[%s318 + $0xa0] sm:$0xf]
        %v377 = vld [vmem:[%s318 + $0xa8] sm:$0xf]
        %v378 = vld [vmem:[%s318 + $0xb0] sm:$0xf]
        %v379 = vld [vmem:[%s318 + $0xb8] sm:$0xf]
        %v380 = vld [vmem:[%s318 + $0xc0] sm:$0xf]
        %v381 = vld [vmem:[%s318 + $0xc8] sm:$0xf]
        %v382 = vld [vmem:[%s318 + $0xd0] sm:$0xf]
        %v383 = vld [vmem:[%s318 + $0xd8] sm:$0xf]
        %v384 = vld [vmem:[%s318 + $0xe0] sm:$0xf]
        %v385 = vld [vmem:[%s318 + $0xe8] sm:$0xf]
        %v386 = vld [vmem:[%s318 + $0xf0] sm:$0xf]
        %v387 = vld [vmem:[%s318 + $0xf8] sm:$0xf]
        %v388 = vld [vmem:[%s318 + $0x4] sm:$0xf]
        %v389 = vld [vmem:[%s318 + $0xc] sm:$0xf]
        %v390 = vld [vmem:[%s318 + $0x14] sm:$0xf]
        %v391 = vld [vmem:[%s318 + $0x1c] sm:$0xf]
        %v392 = vld [vmem:[%s318 + $0x24] sm:$0xf]
        %v393 = vld [vmem:[%s318 + $0x2c] sm:$0xf]
        %v394 = vld [vmem:[%s318 + $0x34] sm:$0xf]
        %v395 = vld [vmem:[%s318 + $0x3c] sm:$0xf]
        %v396 = vld [vmem:[%s318 + $0x44] sm:$0xf]
        %v397 = vld [vmem:[%s318 + $0x4c] sm:$0xf]
        %v398 = vld [vmem:[%s318 + $0x54] sm:$0xf]
        %v399 = vld [vmem:[%s318 + $0x5c] sm:$0xf]
        %v400 = vld [vmem:[%s318 + $0x64] sm:$0xf]
        %v401 = vld [vmem:[%s318 + $0x6c] sm:$0xf]
        %v402 = vld [vmem:[%s318 + $0x74] sm:$0xf]
        %v403 = vld [vmem:[%s318 + $0x7c] sm:$0xf]
        %v404 = vld [vmem:[%s318 + $0x84] sm:$0xf]
        %v405 = vld [vmem:[%s318 + $0x8c] sm:$0xf]
        %v406 = vld [vmem:[%s318 + $0x94] sm:$0xf]
        %v407 = vld [vmem:[%s318 + $0x9c] sm:$0xf]
        %v408 = vld [vmem:[%s318 + $0xa4] sm:$0xf]
        %v409 = vld [vmem:[%s318 + $0xac] sm:$0xf]
        %v410 = vld [vmem:[%s318 + $0xb4] sm:$0xf]
        %v411 = vld [vmem:[%s318 + $0xbc] sm:$0xf]
        %v412 = vld [vmem:[%s318 + $0xc4] sm:$0xf]
        %v413 = vld [vmem:[%s318 + $0xcc] sm:$0xf]
        %v414 = vld [vmem:[%s318 + $0xd4] sm:$0xf]
        %v415 = vld [vmem:[%s318 + $0xdc] sm:$0xf]
        %v416 = vld [vmem:[%s318 + $0xe4] sm:$0xf]
        %v417 = vld [vmem:[%s318 + $0xec] sm:$0xf]
        %v418 = vld [vmem:[%s318 + $0xf4] sm:$0xf]
        %v419 = vld [vmem:[%s318 + $0xfc] sm:$0xf]
        %v420 = vld [vmem:[%s1] sm:$0xff]
        %v421 = vld [vmem:[%s1 + $0x8] sm:$0xff]
        %v422 = vld [vmem:[%s1 + $0x10] sm:$0xff]
        %v423 = vld [vmem:[%s1 + $0x18] sm:$0xff]
        %v424 = vld [vmem:[%s1 + $0x20] sm:$0xff]
        %v425 = vld [vmem:[%s1 + $0x28] sm:$0xff]
        %v426 = vld [vmem:[%s1 + $0x30] sm:$0xff]
        %v427 = vld [vmem:[%s1 + $0x38] sm:$0xff]
        %v428 = vld [vmem:[%s1 + $0x40] sm:$0xff]
        %v429 = vld [vmem:[%s1 + $0x48] sm:$0xff]
        %v430 = vld [vmem:[%s1 + $0x50] sm:$0xff]
        %v431 = vld [vmem:[%s1 + $0x58] sm:$0xff]
        %v432 = vld [vmem:[%s1 + $0x60] sm:$0xff]
        %v433 = vld [vmem:[%s1 + $0x68] sm:$0xff]
        %v434 = vld [vmem:[%s1 + $0x70] sm:$0xff]
        %v435 = vld [vmem:[%s1 + $0x78] sm:$0xff]
        %v436 = vld [vmem:[%s2] sm:$0x3]
        %v438 = vperm.slane %v436, 0
        %v439 = vperm.slane %v436, 1
        %v474 = vunpack.c.l.b16 %v388
        %v475 = vunpack.c.l.b16 %v389
        %v476 = vunpack.c.l.b16 %v390
        %v477 = vunpack.c.l.b16 %v391
        %v478 = vunpack.c.l.b16 %v392
        %v479 = vunpack.c.l.b16 %v393
        %v480 = vunpack.c.l.b16 %v394
        %v481 = vunpack.c.l.b16 %v395
        %v482 = vunpack.c.l.b16 %v396
        %v483 = vunpack.c.l.b16 %v397
        %v484 = vunpack.c.l.b16 %v398
        %v485 = vunpack.c.l.b16 %v399
        %v486 = vunpack.c.l.b16 %v400
        %v487 = vunpack.c.l.b16 %v401
        %v488 = vunpack.c.l.b16 %v402
        %v489 = vunpack.c.l.b16 %v403
        %v490 = vunpack.c.l.b16 %v404
        %v491 = vunpack.c.l.b16 %v405
        %v492 = vunpack.c.l.b16 %v406
        %v493 = vunpack.c.l.b16 %v407
        %v494 = vunpack.c.l.b16 %v408
        %v495 = vunpack.c.l.b16 %v409
        %v496 = vunpack.c.l.b16 %v410
        %v497 = vunpack.c.l.b16 %v411
        %v498 = vunpack.c.l.b16 %v412
        %v499 = vunpack.c.l.b16 %v413
        %v500 = vunpack.c.l.b16 %v414
        %v501 = vunpack.c.l.b16 %v415
        %v502 = vunpack.c.l.b16 %v416
        %v503 = vunpack.c.l.b16 %v417
        %v504 = vunpack.c.l.b16 %v418
        %v505 = vunpack.c.l.b16 %v419
        %v506 = vpack.c.b16 %v475, %v474
        %v507 = vpack.c.b16 %v477, %v476
        %v508 = vpack.c.b16 %v479, %v478
        %v509 = vpack.c.b16 %v481, %v480
        %v510 = vpack.c.b16 %v483, %v482
        %v511 = vpack.c.b16 %v485, %v484
        %v512 = vpack.c.b16 %v487, %v486
        %v513 = vpack.c.b16 %v489, %v488
        %v514 = vpack.c.b16 %v491, %v490
        %v515 = vpack.c.b16 %v493, %v492
        %v516 = vpack.c.b16 %v495, %v494
        %v517 = vpack.c.b16 %v497, %v496
        %v518 = vpack.c.b16 %v499, %v498
        %v519 = vpack.c.b16 %v501, %v500
        %v520 = vpack.c.b16 %v503, %v502
        %v521 = vpack.c.b16 %v505, %v504
        %v554 = vunpack.c.l.b16 %v420
        %v555 = vunpack.c.h.b16 %v420
        %v556 = vunpack.c.l.b16 %v421
        %v557 = vunpack.c.h.b16 %v421
        %v558 = vunpack.c.l.b16 %v422
        %v559 = vunpack.c.h.b16 %v422
        %v560 = vunpack.c.l.b16 %v423
        %v561 = vunpack.c.h.b16 %v423
        %v562 = vunpack.c.l.b16 %v424
        %v563 = vunpack.c.h.b16 %v424
        %v564 = vunpack.c.l.b16 %v425
        %v565 = vunpack.c.h.b16 %v425
        %v566 = vunpack.c.l.b16 %v426
        %v567 = vunpack.c.h.b16 %v426
        %v568 = vunpack.c.l.b16 %v427
        %v569 = vunpack.c.h.b16 %v427
        %v570 = vunpack.c.l.b16 %v428
        %v571 = vunpack.c.h.b16 %v428
        %v572 = vunpack.c.l.b16 %v429
        %v573 = vunpack.c.h.b16 %v429
        %v574 = vunpack.c.l.b16 %v430
        %v575 = vunpack.c.h.b16 %v430
        %v576 = vunpack.c.l.b16 %v431
        %v577 = vunpack.c.h.b16 %v431
        %v578 = vunpack.c.l.b16 %v432
        %v579 = vunpack.c.h.b16 %v432
        %v580 = vunpack.c.l.b16 %v433
        %v581 = vunpack.c.h.b16 %v433
        %v582 = vunpack.c.l.b16 %v434
        %v583 = vunpack.c.h.b16 %v434
        %v584 = vunpack.c.l.b16 %v435
        %v585 = vunpack.c.h.b16 %v435
        %v586 = vpack.c.b16 %v556, %v554
        %v587 = vpack.c.b16 %v557, %v555
        %v588 = vpack.c.b16 %v560, %v558
        %v589 = vpack.c.b16 %v561, %v559
        %v590 = vpack.c.b16 %v564, %v562
        %v591 = vpack.c.b16 %v565, %v563
        %v592 = vpack.c.b16 %v568, %v566
        %v593 = vpack.c.b16 %v569, %v567
        %v594 = vpack.c.b16 %v572, %v570
        %v595 = vpack.c.b16 %v573, %v571
        %v596 = vpack.c.b16 %v576, %v574
        %v597 = vpack.c.b16 %v577, %v575
        %v598 = vpack.c.b16 %v580, %v578
        %v599 = vpack.c.b16 %v581, %v579
        %v600 = vpack.c.b16 %v584, %v582
        %v601 = vpack.c.b16 %v585, %v583
        %618 = vmatpush.bf16.msra.mxu0 %v600
        %619 = vmatpush.bf16.msra.mxu0 %v598
        %620 = vmatpush.bf16.msra.mxu0 %v596
        %621 = vmatpush.bf16.msra.mxu0 %v594
        %622 = vmatpush.bf16.msra.mxu0 %v592
        %623 = vmatpush.bf16.msra.mxu0 %v590
        %624 = vmatpush.bf16.msra.mxu0 %v588
        %625 = vmatpush.bf16.msra.mxu0 %v586
        %626 = vmatmul.bf16.gmra.mxu0 %v506
        %v627 = vpop.f32.mrf.mxu0
        %v628 = vadd.f32 %v438, %v627
        %v629 = vpop.f32.mrf.mxu0
        %v630 = vadd.f32 %v438, %v629
        %631 = vmatmul.bf16.gmra.mxu0 %v507
        %v632 = vpop.f32.mrf.mxu0
        %v633 = vadd.f32 %v438, %v632
        %v634 = vpop.f32.mrf.mxu0
        %v635 = vadd.f32 %v438, %v634
        %636 = vmatmul.bf16.gmra.mxu0 %v508
        %v637 = vpop.f32.mrf.mxu0
        %v638 = vadd.f32 %v438, %v637
        %v639 = vpop.f32.mrf.mxu0
        %v640 = vadd.f32 %v438, %v639
        %641 = vmatmul.bf16.gmra.mxu0 %v509
        %v642 = vpop.f32.mrf.mxu0
        %v643 = vadd.f32 %v438, %v642
        %v644 = vpop.f32.mrf.mxu0
        %v645 = vadd.f32 %v438, %v644
        %646 = vmatmul.bf16.gmra.mxu0 %v510
        %v647 = vpop.f32.mrf.mxu0
        %v648 = vadd.f32 %v438, %v647
        %v649 = vpop.f32.mrf.mxu0
        %v650 = vadd.f32 %v438, %v649
        %651 = vmatmul.bf16.gmra.mxu0 %v511
        %v652 = vpop.f32.mrf.mxu0
        %v653 = vadd.f32 %v438, %v652
        %v654 = vpop.f32.mrf.mxu0
        %v655 = vadd.f32 %v438, %v654
        %656 = vmatmul.bf16.gmra.mxu0 %v512
        %v657 = vpop.f32.mrf.mxu0
        %v658 = vadd.f32 %v438, %v657
        %v659 = vpop.f32.mrf.mxu0
        %v660 = vadd.f32 %v438, %v659
        %661 = vmatmul.bf16.gmra.mxu0 %v513
        %v662 = vpop.f32.mrf.mxu0
        %v663 = vadd.f32 %v438, %v662
        %v664 = vpop.f32.mrf.mxu0
        %v665 = vadd.f32 %v438, %v664
        %666 = vmatmul.bf16.gmra.mxu0 %v514
        %v667 = vpop.f32.mrf.mxu0
        %v668 = vadd.f32 %v438, %v667
        %v669 = vpop.f32.mrf.mxu0
        %v670 = vadd.f32 %v438, %v669
        %671 = vmatmul.bf16.gmra.mxu0 %v515
        %v672 = vpop.f32.mrf.mxu0
        %v673 = vadd.f32 %v438, %v672
        %v674 = vpop.f32.mrf.mxu0
        %v675 = vadd.f32 %v438, %v674
        %676 = vmatmul.bf16.gmra.mxu0 %v516
        %v677 = vpop.f32.mrf.mxu0
        %v678 = vadd.f32 %v438, %v677
        %v679 = vpop.f32.mrf.mxu0
        %v680 = vadd.f32 %v438, %v679
        %681 = vmatmul.bf16.gmra.mxu0 %v517
        %v682 = vpop.f32.mrf.mxu0
        %v683 = vadd.f32 %v438, %v682
        %v684 = vpop.f32.mrf.mxu0
        %v685 = vadd.f32 %v438, %v684
        %686 = vmatmul.bf16.gmra.mxu0 %v518
        %v687 = vpop.f32.mrf.mxu0
        %v688 = vadd.f32 %v438, %v687
        %v689 = vpop.f32.mrf.mxu0
        %v690 = vadd.f32 %v438, %v689
        %691 = vmatmul.bf16.gmra.mxu0 %v519
        %v692 = vpop.f32.mrf.mxu0
        %v693 = vadd.f32 %v438, %v692
        %v694 = vpop.f32.mrf.mxu0
        %v695 = vadd.f32 %v438, %v694
        %696 = vmatmul.bf16.gmra.mxu0 %v520
        %v697 = vpop.f32.mrf.mxu0
        %v698 = vadd.f32 %v438, %v697
        %v699 = vpop.f32.mrf.mxu0
        %v700 = vadd.f32 %v438, %v699
        %701 = vmatmul.bf16.gmra.mxu0 %v521
        %v702 = vpop.f32.mrf.mxu0
        %v703 = vadd.f32 %v438, %v702
        %v704 = vpop.f32.mrf.mxu0
        %v705 = vadd.f32 %v438, %v704
        %706 = vdwg.mxu0
        %707 = vmatpush.bf16.msra.mxu0 %v601
        %708 = vmatpush.bf16.msra.mxu0 %v599
        %709 = vmatpush.bf16.msra.mxu0 %v597
        %710 = vmatpush.bf16.msra.mxu0 %v595
        %711 = vmatpush.bf16.msra.mxu0 %v593
        %712 = vmatpush.bf16.msra.mxu0 %v591
        %713 = vmatpush.bf16.msra.mxu0 %v589
        %714 = vmatpush.bf16.msra.mxu0 %v587
        %715 = vmatmul.bf16.gmra.mxu0 %v506
        %v716 = vpop.f32.mrf.mxu0
        %v717 = vadd.f32 %v439, %v716
        %v718 = vpop.f32.mrf.mxu0
        %v719 = vadd.f32 %v439, %v718
        %720 = vmatmul.bf16.gmra.mxu0 %v507
        %v721 = vpop.f32.mrf.mxu0
        %v722 = vadd.f32 %v439, %v721
        %v723 = vpop.f32.mrf.mxu0
        %v724 = vadd.f32 %v439, %v723
        %725 = vmatmul.bf16.gmra.mxu0 %v508
        %v726 = vpop.f32.mrf.mxu0
        %v727 = vadd.f32 %v439, %v726
        %v728 = vpop.f32.mrf.mxu0
        %v729 = vadd.f32 %v439, %v728
        %730 = vmatmul.bf16.gmra.mxu0 %v509
        %v731 = vpop.f32.mrf.mxu0
        %v732 = vadd.f32 %v439, %v731
        %v733 = vpop.f32.mrf.mxu0
        %v734 = vadd.f32 %v439, %v733
        %735 = vmatmul.bf16.gmra.mxu0 %v510
        %v736 = vpop.f32.mrf.mxu0
        %v737 = vadd.f32 %v439, %v736
        %v738 = vpop.f32.mrf.mxu0
        %v739 = vadd.f32 %v439, %v738
        %740 = vmatmul.bf16.gmra.mxu0 %v511
        %v741 = vpop.f32.mrf.mxu0
        %v742 = vadd.f32 %v439, %v741
        %v743 = vpop.f32.mrf.mxu0
        %v744 = vadd.f32 %v439, %v743
        %745 = vmatmul.bf16.gmra.mxu0 %v512
        %v746 = vpop.f32.mrf.mxu0
        %v747 = vadd.f32 %v439, %v746
        %v748 = vpop.f32.mrf.mxu0
        %v749 = vadd.f32 %v439, %v748
        %750 = vmatmul.bf16.gmra.mxu0 %v513
        %v751 = vpop.f32.mrf.mxu0
        %v752 = vadd.f32 %v439, %v751
        %v753 = vpop.f32.mrf.mxu0
        %v754 = vadd.f32 %v439, %v753
        %755 = vmatmul.bf16.gmra.mxu0 %v514
        %v756 = vpop.f32.mrf.mxu0
        %v757 = vadd.f32 %v439, %v756
        %v758 = vpop.f32.mrf.mxu0
        %v759 = vadd.f32 %v439, %v758
        %760 = vmatmul.bf16.gmra.mxu0 %v515
        %v761 = vpop.f32.mrf.mxu0
        %v762 = vadd.f32 %v439, %v761
        %v763 = vpop.f32.mrf.mxu0
        %v764 = vadd.f32 %v439, %v763
        %765 = vmatmul.bf16.gmra.mxu0 %v516
        %v766 = vpop.f32.mrf.mxu0
        %v767 = vadd.f32 %v439, %v766
        %v768 = vpop.f32.mrf.mxu0
        %v769 = vadd.f32 %v439, %v768
        %770 = vmatmul.bf16.gmra.mxu0 %v517
        %v771 = vpop.f32.mrf.mxu0
        %v772 = vadd.f32 %v439, %v771
        %v773 = vpop.f32.mrf.mxu0
        %v774 = vadd.f32 %v439, %v773
        %775 = vmatmul.bf16.gmra.mxu0 %v518
        %v776 = vpop.f32.mrf.mxu0
        %v777 = vadd.f32 %v439, %v776
        %v778 = vpop.f32.mrf.mxu0
        %v779 = vadd.f32 %v439, %v778
        %780 = vmatmul.bf16.gmra.mxu0 %v519
        %v781 = vpop.f32.mrf.mxu0
        %v782 = vadd.f32 %v439, %v781
        %v783 = vpop.f32.mrf.mxu0
        %v784 = vadd.f32 %v439, %v783
        %785 = vmatmul.bf16.gmra.mxu0 %v520
        %v786 = vpop.f32.mrf.mxu0
        %v787 = vadd.f32 %v439, %v786
        %v788 = vpop.f32.mrf.mxu0
        %v789 = vadd.f32 %v439, %v788
        %790 = vmatmul.bf16.gmra.mxu0 %v521
        %v791 = vpop.f32.mrf.mxu0
        %v792 = vadd.f32 %v439, %v791
        %v793 = vpop.f32.mrf.mxu0
        %v794 = vadd.f32 %v439, %v793
        %795 = vdwg.mxu0
        %v796 = vmul.f32 %v628, %v628
        %v797 = vmul.f32 %v717, %v717
        %v798 = vmul.f32 %v630, %v630
        %v799 = vmul.f32 %v719, %v719
        %v800 = vmul.f32 %v633, %v633
        %v801 = vmul.f32 %v722, %v722
        %v802 = vmul.f32 %v635, %v635
        %v803 = vmul.f32 %v724, %v724
        %v804 = vmul.f32 %v638, %v638
        %v805 = vmul.f32 %v727, %v727
        %v806 = vmul.f32 %v640, %v640
        %v807 = vmul.f32 %v729, %v729
        %v808 = vmul.f32 %v643, %v643
        %v809 = vmul.f32 %v732, %v732
        %v810 = vmul.f32 %v645, %v645
        %v811 = vmul.f32 %v734, %v734
        %v812 = vmul.f32 %v648, %v648
        %v813 = vmul.f32 %v737, %v737
        %v814 = vmul.f32 %v650, %v650
        %v815 = vmul.f32 %v739, %v739
        %v816 = vmul.f32 %v653, %v653
        %v817 = vmul.f32 %v742, %v742
        %v818 = vmul.f32 %v655, %v655
        %v819 = vmul.f32 %v744, %v744
        %v820 = vmul.f32 %v658, %v658
        %v821 = vmul.f32 %v747, %v747
        %v822 = vmul.f32 %v660, %v660
        %v823 = vmul.f32 %v749, %v749
        %v824 = vmul.f32 %v663, %v663
        %v825 = vmul.f32 %v752, %v752
        %v826 = vmul.f32 %v665, %v665
        %v827 = vmul.f32 %v754, %v754
        %v828 = vmul.f32 %v668, %v668
        %v829 = vmul.f32 %v757, %v757
        %v830 = vmul.f32 %v670, %v670
        %v831 = vmul.f32 %v759, %v759
        %v832 = vmul.f32 %v673, %v673
        %v833 = vmul.f32 %v762, %v762
        %v834 = vmul.f32 %v675, %v675
        %v835 = vmul.f32 %v764, %v764
        %v836 = vmul.f32 %v678, %v678
        %v837 = vmul.f32 %v767, %v767
        %v838 = vmul.f32 %v680, %v680
        %v839 = vmul.f32 %v769, %v769
        %v840 = vmul.f32 %v683, %v683
        %v841 = vmul.f32 %v772, %v772
        %v842 = vmul.f32 %v685, %v685
        %v843 = vmul.f32 %v774, %v774
        %v844 = vmul.f32 %v688, %v688
        %v845 = vmul.f32 %v777, %v777
        %v846 = vmul.f32 %v690, %v690
        %v847 = vmul.f32 %v779, %v779
        %v848 = vmul.f32 %v693, %v693
        %v849 = vmul.f32 %v782, %v782
        %v850 = vmul.f32 %v695, %v695
        %v851 = vmul.f32 %v784, %v784
        %v852 = vmul.f32 %v698, %v698
        %v853 = vmul.f32 %v787, %v787
        %v854 = vmul.f32 %v700, %v700
        %v855 = vmul.f32 %v789, %v789
        %v856 = vmul.f32 %v703, %v703
        %v857 = vmul.f32 %v792, %v792
        %v858 = vmul.f32 %v705, %v705
        %v859 = vmul.f32 %v794, %v794
        %v860 = vmul.f32 %v628, %v796
        %v861 = vmul.f32 %v717, %v797
        %v862 = vmul.f32 %v630, %v798
        %v863 = vmul.f32 %v719, %v799
        %v864 = vmul.f32 %v633, %v800
        %v865 = vmul.f32 %v722, %v801
        %v866 = vmul.f32 %v635, %v802
        %v867 = vmul.f32 %v724, %v803
        %v868 = vmul.f32 %v638, %v804
        %v869 = vmul.f32 %v727, %v805
        %v870 = vmul.f32 %v640, %v806
        %v871 = vmul.f32 %v729, %v807
        %v872 = vmul.f32 %v643, %v808
        %v873 = vmul.f32 %v732, %v809
        %v874 = vmul.f32 %v645, %v810
        %v875 = vmul.f32 %v734, %v811
        %v876 = vmul.f32 %v648, %v812
        %v877 = vmul.f32 %v737, %v813
        %v878 = vmul.f32 %v650, %v814
        %v879 = vmul.f32 %v739, %v815
        %v880 = vmul.f32 %v653, %v816
        %v881 = vmul.f32 %v742, %v817
        %v882 = vmul.f32 %v655, %v818
        %v883 = vmul.f32 %v744, %v819
        %v884 = vmul.f32 %v658, %v820
        %v885 = vmul.f32 %v747, %v821
        %v886 = vmul.f32 %v660, %v822
        %v887 = vmul.f32 %v749, %v823
        %v888 = vmul.f32 %v663, %v824
        %v889 = vmul.f32 %v752, %v825
        %v890 = vmul.f32 %v665, %v826
        %v891 = vmul.f32 %v754, %v827
        %v892 = vmul.f32 %v668, %v828
        %v893 = vmul.f32 %v757, %v829
        %v894 = vmul.f32 %v670, %v830
        %v895 = vmul.f32 %v759, %v831
        %v896 = vmul.f32 %v673, %v832
        %v897 = vmul.f32 %v762, %v833
        %v898 = vmul.f32 %v675, %v834
        %v899 = vmul.f32 %v764, %v835
        %v900 = vmul.f32 %v678, %v836
        %v901 = vmul.f32 %v767, %v837
        %v902 = vmul.f32 %v680, %v838
        %v903 = vmul.f32 %v769, %v839
        %v904 = vmul.f32 %v683, %v840
        %v905 = vmul.f32 %v772, %v841
        %v906 = vmul.f32 %v685, %v842
        %v907 = vmul.f32 %v774, %v843
        %v908 = vmul.f32 %v688, %v844
        %v909 = vmul.f32 %v777, %v845
        %v910 = vmul.f32 %v690, %v846
        %v911 = vmul.f32 %v779, %v847
        %v912 = vmul.f32 %v693, %v848
        %v913 = vmul.f32 %v782, %v849
        %v914 = vmul.f32 %v695, %v850
        %v915 = vmul.f32 %v784, %v851
        %v916 = vmul.f32 %v698, %v852
        %v917 = vmul.f32 %v787, %v853
        %v918 = vmul.f32 %v700, %v854
        %v919 = vmul.f32 %v789, %v855
        %v920 = vmul.f32 %v703, %v856
        %v921 = vmul.f32 %v792, %v857
        %v922 = vmul.f32 %v705, %v858
        %v923 = vmul.f32 %v794, %v859
        %v924 = vmul.f32 %v860, 0.044715
        %v925 = vmul.f32 %v861, 0.044715
        %v926 = vmul.f32 %v862, 0.044715
        %v927 = vmul.f32 %v863, 0.044715
        %v928 = vmul.f32 %v864, 0.044715
        %v929 = vmul.f32 %v865, 0.044715
        %v930 = vmul.f32 %v866, 0.044715
        %v931 = vmul.f32 %v867, 0.044715
        %v932 = vmul.f32 %v868, 0.044715
        %v933 = vmul.f32 %v869, 0.044715
        %v934 = vmul.f32 %v870, 0.044715
        %v935 = vmul.f32 %v871, 0.044715
        %v936 = vmul.f32 %v872, 0.044715
        %v937 = vmul.f32 %v873, 0.044715
        %v938 = vmul.f32 %v874, 0.044715
        %v939 = vmul.f32 %v875, 0.044715
        %v940 = vmul.f32 %v876, 0.044715
        %v941 = vmul.f32 %v877, 0.044715
        %v942 = vmul.f32 %v878, 0.044715
        %v943 = vmul.f32 %v879, 0.044715
        %v944 = vmul.f32 %v880, 0.044715
        %v945 = vmul.f32 %v881, 0.044715
        %v946 = vmul.f32 %v882, 0.044715
        %v947 = vmul.f32 %v883, 0.044715
        %v948 = vmul.f32 %v884, 0.044715
        %v949 = vmul.f32 %v885, 0.044715
        %v950 = vmul.f32 %v886, 0.044715
        %v951 = vmul.f32 %v887, 0.044715
        %v952 = vmul.f32 %v888, 0.044715
        %v953 = vmul.f32 %v889, 0.044715
        %v954 = vmul.f32 %v890, 0.044715
        %v955 = vmul.f32 %v891, 0.044715
        %v956 = vmul.f32 %v892, 0.044715
        %v957 = vmul.f32 %v893, 0.044715
        %v958 = vmul.f32 %v894, 0.044715
        %v959 = vmul.f32 %v895, 0.044715
        %v960 = vmul.f32 %v896, 0.044715
        %v961 = vmul.f32 %v897, 0.044715
        %v962 = vmul.f32 %v898, 0.044715
        %v963 = vmul.f32 %v899, 0.044715
        %v964 = vmul.f32 %v900, 0.044715
        %v965 = vmul.f32 %v901, 0.044715
        %v966 = vmul.f32 %v902, 0.044715
        %v967 = vmul.f32 %v903, 0.044715
        %v968 = vmul.f32 %v904, 0.044715
        %v969 = vmul.f32 %v905, 0.044715
        %v970 = vmul.f32 %v906, 0.044715
        %v971 = vmul.f32 %v907, 0.044715
        %v972 = vmul.f32 %v908, 0.044715
        %v973 = vmul.f32 %v909, 0.044715
        %v974 = vmul.f32 %v910, 0.044715
        %v975 = vmul.f32 %v911, 0.044715
        %v976 = vmul.f32 %v912, 0.044715
        %v977 = vmul.f32 %v913, 0.044715
        %v978 = vmul.f32 %v914, 0.044715
        %v979 = vmul.f32 %v915, 0.044715
        %v980 = vmul.f32 %v916, 0.044715
        %v981 = vmul.f32 %v917, 0.044715
        %v982 = vmul.f32 %v918, 0.044715
        %v983 = vmul.f32 %v919, 0.044715
        %v984 = vmul.f32 %v920, 0.044715
        %v985 = vmul.f32 %v921, 0.044715
        %v986 = vmul.f32 %v922, 0.044715
        %v987 = vmul.f32 %v923, 0.044715
        %v988 = vadd.f32 %v628, %v924
        %v989 = vadd.f32 %v717, %v925
        %v990 = vadd.f32 %v630, %v926
        %v991 = vadd.f32 %v719, %v927
        %v992 = vadd.f32 %v633, %v928
        %v993 = vadd.f32 %v722, %v929
        %v994 = vadd.f32 %v635, %v930
        %v995 = vadd.f32 %v724, %v931
        %v996 = vadd.f32 %v638, %v932
        %v997 = vadd.f32 %v727, %v933
        %v998 = vadd.f32 %v640, %v934
        %v999 = vadd.f32 %v729, %v935
        %v1000 = vadd.f32 %v643, %v936
        %v1001 = vadd.f32 %v732, %v937
        %v1002 = vadd.f32 %v645, %v938
        %v1003 = vadd.f32 %v734, %v939
        %v1004 = vadd.f32 %v648, %v940
        %v1005 = vadd.f32 %v737, %v941
        %v1006 = vadd.f32 %v650, %v942
        %v1007 = vadd.f32 %v739, %v943
        %v1008 = vadd.f32 %v653, %v944
        %v1009 = vadd.f32 %v742, %v945
        %v1010 = vadd.f32 %v655, %v946
        %v1011 = vadd.f32 %v744, %v947
        %v1012 = vadd.f32 %v658, %v948
        %v1013 = vadd.f32 %v747, %v949
        %v1014 = vadd.f32 %v660, %v950
        %v1015 = vadd.f32 %v749, %v951
        %v1016 = vadd.f32 %v663, %v952
        %v1017 = vadd.f32 %v752, %v953
        %v1018 = vadd.f32 %v665, %v954
        %v1019 = vadd.f32 %v754, %v955
        %v1020 = vadd.f32 %v668, %v956
        %v1021 = vadd.f32 %v757, %v957
        %v1022 = vadd.f32 %v670, %v958
        %v1023 = vadd.f32 %v759, %v959
        %v1024 = vadd.f32 %v673, %v960
        %v1025 = vadd.f32 %v762, %v961
        %v1026 = vadd.f32 %v675, %v962
        %v1027 = vadd.f32 %v764, %v963
        %v1028 = vadd.f32 %v678, %v964
        %v1029 = vadd.f32 %v767, %v965
        %v1030 = vadd.f32 %v680, %v966
        %v1031 = vadd.f32 %v769, %v967
        %v1032 = vadd.f32 %v683, %v968
        %v1033 = vadd.f32 %v772, %v969
        %v1034 = vadd.f32 %v685, %v970
        %v1035 = vadd.f32 %v774, %v971
        %v1036 = vadd.f32 %v688, %v972
        %v1037 = vadd.f32 %v777, %v973
        %v1038 = vadd.f32 %v690, %v974
        %v1039 = vadd.f32 %v779, %v975
        %v1040 = vadd.f32 %v693, %v976
        %v1041 = vadd.f32 %v782, %v977
        %v1042 = vadd.f32 %v695, %v978
        %v1043 = vadd.f32 %v784, %v979
        %v1044 = vadd.f32 %v698, %v980
        %v1045 = vadd.f32 %v787, %v981
        %v1046 = vadd.f32 %v700, %v982
        %v1047 = vadd.f32 %v789, %v983
        %v1048 = vadd.f32 %v703, %v984
        %v1049 = vadd.f32 %v792, %v985
        %v1050 = vadd.f32 %v705, %v986
        %v1051 = vadd.f32 %v794, %v987
        %v1052 = vmul.f32 %v988, 0.7978846
        %v1053 = vmul.f32 %v989, 0.7978846
        %v1054 = vmul.f32 %v990, 0.7978846
        %v1055 = vmul.f32 %v991, 0.7978846
        %v1056 = vmul.f32 %v992, 0.7978846
        %v1057 = vmul.f32 %v993, 0.7978846
        %v1058 = vmul.f32 %v994, 0.7978846
        %v1059 = vmul.f32 %v995, 0.7978846
        %v1060 = vmul.f32 %v996, 0.7978846
        %v1061 = vmul.f32 %v997, 0.7978846
        %v1062 = vmul.f32 %v998, 0.7978846
        %v1063 = vmul.f32 %v999, 0.7978846
        %v1064 = vmul.f32 %v1000, 0.7978846
        %v1065 = vmul.f32 %v1001, 0.7978846
        %v1066 = vmul.f32 %v1002, 0.7978846
        %v1067 = vmul.f32 %v1003, 0.7978846
        %v1068 = vmul.f32 %v1004, 0.7978846
        %v1069 = vmul.f32 %v1005, 0.7978846
        %v1070 = vmul.f32 %v1006, 0.7978846
        %v1071 = vmul.f32 %v1007, 0.7978846
        %v1072 = vmul.f32 %v1008, 0.7978846
        %v1073 = vmul.f32 %v1009, 0.7978846
        %v1074 = vmul.f32 %v1010, 0.7978846
        %v1075 = vmul.f32 %v1011, 0.7978846
        %v1076 = vmul.f32 %v1012, 0.7978846
        %v1077 = vmul.f32 %v1013, 0.7978846
        %v1078 = vmul.f32 %v1014, 0.7978846
        %v1079 = vmul.f32 %v1015, 0.7978846
        %v1080 = vmul.f32 %v1016, 0.7978846
        %v1081 = vmul.f32 %v1017, 0.7978846
        %v1082 = vmul.f32 %v1018, 0.7978846
        %v1083 = vmul.f32 %v1019, 0.7978846
        %v1084 = vmul.f32 %v1020, 0.7978846
        %v1085 = vmul.f32 %v1021, 0.7978846
        %v1086 = vmul.f32 %v1022, 0.7978846
        %v1087 = vmul.f32 %v1023, 0.7978846
        %v1088 = vmul.f32 %v1024, 0.7978846
        %v1089 = vmul.f32 %v1025, 0.7978846
        %v1090 = vmul.f32 %v1026, 0.7978846
        %v1091 = vmul.f32 %v1027, 0.7978846
        %v1092 = vmul.f32 %v1028, 0.7978846
        %v1093 = vmul.f32 %v1029, 0.7978846
        %v1094 = vmul.f32 %v1030, 0.7978846
        %v1095 = vmul.f32 %v1031, 0.7978846
        %v1096 = vmul.f32 %v1032, 0.7978846
        %v1097 = vmul.f32 %v1033, 0.7978846
        %v1098 = vmul.f32 %v1034, 0.7978846
        %v1099 = vmul.f32 %v1035, 0.7978846
        %v1100 = vmul.f32 %v1036, 0.7978846
        %v1101 = vmul.f32 %v1037, 0.7978846
        %v1102 = vmul.f32 %v1038, 0.7978846
        %v1103 = vmul.f32 %v1039, 0.7978846
        %v1104 = vmul.f32 %v1040, 0.7978846
        %v1105 = vmul.f32 %v1041, 0.7978846
        %v1106 = vmul.f32 %v1042, 0.7978846
        %v1107 = vmul.f32 %v1043, 0.7978846
        %v1108 = vmul.f32 %v1044, 0.7978846
        %v1109 = vmul.f32 %v1045, 0.7978846
        %v1110 = vmul.f32 %v1046, 0.7978846
        %v1111 = vmul.f32 %v1047, 0.7978846
        %v1112 = vmul.f32 %v1048, 0.7978846
        %v1113 = vmul.f32 %v1049, 0.7978846
        %v1114 = vmul.f32 %v1050, 0.7978846
        %v1115 = vmul.f32 %v1051, 0.7978846
        %v1116 = vtanh.pop %v1052
        %v1117 = vtanh.pop %v1053
        %v1118 = vtanh.pop %v1054
        %v1119 = vtanh.pop %v1055
        %v1120 = vtanh.pop %v1056
        %v1121 = vtanh.pop %v1057
        %v1122 = vtanh.pop %v1058
        %v1123 = vtanh.pop %v1059
        %v1124 = vtanh.pop %v1060
        %v1125 = vtanh.pop %v1061
        %v1126 = vtanh.pop %v1062
        %v1127 = vtanh.pop %v1063
        %v1128 = vtanh.pop %v1064
        %v1129 = vtanh.pop %v1065
        %v1130 = vtanh.pop %v1066
        %v1131 = vtanh.pop %v1067
        %v1132 = vtanh.pop %v1068
        %v1133 = vtanh.pop %v1069
        %v1134 = vtanh.pop %v1070
        %v1135 = vtanh.pop %v1071
        %v1136 = vtanh.pop %v1072
        %v1137 = vtanh.pop %v1073
        %v1138 = vtanh.pop %v1074
        %v1139 = vtanh.pop %v1075
        %v1140 = vtanh.pop %v1076
        %v1141 = vtanh.pop %v1077
        %v1142 = vtanh.pop %v1078
        %v1143 = vtanh.pop %v1079
        %v1144 = vtanh.pop %v1080
        %v1145 = vtanh.pop %v1081
        %v1146 = vtanh.pop %v1082
        %v1147 = vtanh.pop %v1083
        %v1148 = vtanh.pop %v1084
        %v1149 = vtanh.pop %v1085
        %v1150 = vtanh.pop %v1086
        %v1151 = vtanh.pop %v1087
        %v1152 = vtanh.pop %v1088
        %v1153 = vtanh.pop %v1089
        %v1154 = vtanh.pop %v1090
        %v1155 = vtanh.pop %v1091
        %v1156 = vtanh.pop %v1092
        %v1157 = vtanh.pop %v1093
        %v1158 = vtanh.pop %v1094
        %v1159 = vtanh.pop %v1095
        %v1160 = vtanh.pop %v1096
        %v1161 = vtanh.pop %v1097
        %v1162 = vtanh.pop %v1098
        %v1163 = vtanh.pop %v1099
        %v1164 = vtanh.pop %v1100
        %v1165 = vtanh.pop %v1101
        %v1166 = vtanh.pop %v1102
        %v1167 = vtanh.pop %v1103
        %v1168 = vtanh.pop %v1104
        %v1169 = vtanh.pop %v1105
        %v1170 = vtanh.pop %v1106
        %v1171 = vtanh.pop %v1107
        %v1172 = vtanh.pop %v1108
        %v1173 = vtanh.pop %v1109
        %v1174 = vtanh.pop %v1110
        %v1175 = vtanh.pop %v1111
        %v1176 = vtanh.pop %v1112
        %v1177 = vtanh.pop %v1113
        %v1178 = vtanh.pop %v1114
        %v1179 = vtanh.pop %v1115
        %v1180 = vadd.f32 %v1116, 1.0
        %v1181 = vadd.f32 %v1117, 1.0
        %v1182 = vadd.f32 %v1118, 1.0
        %v1183 = vadd.f32 %v1119, 1.0
        %v1184 = vadd.f32 %v1120, 1.0
        %v1185 = vadd.f32 %v1121, 1.0
        %v1186 = vadd.f32 %v1122, 1.0
        %v1187 = vadd.f32 %v1123, 1.0
        %v1188 = vadd.f32 %v1124, 1.0
        %v1189 = vadd.f32 %v1125, 1.0
        %v1190 = vadd.f32 %v1126, 1.0
        %v1191 = vadd.f32 %v1127, 1.0
        %v1192 = vadd.f32 %v1128, 1.0
        %v1193 = vadd.f32 %v1129, 1.0
        %v1194 = vadd.f32 %v1130, 1.0
        %v1195 = vadd.f32 %v1131, 1.0
        %v1196 = vadd.f32 %v1132, 1.0
        %v1197 = vadd.f32 %v1133, 1.0
        %v1198 = vadd.f32 %v1134, 1.0
        %v1199 = vadd.f32 %v1135, 1.0
        %v1200 = vadd.f32 %v1136, 1.0
        %v1201 = vadd.f32 %v1137, 1.0
        %v1202 = vadd.f32 %v1138, 1.0
        %v1203 = vadd.f32 %v1139, 1.0
        %v1204 = vadd.f32 %v1140, 1.0
        %v1205 = vadd.f32 %v1141, 1.0
        %v1206 = vadd.f32 %v1142, 1.0
        %v1207 = vadd.f32 %v1143, 1.0
        %v1208 = vadd.f32 %v1144, 1.0
        %v1209 = vadd.f32 %v1145, 1.0
        %v1210 = vadd.f32 %v1146, 1.0
        %v1211 = vadd.f32 %v1147, 1.0
        %v1212 = vadd.f32 %v1148, 1.0
        %v1213 = vadd.f32 %v1149, 1.0
        %v1214 = vadd.f32 %v1150, 1.0
        %v1215 = vadd.f32 %v1151, 1.0
        %v1216 = vadd.f32 %v1152, 1.0
        %v1217 = vadd.f32 %v1153, 1.0
        %v1218 = vadd.f32 %v1154, 1.0
        %v1219 = vadd.f32 %v1155, 1.0
        %v1220 = vadd.f32 %v1156, 1.0
        %v1221 = vadd.f32 %v1157, 1.0
        %v1222 = vadd.f32 %v1158, 1.0
        %v1223 = vadd.f32 %v1159, 1.0
        %v1224 = vadd.f32 %v1160, 1.0
        %v1225 = vadd.f32 %v1161, 1.0
        %v1226 = vadd.f32 %v1162, 1.0
        %v1227 = vadd.f32 %v1163, 1.0
        %v1228 = vadd.f32 %v1164, 1.0
        %v1229 = vadd.f32 %v1165, 1.0
        %v1230 = vadd.f32 %v1166, 1.0
        %v1231 = vadd.f32 %v1167, 1.0
        %v1232 = vadd.f32 %v1168, 1.0
        %v1233 = vadd.f32 %v1169, 1.0
        %v1234 = vadd.f32 %v1170, 1.0
        %v1235 = vadd.f32 %v1171, 1.0
        %v1236 = vadd.f32 %v1172, 1.0
        %v1237 = vadd.f32 %v1173, 1.0
        %v1238 = vadd.f32 %v1174, 1.0
        %v1239 = vadd.f32 %v1175, 1.0
        %v1240 = vadd.f32 %v1176, 1.0
        %v1241 = vadd.f32 %v1177, 1.0
        %v1242 = vadd.f32 %v1178, 1.0
        %v1243 = vadd.f32 %v1179, 1.0
        %v1244 = vmul.f32 %v1180, 0.5
        %v1245 = vmul.f32 %v1181, 0.5
        %v1246 = vmul.f32 %v1182, 0.5
        %v1247 = vmul.f32 %v1183, 0.5
        %v1248 = vmul.f32 %v1184, 0.5
        %v1249 = vmul.f32 %v1185, 0.5
        %v1250 = vmul.f32 %v1186, 0.5
        %v1251 = vmul.f32 %v1187, 0.5
        %v1252 = vmul.f32 %v1188, 0.5
        %v1253 = vmul.f32 %v1189, 0.5
        %v1254 = vmul.f32 %v1190, 0.5
        %v1255 = vmul.f32 %v1191, 0.5
        %v1256 = vmul.f32 %v1192, 0.5
        %v1257 = vmul.f32 %v1193, 0.5
        %v1258 = vmul.f32 %v1194, 0.5
        %v1259 = vmul.f32 %v1195, 0.5
        %v1260 = vmul.f32 %v1196, 0.5
        %v1261 = vmul.f32 %v1197, 0.5
        %v1262 = vmul.f32 %v1198, 0.5
        %v1263 = vmul.f32 %v1199, 0.5
        %v1264 = vmul.f32 %v1200, 0.5
        %v1265 = vmul.f32 %v1201, 0.5
        %v1266 = vmul.f32 %v1202, 0.5
        %v1267 = vmul.f32 %v1203, 0.5
        %v1268 = vmul.f32 %v1204, 0.5
        %v1269 = vmul.f32 %v1205, 0.5
        %v1270 = vmul.f32 %v1206, 0.5
        %v1271 = vmul.f32 %v1207, 0.5
        %v1272 = vmul.f32 %v1208, 0.5
        %v1273 = vmul.f32 %v1209, 0.5
        %v1274 = vmul.f32 %v1210, 0.5
        %v1275 = vmul.f32 %v1211, 0.5
        %v1276 = vmul.f32 %v1212, 0.5
        %v1277 = vmul.f32 %v1213, 0.5
        %v1278 = vmul.f32 %v1214, 0.5
        %v1279 = vmul.f32 %v1215, 0.5
        %v1280 = vmul.f32 %v1216, 0.5
        %v1281 = vmul.f32 %v1217, 0.5
        %v1282 = vmul.f32 %v1218, 0.5
        %v1283 = vmul.f32 %v1219, 0.5
        %v1284 = vmul.f32 %v1220, 0.5
        %v1285 = vmul.f32 %v1221, 0.5
        %v1286 = vmul.f32 %v1222, 0.5
        %v1287 = vmul.f32 %v1223, 0.5
        %v1288 = vmul.f32 %v1224, 0.5
        %v1289 = vmul.f32 %v1225, 0.5
        %v1290 = vmul.f32 %v1226, 0.5
        %v1291 = vmul.f32 %v1227, 0.5
        %v1292 = vmul.f32 %v1228, 0.5
        %v1293 = vmul.f32 %v1229, 0.5
        %v1294 = vmul.f32 %v1230, 0.5
        %v1295 = vmul.f32 %v1231, 0.5
        %v1296 = vmul.f32 %v1232, 0.5
        %v1297 = vmul.f32 %v1233, 0.5
        %v1298 = vmul.f32 %v1234, 0.5
        %v1299 = vmul.f32 %v1235, 0.5
        %v1300 = vmul.f32 %v1236, 0.5
        %v1301 = vmul.f32 %v1237, 0.5
        %v1302 = vmul.f32 %v1238, 0.5
        %v1303 = vmul.f32 %v1239, 0.5
        %v1304 = vmul.f32 %v1240, 0.5
        %v1305 = vmul.f32 %v1241, 0.5
        %v1306 = vmul.f32 %v1242, 0.5
        %v1307 = vmul.f32 %v1243, 0.5
        %v1308 = vmul.f32 %v628, %v1244
        %v1309 = vmul.f32 %v717, %v1245
        %v1310 = vmul.f32 %v630, %v1246
        %v1311 = vmul.f32 %v719, %v1247
        %v1312 = vmul.f32 %v633, %v1248
        %v1313 = vmul.f32 %v722, %v1249
        %v1314 = vmul.f32 %v635, %v1250
        %v1315 = vmul.f32 %v724, %v1251
        %v1316 = vmul.f32 %v638, %v1252
        %v1317 = vmul.f32 %v727, %v1253
        %v1318 = vmul.f32 %v640, %v1254
        %v1319 = vmul.f32 %v729, %v1255
        %v1320 = vmul.f32 %v643, %v1256
        %v1321 = vmul.f32 %v732, %v1257
        %v1322 = vmul.f32 %v645, %v1258
        %v1323 = vmul.f32 %v734, %v1259
        %v1324 = vmul.f32 %v648, %v1260
        %v1325 = vmul.f32 %v737, %v1261
        %v1326 = vmul.f32 %v650, %v1262
        %v1327 = vmul.f32 %v739, %v1263
        %v1328 = vmul.f32 %v653, %v1264
        %v1329 = vmul.f32 %v742, %v1265
        %v1330 = vmul.f32 %v655, %v1266
        %v1331 = vmul.f32 %v744, %v1267
        %v1332 = vmul.f32 %v658, %v1268
        %v1333 = vmul.f32 %v747, %v1269
        %v1334 = vmul.f32 %v660, %v1270
        %v1335 = vmul.f32 %v749, %v1271
        %v1336 = vmul.f32 %v663, %v1272
        %v1337 = vmul.f32 %v752, %v1273
        %v1338 = vmul.f32 %v665, %v1274
        %v1339 = vmul.f32 %v754, %v1275
        %v1340 = vmul.f32 %v668, %v1276
        %v1341 = vmul.f32 %v757, %v1277
        %v1342 = vmul.f32 %v670, %v1278
        %v1343 = vmul.f32 %v759, %v1279
        %v1344 = vmul.f32 %v673, %v1280
        %v1345 = vmul.f32 %v762, %v1281
        %v1346 = vmul.f32 %v675, %v1282
        %v1347 = vmul.f32 %v764, %v1283
        %v1348 = vmul.f32 %v678, %v1284
        %v1349 = vmul.f32 %v767, %v1285
        %v1350 = vmul.f32 %v680, %v1286
        %v1351 = vmul.f32 %v769, %v1287
        %v1352 = vmul.f32 %v683, %v1288
        %v1353 = vmul.f32 %v772, %v1289
        %v1354 = vmul.f32 %v685, %v1290
        %v1355 = vmul.f32 %v774, %v1291
        %v1356 = vmul.f32 %v688, %v1292
        %v1357 = vmul.f32 %v777, %v1293
        %v1358 = vmul.f32 %v690, %v1294
        %v1359 = vmul.f32 %v779, %v1295
        %v1360 = vmul.f32 %v693, %v1296
        %v1361 = vmul.f32 %v782, %v1297
        %v1362 = vmul.f32 %v695, %v1298
        %v1363 = vmul.f32 %v784, %v1299
        %v1364 = vmul.f32 %v698, %v1300
        %v1365 = vmul.f32 %v787, %v1301
        %v1366 = vmul.f32 %v700, %v1302
        %v1367 = vmul.f32 %v789, %v1303
        %v1368 = vmul.f32 %v703, %v1304
        %v1369 = vmul.f32 %v792, %v1305
        %v1370 = vmul.f32 %v705, %v1306
        %v1371 = vmul.f32 %v794, %v1307
        %v1372 = vpack.c.bf16 %v1310, %v1308
        %v1373 = vpack.c.bf16 %v1311, %v1309
        %v1374 = vpack.c.bf16 %v1314, %v1312
        %v1375 = vpack.c.bf16 %v1315, %v1313
        %v1376 = vpack.c.bf16 %v1318, %v1316
        %v1377 = vpack.c.bf16 %v1319, %v1317
        %v1378 = vpack.c.bf16 %v1322, %v1320
        %v1379 = vpack.c.bf16 %v1323, %v1321
        %v1380 = vpack.c.bf16 %v1326, %v1324
        %v1381 = vpack.c.bf16 %v1327, %v1325
        %v1382 = vpack.c.bf16 %v1330, %v1328
        %v1383 = vpack.c.bf16 %v1331, %v1329
        %v1384 = vpack.c.bf16 %v1334, %v1332
        %v1385 = vpack.c.bf16 %v1335, %v1333
        %v1386 = vpack.c.bf16 %v1338, %v1336
        %v1387 = vpack.c.bf16 %v1339, %v1337
        %v1388 = vpack.c.bf16 %v1342, %v1340
        %v1389 = vpack.c.bf16 %v1343, %v1341
        %v1390 = vpack.c.bf16 %v1346, %v1344
        %v1391 = vpack.c.bf16 %v1347, %v1345
        %v1392 = vpack.c.bf16 %v1350, %v1348
        %v1393 = vpack.c.bf16 %v1351, %v1349
        %v1394 = vpack.c.bf16 %v1354, %v1352
        %v1395 = vpack.c.bf16 %v1355, %v1353
        %v1396 = vpack.c.bf16 %v1358, %v1356
        %v1397 = vpack.c.bf16 %v1359, %v1357
        %v1398 = vpack.c.bf16 %v1362, %v1360
        %v1399 = vpack.c.bf16 %v1363, %v1361
        %v1400 = vpack.c.bf16 %v1366, %v1364
        %v1401 = vpack.c.bf16 %v1367, %v1365
        %v1402 = vpack.c.bf16 %v1370, %v1368
        %v1403 = vpack.c.bf16 %v1371, %v1369
        %v1404 = vld [vmem:[%s3] sm:$0xf]
        %v1405 = vld [vmem:[%s3 + $0x4] sm:$0xf]
        %v1406 = vld [vmem:[%s3 + $0x8] sm:$0xf]
        %v1407 = vld [vmem:[%s3 + $0xc] sm:$0xf]
        %v1408 = vld [vmem:[%s3 + $0x10] sm:$0xf]
        %v1409 = vld [vmem:[%s3 + $0x14] sm:$0xf]
        %v1410 = vld [vmem:[%s3 + $0x18] sm:$0xf]
        %v1411 = vld [vmem:[%s3 + $0x1c] sm:$0xf]
        %v1412 = vld [vmem:[%s3 + $0x20] sm:$0xf]
        %v1413 = vld [vmem:[%s3 + $0x24] sm:$0xf]
        %v1414 = vld [vmem:[%s3 + $0x28] sm:$0xf]
        %v1415 = vld [vmem:[%s3 + $0x2c] sm:$0xf]
        %v1416 = vld [vmem:[%s3 + $0x30] sm:$0xf]
        %v1417 = vld [vmem:[%s3 + $0x34] sm:$0xf]
        %v1418 = vld [vmem:[%s3 + $0x38] sm:$0xf]
        %v1419 = vld [vmem:[%s3 + $0x3c] sm:$0xf]
        %v1420 = vld [vmem:[%s3 + $0x40] sm:$0xf]
        %v1421 = vld [vmem:[%s3 + $0x44] sm:$0xf]
        %v1422 = vld [vmem:[%s3 + $0x48] sm:$0xf]
        %v1423 = vld [vmem:[%s3 + $0x4c] sm:$0xf]
        %v1424 = vld [vmem:[%s3 + $0x50] sm:$0xf]
        %v1425 = vld [vmem:[%s3 + $0x54] sm:$0xf]
        %v1426 = vld [vmem:[%s3 + $0x58] sm:$0xf]
        %v1427 = vld [vmem:[%s3 + $0x5c] sm:$0xf]
        %v1428 = vld [vmem:[%s3 + $0x60] sm:$0xf]
        %v1429 = vld [vmem:[%s3 + $0x64] sm:$0xf]
        %v1430 = vld [vmem:[%s3 + $0x68] sm:$0xf]
        %v1431 = vld [vmem:[%s3 + $0x6c] sm:$0xf]
        %v1432 = vld [vmem:[%s3 + $0x70] sm:$0xf]
        %v1433 = vld [vmem:[%s3 + $0x74] sm:$0xf]
        %v1434 = vld [vmem:[%s3 + $0x78] sm:$0xf]
        %v1435 = vld [vmem:[%s3 + $0x7c] sm:$0xf]
        %v1436 = vld [vmem:[%s4] sm:$0x1]
        %v1438 = vperm.slane %v1436, 0
        %v1472 = vunpack.c.l.b16 %v1404
        %v1473 = vunpack.c.l.b16 %v1405
        %v1474 = vunpack.c.l.b16 %v1406
        %v1475 = vunpack.c.l.b16 %v1407
        %v1476 = vunpack.c.l.b16 %v1408
        %v1477 = vunpack.c.l.b16 %v1409
        %v1478 = vunpack.c.l.b16 %v1410
        %v1479 = vunpack.c.l.b16 %v1411
        %v1480 = vunpack.c.l.b16 %v1412
        %v1481 = vunpack.c.l.b16 %v1413
        %v1482 = vunpack.c.l.b16 %v1414
        %v1483 = vunpack.c.l.b16 %v1415
        %v1484 = vunpack.c.l.b16 %v1416
        %v1485 = vunpack.c.l.b16 %v1417
        %v1486 = vunpack.c.l.b16 %v1418
        %v1487 = vunpack.c.l.b16 %v1419
        %v1488 = vunpack.c.l.b16 %v1420
        %v1489 = vunpack.c.l.b16 %v1421
        %v1490 = vunpack.c.l.b16 %v1422
        %v1491 = vunpack.c.l.b16 %v1423
        %v1492 = vunpack.c.l.b16 %v1424
        %v1493 = vunpack.c.l.b16 %v1425
        %v1494 = vunpack.c.l.b16 %v1426
        %v1495 = vunpack.c.l.b16 %v1427
        %v1496 = vunpack.c.l.b16 %v1428
        %v1497 = vunpack.c.l.b16 %v1429
        %v1498 = vunpack.c.l.b16 %v1430
        %v1499 = vunpack.c.l.b16 %v1431
        %v1500 = vunpack.c.l.b16 %v1432
        %v1501 = vunpack.c.l.b16 %v1433
        %v1502 = vunpack.c.l.b16 %v1434
        %v1503 = vunpack.c.l.b16 %v1435
        %v1504 = vpack.c.b16 %v1473, %v1472
        %v1505 = vpack.c.b16 %v1475, %v1474
        %v1506 = vpack.c.b16 %v1477, %v1476
        %v1507 = vpack.c.b16 %v1479, %v1478
        %v1508 = vpack.c.b16 %v1481, %v1480
        %v1509 = vpack.c.b16 %v1483, %v1482
        %v1510 = vpack.c.b16 %v1485, %v1484
        %v1511 = vpack.c.b16 %v1487, %v1486
        %v1512 = vpack.c.b16 %v1489, %v1488
        %v1513 = vpack.c.b16 %v1491, %v1490
        %v1514 = vpack.c.b16 %v1493, %v1492
        %v1515 = vpack.c.b16 %v1495, %v1494
        %v1516 = vpack.c.b16 %v1497, %v1496
        %v1517 = vpack.c.b16 %v1499, %v1498
        %v1518 = vpack.c.b16 %v1501, %v1500
        %v1519 = vpack.c.b16 %v1503, %v1502
        %1536 = vmatpush.bf16.msra.mxu0 %v1511
        %1537 = vmatpush.bf16.msra.mxu0 %v1510
        %1538 = vmatpush.bf16.msra.mxu0 %v1509
        %1539 = vmatpush.bf16.msra.mxu0 %v1508
        %1540 = vmatpush.bf16.msra.mxu0 %v1507
        %1541 = vmatpush.bf16.msra.mxu0 %v1506
        %1542 = vmatpush.bf16.msra.mxu0 %v1505
        %1543 = vmatpush.bf16.msra.mxu0 %v1504
        %1544 = vmatmul.bf16.gmra.mxu0 %v1372
        %v1545 = vpop.f32.mrf.mxu0
        %v1546 = vadd.f32 %v1438, %v1545
        %v1547 = vpop.f32.mrf.mxu0
        %v1548 = vadd.f32 %v1438, %v1547
        %1549 = vmatmul.bf16.gmra.mxu0 %v1374
        %v1550 = vpop.f32.mrf.mxu0
        %v1551 = vadd.f32 %v1438, %v1550
        %v1552 = vpop.f32.mrf.mxu0
        %v1553 = vadd.f32 %v1438, %v1552
        %1554 = vmatmul.bf16.gmra.mxu0 %v1376
        %v1555 = vpop.f32.mrf.mxu0
        %v1556 = vadd.f32 %v1438, %v1555
        %v1557 = vpop.f32.mrf.mxu0
        %v1558 = vadd.f32 %v1438, %v1557
        %1559 = vmatmul.bf16.gmra.mxu0 %v1378
        %v1560 = vpop.f32.mrf.mxu0
        %v1561 = vadd.f32 %v1438, %v1560
        %v1562 = vpop.f32.mrf.mxu0
        %v1563 = vadd.f32 %v1438, %v1562
        %1564 = vmatmul.bf16.gmra.mxu0 %v1380
        %v1565 = vpop.f32.mrf.mxu0
        %v1566 = vadd.f32 %v1438, %v1565
        %v1567 = vpop.f32.mrf.mxu0
        %v1568 = vadd.f32 %v1438, %v1567
        %1569 = vmatmul.bf16.gmra.mxu0 %v1382
        %v1570 = vpop.f32.mrf.mxu0
        %v1571 = vadd.f32 %v1438, %v1570
        %v1572 = vpop.f32.mrf.mxu0
        %v1573 = vadd.f32 %v1438, %v1572
        %1574 = vmatmul.bf16.gmra.mxu0 %v1384
        %v1575 = vpop.f32.mrf.mxu0
        %v1576 = vadd.f32 %v1438, %v1575
        %v1577 = vpop.f32.mrf.mxu0
        %v1578 = vadd.f32 %v1438, %v1577
        %1579 = vmatmul.bf16.gmra.mxu0 %v1386
        %v1580 = vpop.f32.mrf.mxu0
        %v1581 = vadd.f32 %v1438, %v1580
        %v1582 = vpop.f32.mrf.mxu0
        %v1583 = vadd.f32 %v1438, %v1582
        %1584 = vmatmul.bf16.gmra.mxu0 %v1388
        %v1585 = vpop.f32.mrf.mxu0
        %v1586 = vadd.f32 %v1438, %v1585
        %v1587 = vpop.f32.mrf.mxu0
        %v1588 = vadd.f32 %v1438, %v1587
        %1589 = vmatmul.bf16.gmra.mxu0 %v1390
        %v1590 = vpop.f32.mrf.mxu0
        %v1591 = vadd.f32 %v1438, %v1590
        %v1592 = vpop.f32.mrf.mxu0
        %v1593 = vadd.f32 %v1438, %v1592
        %1594 = vmatmul.bf16.gmra.mxu0 %v1392
        %v1595 = vpop.f32.mrf.mxu0
        %v1596 = vadd.f32 %v1438, %v1595
        %v1597 = vpop.f32.mrf.mxu0
        %v1598 = vadd.f32 %v1438, %v1597
        %1599 = vmatmul.bf16.gmra.mxu0 %v1394
        %v1600 = vpop.f32.mrf.mxu0
        %v1601 = vadd.f32 %v1438, %v1600
        %v1602 = vpop.f32.mrf.mxu0
        %v1603 = vadd.f32 %v1438, %v1602
        %1604 = vmatmul.bf16.gmra.mxu0 %v1396
        %v1605 = vpop.f32.mrf.mxu0
        %v1606 = vadd.f32 %v1438, %v1605
        %v1607 = vpop.f32.mrf.mxu0
        %v1608 = vadd.f32 %v1438, %v1607
        %1609 = vmatmul.bf16.gmra.mxu0 %v1398
        %v1610 = vpop.f32.mrf.mxu0
        %v1611 = vadd.f32 %v1438, %v1610
        %v1612 = vpop.f32.mrf.mxu0
        %v1613 = vadd.f32 %v1438, %v1612
        %1614 = vmatmul.bf16.gmra.mxu0 %v1400
        %v1615 = vpop.f32.mrf.mxu0
        %v1616 = vadd.f32 %v1438, %v1615
        %v1617 = vpop.f32.mrf.mxu0
        %v1618 = vadd.f32 %v1438, %v1617
        %1619 = vmatmul.bf16.gmra.mxu0 %v1402
        %v1620 = vpop.f32.mrf.mxu0
        %v1621 = vadd.f32 %v1438, %v1620
        %v1622 = vpop.f32.mrf.mxu0
        %v1623 = vadd.f32 %v1438, %v1622
        %1624 = vdwg.mxu0
        %1625 = vmatpush.bf16.msra.mxu0 %v1519
        %1626 = vmatpush.bf16.msra.mxu0 %v1518
        %1627 = vmatpush.bf16.msra.mxu0 %v1517
        %1628 = vmatpush.bf16.msra.mxu0 %v1516
        %1629 = vmatpush.bf16.msra.mxu0 %v1515
        %1630 = vmatpush.bf16.msra.mxu0 %v1514
        %1631 = vmatpush.bf16.msra.mxu0 %v1513
        %1632 = vmatpush.bf16.msra.mxu0 %v1512
        %1633 = vmatmul.bf16.gmra.mxu0 %v1373
        %v1634 = vpop.f32.mrf.mxu0
        %v1635 = vadd.f32 %v1546, %v1634
        %v1636 = vpop.f32.mrf.mxu0
        %v1637 = vadd.f32 %v1548, %v1636
        %1638 = vmatmul.bf16.gmra.mxu0 %v1375
        %v1639 = vpop.f32.mrf.mxu0
        %v1640 = vadd.f32 %v1551, %v1639
        %v1641 = vpop.f32.mrf.mxu0
        %v1642 = vadd.f32 %v1553, %v1641
        %1643 = vmatmul.bf16.gmra.mxu0 %v1377
        %v1644 = vpop.f32.mrf.mxu0
        %v1645 = vadd.f32 %v1556, %v1644
        %v1646 = vpop.f32.mrf.mxu0
        %v1647 = vadd.f32 %v1558, %v1646
        %1648 = vmatmul.bf16.gmra.mxu0 %v1379
        %v1649 = vpop.f32.mrf.mxu0
        %v1650 = vadd.f32 %v1561, %v1649
        %v1651 = vpop.f32.mrf.mxu0
        %v1652 = vadd.f32 %v1563, %v1651
        %1653 = vmatmul.bf16.gmra.mxu0 %v1381
        %v1654 = vpop.f32.mrf.mxu0
        %v1655 = vadd.f32 %v1566, %v1654
        %v1656 = vpop.f32.mrf.mxu0
        %v1657 = vadd.f32 %v1568, %v1656
        %1658 = vmatmul.bf16.gmra.mxu0 %v1383
        %v1659 = vpop.f32.mrf.mxu0
        %v1660 = vadd.f32 %v1571, %v1659
        %v1661 = vpop.f32.mrf.mxu0
        %v1662 = vadd.f32 %v1573, %v1661
        %1663 = vmatmul.bf16.gmra.mxu0 %v1385
        %v1664 = vpop.f32.mrf.mxu0
        %v1665 = vadd.f32 %v1576, %v1664
        %v1666 = vpop.f32.mrf.mxu0
        %v1667 = vadd.f32 %v1578, %v1666
        %1668 = vmatmul.bf16.gmra.mxu0 %v1387
        %v1669 = vpop.f32.mrf.mxu0
        %v1670 = vadd.f32 %v1581, %v1669
        %v1671 = vpop.f32.mrf.mxu0
        %v1672 = vadd.f32 %v1583, %v1671
        %1673 = vmatmul.bf16.gmra.mxu0 %v1389
        %v1674 = vpop.f32.mrf.mxu0
        %v1675 = vadd.f32 %v1586, %v1674
        %v1676 = vpop.f32.mrf.mxu0
        %v1677 = vadd.f32 %v1588, %v1676
        %1678 = vmatmul.bf16.gmra.mxu0 %v1391
        %v1679 = vpop.f32.mrf.mxu0
        %v1680 = vadd.f32 %v1591, %v1679
        %v1681 = vpop.f32.mrf.mxu0
        %v1682 = vadd.f32 %v1593, %v1681
        %1683 = vmatmul.bf16.gmra.mxu0 %v1393
        %v1684 = vpop.f32.mrf.mxu0
        %v1685 = vadd.f32 %v1596, %v1684
        %v1686 = vpop.f32.mrf.mxu0
        %v1687 = vadd.f32 %v1598, %v1686
        %1688 = vmatmul.bf16.gmra.mxu0 %v1395
        %v1689 = vpop.f32.mrf.mxu0
        %v1690 = vadd.f32 %v1601, %v1689
        %v1691 = vpop.f32.mrf.mxu0
        %v1692 = vadd.f32 %v1603, %v1691
        %1693 = vmatmul.bf16.gmra.mxu0 %v1397
        %v1694 = vpop.f32.mrf.mxu0
        %v1695 = vadd.f32 %v1606, %v1694
        %v1696 = vpop.f32.mrf.mxu0
        %v1697 = vadd.f32 %v1608, %v1696
        %1698 = vmatmul.bf16.gmra.mxu0 %v1399
        %v1699 = vpop.f32.mrf.mxu0
        %v1700 = vadd.f32 %v1611, %v1699
        %v1701 = vpop.f32.mrf.mxu0
        %v1702 = vadd.f32 %v1613, %v1701
        %1703 = vmatmul.bf16.gmra.mxu0 %v1401
        %v1704 = vpop.f32.mrf.mxu0
        %v1705 = vadd.f32 %v1616, %v1704
        %v1706 = vpop.f32.mrf.mxu0
        %v1707 = vadd.f32 %v1618, %v1706
        %1708 = vmatmul.bf16.gmra.mxu0 %v1403
        %v1709 = vpop.f32.mrf.mxu0
        %v1710 = vadd.f32 %v1621, %v1709
        %v1711 = vpop.f32.mrf.mxu0
        %v1712 = vadd.f32 %v1623, %v1711
        %1713 = vdwg.mxu0
        %v1714 = vunpack.c.l.bf16 %v356
        %v1715 = vunpack.c.l.bf16 %v357
        %v1716 = vunpack.c.l.bf16 %v358
        %v1717 = vunpack.c.l.bf16 %v359
        %v1718 = vunpack.c.l.bf16 %v360
        %v1719 = vunpack.c.l.bf16 %v361
        %v1720 = vunpack.c.l.bf16 %v362
        %v1721 = vunpack.c.l.bf16 %v363
        %v1722 = vunpack.c.l.bf16 %v364
        %v1723 = vunpack.c.l.bf16 %v365
        %v1724 = vunpack.c.l.bf16 %v366
        %v1725 = vunpack.c.l.bf16 %v367
        %v1726 = vunpack.c.l.bf16 %v368
        %v1727 = vunpack.c.l.bf16 %v369
        %v1728 = vunpack.c.l.bf16 %v370
        %v1729 = vunpack.c.l.bf16 %v371
        %v1730 = vunpack.c.l.bf16 %v372
        %v1731 = vunpack.c.l.bf16 %v373
        %v1732 = vunpack.c.l.bf16 %v374
        %v1733 = vunpack.c.l.bf16 %v375
        %v1734 = vunpack.c.l.bf16 %v376
        %v1735 = vunpack.c.l.bf16 %v377
        %v1736 = vunpack.c.l.bf16 %v378
        %v1737 = vunpack.c.l.bf16 %v379
        %v1738 = vunpack.c.l.bf16 %v380
        %v1739 = vunpack.c.l.bf16 %v381
        %v1740 = vunpack.c.l.bf16 %v382
        %v1741 = vunpack.c.l.bf16 %v383
        %v1742 = vunpack.c.l.bf16 %v384
        %v1743 = vunpack.c.l.bf16 %v385
        %v1744 = vunpack.c.l.bf16 %v386
        %v1745 = vunpack.c.l.bf16 %v387
        %v1746 = vadd.f32 %v1714, %v1635
        %v1747 = vadd.f32 %v1715, %v1637
        %v1748 = vadd.f32 %v1716, %v1640
        %v1749 = vadd.f32 %v1717, %v1642
        %v1750 = vadd.f32 %v1718, %v1645
        %v1751 = vadd.f32 %v1719, %v1647
        %v1752 = vadd.f32 %v1720, %v1650
        %v1753 = vadd.f32 %v1721, %v1652
        %v1754 = vadd.f32 %v1722, %v1655
        %v1755 = vadd.f32 %v1723, %v1657
        %v1756 = vadd.f32 %v1724, %v1660
        %v1757 = vadd.f32 %v1725, %v1662
        %v1758 = vadd.f32 %v1726, %v1665
        %v1759 = vadd.f32 %v1727, %v1667
        %v1760 = vadd.f32 %v1728, %v1670
        %v1761 = vadd.f32 %v1729, %v1672
        %v1762 = vadd.f32 %v1730, %v1675
        %v1763 = vadd.f32 %v1731, %v1677
        %v1764 = vadd.f32 %v1732, %v1680
        %v1765 = vadd.f32 %v1733, %v1682
        %v1766 = vadd.f32 %v1734, %v1685
        %v1767 = vadd.f32 %v1735, %v1687
        %v1768 = vadd.f32 %v1736, %v1690
        %v1769 = vadd.f32 %v1737, %v1692
        %v1770 = vadd.f32 %v1738, %v1695
        %v1771 = vadd.f32 %v1739, %v1697
        %v1772 = vadd.f32 %v1740, %v1700
        %v1773 = vadd.f32 %v1741, %v1702
        %v1774 = vadd.f32 %v1742, %v1705
        %v1775 = vadd.f32 %v1743, %v1707
        %v1776 = vadd.f32 %v1744, %v1710
        %v1777 = vadd.f32 %v1745, %v1712
        %v1778 = vpack.c.bf16 %v1746, %v1746
        %v1779 = vpack.c.bf16 %v1747, %v1747
        %v1780 = vpack.c.bf16 %v1748, %v1748
        %v1781 = vpack.c.bf16 %v1749, %v1749
        %v1782 = vpack.c.bf16 %v1750, %v1750
        %v1783 = vpack.c.bf16 %v1751, %v1751
        %v1784 = vpack.c.bf16 %v1752, %v1752
        %v1785 = vpack.c.bf16 %v1753, %v1753
        %v1786 = vpack.c.bf16 %v1754, %v1754
        %v1787 = vpack.c.bf16 %v1755, %v1755
        %v1788 = vpack.c.bf16 %v1756, %v1756
        %v1789 = vpack.c.bf16 %v1757, %v1757
        %v1790 = vpack.c.bf16 %v1758, %v1758
        %v1791 = vpack.c.bf16 %v1759, %v1759
        %v1792 = vpack.c.bf16 %v1760, %v1760
        %v1793 = vpack.c.bf16 %v1761, %v1761
        %v1794 = vpack.c.bf16 %v1762, %v1762
        %v1795 = vpack.c.bf16 %v1763, %v1763
        %v1796 = vpack.c.bf16 %v1764, %v1764
        %v1797 = vpack.c.bf16 %v1765, %v1765
        %v1798 = vpack.c.bf16 %v1766, %v1766
        %v1799 = vpack.c.bf16 %v1767, %v1767
        %v1800 = vpack.c.bf16 %v1768, %v1768
        %v1801 = vpack.c.bf16 %v1769, %v1769
        %v1802 = vpack.c.bf16 %v1770, %v1770
        %v1803 = vpack.c.bf16 %v1771, %v1771
        %v1804 = vpack.c.bf16 %v1772, %v1772
        %v1805 = vpack.c.bf16 %v1773, %v1773
        %v1806 = vpack.c.bf16 %v1774, %v1774
        %v1807 = vpack.c.bf16 %v1775, %v1775
        %v1808 = vpack.c.bf16 %v1776, %v1776
        %v1809 = vpack.c.bf16 %v1777, %v1777
        %v1810 = vld [vmem:[%s5] sm:$0xff]
        %v1811 = vld [vmem:[%s5 + $0x8] sm:$0xff]
        %v1812 = vld [vmem:[%s5 + $0x10] sm:$0xff]
        %v1813 = vld [vmem:[%s5 + $0x18] sm:$0xff]
        %v1814 = vld [vmem:[%s5 + $0x20] sm:$0xff]
        %v1815 = vld [vmem:[%s5 + $0x28] sm:$0xff]
        %v1816 = vld [vmem:[%s5 + $0x30] sm:$0xff]
        %v1817 = vld [vmem:[%s5 + $0x38] sm:$0xff]
        %v1818 = vld [vmem:[%s5 + $0x40] sm:$0xff]
        %v1819 = vld [vmem:[%s5 + $0x48] sm:$0xff]
        %v1820 = vld [vmem:[%s5 + $0x50] sm:$0xff]
        %v1821 = vld [vmem:[%s5 + $0x58] sm:$0xff]
        %v1822 = vld [vmem:[%s5 + $0x60] sm:$0xff]
        %v1823 = vld [vmem:[%s5 + $0x68] sm:$0xff]
        %v1824 = vld [vmem:[%s5 + $0x70] sm:$0xff]
        %v1825 = vld [vmem:[%s5 + $0x78] sm:$0xff]
        %v1826 = vld [vmem:[%s6] sm:$0x3]
        %v1828 = vperm.slane %v1826, 0
        %v1829 = vperm.slane %v1826, 1
        %v1864 = vunpack.c.l.b16 %v1778
        %v1865 = vunpack.c.l.b16 %v1779
        %v1866 = vunpack.c.l.b16 %v1780
        %v1867 = vunpack.c.l.b16 %v1781
        %v1868 = vunpack.c.l.b16 %v1782
        %v1869 = vunpack.c.l.b16 %v1783
        %v1870 = vunpack.c.l.b16 %v1784
        %v1871 = vunpack.c.l.b16 %v1785
        %v1872 = vunpack.c.l.b16 %v1786
        %v1873 = vunpack.c.l.b16 %v1787
        %v1874 = vunpack.c.l.b16 %v1788
        %v1875 = vunpack.c.l.b16 %v1789
        %v1876 = vunpack.c.l.b16 %v1790
        %v1877 = vunpack.c.l.b16 %v1791
        %v1878 = vunpack.c.l.b16 %v1792
        %v1879 = vunpack.c.l.b16 %v1793
        %v1880 = vunpack.c.l.b16 %v1794
        %v1881 = vunpack.c.l.b16 %v1795
        %v1882 = vunpack.c.l.b16 %v1796
        %v1883 = vunpack.c.l.b16 %v1797
        %v1884 = vunpack.c.l.b16 %v1798
        %v1885 = vunpack.c.l.b16 %v1799
        %v1886 = vunpack.c.l.b16 %v1800
        %v1887 = vunpack.c.l.b16 %v1801
        %v1888 = vunpack.c.l.b16 %v1802
        %v1889 = vunpack.c.l.b16 %v1803
        %v1890 = vunpack.c.l.b16 %v1804
        %v1891 = vunpack.c.l.b16 %v1805
        %v1892 = vunpack.c.l.b16 %v1806
        %v1893 = vunpack.c.l.b16 %v1807
        %v1894 = vunpack.c.l.b16 %v1808
        %v1895 = vunpack.c.l.b16 %v1809
        %v1896 = vpack.c.b16 %v1865, %v1864
        %v1897 = vpack.c.b16 %v1867, %v1866
        %v1898 = vpack.c.b16 %v1869, %v1868
        %v1899 = vpack.c.b16 %v1871, %v1870
        %v1900 = vpack.c.b16 %v1873, %v1872
        %v1901 = vpack.c.b16 %v1875, %v1874
        %v1902 = vpack.c.b16 %v1877, %v1876
        %v1903 = vpack.c.b16 %v1879, %v1878
        %v1904 = vpack.c.b16 %v1881, %v1880
        %v1905 = vpack.c.b16 %v1883, %v1882
        %v1906 = vpack.c.b16 %v1885, %v1884
        %v1907 = vpack.c.b16 %v1887, %v1886
        %v1908 = vpack.c.b16 %v1889, %v1888
        %v1909 = vpack.c.b16 %v1891, %v1890
        %v1910 = vpack.c.b16 %v1893, %v1892
        %v1911 = vpack.c.b16 %v1895, %v1894
        %v1944 = vunpack.c.l.b16 %v1810
        %v1945 = vunpack.c.h.b16 %v1810
        %v1946 = vunpack.c.l.b16 %v1811
        %v1947 = vunpack.c.h.b16 %v1811
        %v1948 = vunpack.c.l.b16 %v1812
        %v1949 = vunpack.c.h.b16 %v1812
        %v1950 = vunpack.c.l.b16 %v1813
        %v1951 = vunpack.c.h.b16 %v1813
        %v1952 = vunpack.c.l.b16 %v1814
        %v1953 = vunpack.c.h.b16 %v1814
        %v1954 = vunpack.c.l.b16 %v1815
        %v1955 = vunpack.c.h.b16 %v1815
        %v1956 = vunpack.c.l.b16 %v1816
        %v1957 = vunpack.c.h.b16 %v1816
        %v1958 = vunpack.c.l.b16 %v1817
        %v1959 = vunpack.c.h.b16 %v1817
        %v1960 = vunpack.c.l.b16 %v1818
        %v1961 = vunpack.c.h.b16 %v1818
        %v1962 = vunpack.c.l.b16 %v1819
        %v1963 = vunpack.c.h.b16 %v1819
        %v1964 = vunpack.c.l.b16 %v1820
        %v1965 = vunpack.c.h.b16 %v1820
        %v1966 = vunpack.c.l.b16 %v1821
        %v1967 = vunpack.c.h.b16 %v1821
        %v1968 = vunpack.c.l.b16 %v1822
        %v1969 = vunpack.c.h.b16 %v1822
        %v1970 = vunpack.c.l.b16 %v1823
        %v1971 = vunpack.c.h.b16 %v1823
        %v1972 = vunpack.c.l.b16 %v1824
        %v1973 = vunpack.c.h.b16 %v1824
        %v1974 = vunpack.c.l.b16 %v1825
        %v1975 = vunpack.c.h.b16 %v1825
        %v1976 = vpack.c.b16 %v1946, %v1944
        %v1977 = vpack.c.b16 %v1947, %v1945
        %v1978 = vpack.c.b16 %v1950, %v1948
        %v1979 = vpack.c.b16 %v1951, %v1949
        %v1980 = vpack.c.b16 %v1954, %v1952
        %v1981 = vpack.c.b16 %v1955, %v1953
        %v1982 = vpack.c.b16 %v1958, %v1956
        %v1983 = vpack.c.b16 %v1959, %v1957
        %v1984 = vpack.c.b16 %v1962, %v1960
        %v1985 = vpack.c.b16 %v1963, %v1961
        %v1986 = vpack.c.b16 %v1966, %v1964
        %v1987 = vpack.c.b16 %v1967, %v1965
        %v1988 = vpack.c.b16 %v1970, %v1968
        %v1989 = vpack.c.b16 %v1971, %v1969
        %v1990 = vpack.c.b16 %v1974, %v1972
        %v1991 = vpack.c.b16 %v1975, %v1973
        %2008 = vmatpush.bf16.msra.mxu0 %v1990
        %2009 = vmatpush.bf16.msra.mxu0 %v1988
        %2010 = vmatpush.bf16.msra.mxu0 %v1986
        %2011 = vmatpush.bf16.msra.mxu0 %v1984
        %2012 = vmatpush.bf16.msra.mxu0 %v1982
        %2013 = vmatpush.bf16.msra.mxu0 %v1980
        %2014 = vmatpush.bf16.msra.mxu0 %v1978
        %2015 = vmatpush.bf16.msra.mxu0 %v1976
        %2016 = vmatmul.bf16.gmra.mxu0 %v1896
        %v2017 = vpop.f32.mrf.mxu0
        %v2018 = vadd.f32 %v1828, %v2017
        %v2019 = vpop.f32.mrf.mxu0
        %v2020 = vadd.f32 %v1828, %v2019
        %2021 = vmatmul.bf16.gmra.mxu0 %v1897
        %v2022 = vpop.f32.mrf.mxu0
        %v2023 = vadd.f32 %v1828, %v2022
        %v2024 = vpop.f32.mrf.mxu0
        %v2025 = vadd.f32 %v1828, %v2024
        %2026 = vmatmul.bf16.gmra.mxu0 %v1898
        %v2027 = vpop.f32.mrf.mxu0
        %v2028 = vadd.f32 %v1828, %v2027
        %v2029 = vpop.f32.mrf.mxu0
        %v2030 = vadd.f32 %v1828, %v2029
        %2031 = vmatmul.bf16.gmra.mxu0 %v1899
        %v2032 = vpop.f32.mrf.mxu0
        %v2033 = vadd.f32 %v1828, %v2032
        %v2034 = vpop.f32.mrf.mxu0
        %v2035 = vadd.f32 %v1828, %v2034
        %2036 = vmatmul.bf16.gmra.mxu0 %v1900
        %v2037 = vpop.f32.mrf.mxu0
        %v2038 = vadd.f32 %v1828, %v2037
        %v2039 = vpop.f32.mrf.mxu0
        %v2040 = vadd.f32 %v1828, %v2039
        %2041 = vmatmul.bf16.gmra.mxu0 %v1901
        %v2042 = vpop.f32.mrf.mxu0
        %v2043 = vadd.f32 %v1828, %v2042
        %v2044 = vpop.f32.mrf.mxu0
        %v2045 = vadd.f32 %v1828, %v2044
        %2046 = vmatmul.bf16.gmra.mxu0 %v1902
        %v2047 = vpop.f32.mrf.mxu0
        %v2048 = vadd.f32 %v1828, %v2047
        %v2049 = vpop.f32.mrf.mxu0
        %v2050 = vadd.f32 %v1828, %v2049
        %2051 = vmatmul.bf16.gmra.mxu0 %v1903
        %v2052 = vpop.f32.mrf.mxu0
        %v2053 = vadd.f32 %v1828, %v2052
        %v2054 = vpop.f32.mrf.mxu0
        %v2055 = vadd.f32 %v1828, %v2054
        %2056 = vmatmul.bf16.gmra.mxu0 %v1904
        %v2057 = vpop.f32.mrf.mxu0
        %v2058 = vadd.f32 %v1828, %v2057
        %v2059 = vpop.f32.mrf.mxu0
        %v2060 = vadd.f32 %v1828, %v2059
        %2061 = vmatmul.bf16.gmra.mxu0 %v1905
        %v2062 = vpop.f32.mrf.mxu0
        %v2063 = vadd.f32 %v1828, %v2062
        %v2064 = vpop.f32.mrf.mxu0
        %v2065 = vadd.f32 %v1828, %v2064
        %2066 = vmatmul.bf16.gmra.mxu0 %v1906
        %v2067 = vpop.f32.mrf.mxu0
        %v2068 = vadd.f32 %v1828, %v2067
        %v2069 = vpop.f32.mrf.mxu0
        %v2070 = vadd.f32 %v1828, %v2069
        %2071 = vmatmul.bf16.gmra.mxu0 %v1907
        %v2072 = vpop.f32.mrf.mxu0
        %v2073 = vadd.f32 %v1828, %v2072
        %v2074 = vpop.f32.mrf.mxu0
        %v2075 = vadd.f32 %v1828, %v2074
        %2076 = vmatmul.bf16.gmra.mxu0 %v1908
        %v2077 = vpop.f32.mrf.mxu0
        %v2078 = vadd.f32 %v1828, %v2077
        %v2079 = vpop.f32.mrf.mxu0
        %v2080 = vadd.f32 %v1828, %v2079
        %2081 = vmatmul.bf16.gmra.mxu0 %v1909
        %v2082 = vpop.f32.mrf.mxu0
        %v2083 = vadd.f32 %v1828, %v2082
        %v2084 = vpop.f32.mrf.mxu0
        %v2085 = vadd.f32 %v1828, %v2084
        %2086 = vmatmul.bf16.gmra.mxu0 %v1910
        %v2087 = vpop.f32.mrf.mxu0
        %v2088 = vadd.f32 %v1828, %v2087
        %v2089 = vpop.f32.mrf.mxu0
        %v2090 = vadd.f32 %v1828, %v2089
        %2091 = vmatmul.bf16.gmra.mxu0 %v1911
        %v2092 = vpop.f32.mrf.mxu0
        %v2093 = vadd.f32 %v1828, %v2092
        %v2094 = vpop.f32.mrf.mxu0
        %v2095 = vadd.f32 %v1828, %v2094
        %2096 = vdwg.mxu0
        %2097 = vmatpush.bf16.msra.mxu0 %v1991
        %2098 = vmatpush.bf16.msra.mxu0 %v1989
        %2099 = vmatpush.bf16.msra.mxu0 %v1987
        %2100 = vmatpush.bf16.msra.mxu0 %v1985
        %2101 = vmatpush.bf16.msra.mxu0 %v1983
        %2102 = vmatpush.bf16.msra.mxu0 %v1981
        %2103 = vmatpush.bf16.msra.mxu0 %v1979
        %2104 = vmatpush.bf16.msra.mxu0 %v1977
        %2105 = vmatmul.bf16.gmra.mxu0 %v1896
        %v2106 = vpop.f32.mrf.mxu0
        %v2107 = vadd.f32 %v1829, %v2106
        %v2108 = vpop.f32.mrf.mxu0
        %v2109 = vadd.f32 %v1829, %v2108
        %2110 = vmatmul.bf16.gmra.mxu0 %v1897
        %v2111 = vpop.f32.mrf.mxu0
        %v2112 = vadd.f32 %v1829, %v2111
        %v2113 = vpop.f32.mrf.mxu0
        %v2114 = vadd.f32 %v1829, %v2113
        %2115 = vmatmul.bf16.gmra.mxu0 %v1898
        %v2116 = vpop.f32.mrf.mxu0
        %v2117 = vadd.f32 %v1829, %v2116
        %v2118 = vpop.f32.mrf.mxu0
        %v2119 = vadd.f32 %v1829, %v2118
        %2120 = vmatmul.bf16.gmra.mxu0 %v1899
        %v2121 = vpop.f32.mrf.mxu0
        %v2122 = vadd.f32 %v1829, %v2121
        %v2123 = vpop.f32.mrf.mxu0
        %v2124 = vadd.f32 %v1829, %v2123
        %2125 = vmatmul.bf16.gmra.mxu0 %v1900
        %v2126 = vpop.f32.mrf.mxu0
        %v2127 = vadd.f32 %v1829, %v2126
        %v2128 = vpop.f32.mrf.mxu0
        %v2129 = vadd.f32 %v1829, %v2128
        %2130 = vmatmul.bf16.gmra.mxu0 %v1901
        %v2131 = vpop.f32.mrf.mxu0
        %v2132 = vadd.f32 %v1829, %v2131
        %v2133 = vpop.f32.mrf.mxu0
        %v2134 = vadd.f32 %v1829, %v2133
        %2135 = vmatmul.bf16.gmra.mxu0 %v1902
        %v2136 = vpop.f32.mrf.mxu0
        %v2137 = vadd.f32 %v1829, %v2136
        %v2138 = vpop.f32.mrf.mxu0
        %v2139 = vadd.f32 %v1829, %v2138
        %2140 = vmatmul.bf16.gmra.mxu0 %v1903
        %v2141 = vpop.f32.mrf.mxu0
        %v2142 = vadd.f32 %v1829, %v2141
        %v2143 = vpop.f32.mrf.mxu0
        %v2144 = vadd.f32 %v1829, %v2143
        %2145 = vmatmul.bf16.gmra.mxu0 %v1904
        %v2146 = vpop.f32.mrf.mxu0
        %v2147 = vadd.f32 %v1829, %v2146
        %v2148 = vpop.f32.mrf.mxu0
        %v2149 = vadd.f32 %v1829, %v2148
        %2150 = vmatmul.bf16.gmra.mxu0 %v1905
        %v2151 = vpop.f32.mrf.mxu0
        %v2152 = vadd.f32 %v1829, %v2151
        %v2153 = vpop.f32.mrf.mxu0
        %v2154 = vadd.f32 %v1829, %v2153
        %2155 = vmatmul.bf16.gmra.mxu0 %v1906
        %v2156 = vpop.f32.mrf.mxu0
        %v2157 = vadd.f32 %v1829, %v2156
        %v2158 = vpop.f32.mrf.mxu0
        %v2159 = vadd.f32 %v1829, %v2158
        %2160 = vmatmul.bf16.gmra.mxu0 %v1907
        %v2161 = vpop.f32.mrf.mxu0
        %v2162 = vadd.f32 %v1829, %v2161
        %v2163 = vpop.f32.mrf.mxu0
        %v2164 = vadd.f32 %v1829, %v2163
        %2165 = vmatmul.bf16.gmra.mxu0 %v1908
        %v2166 = vpop.f32.mrf.mxu0
        %v2167 = vadd.f32 %v1829, %v2166
        %v2168 = vpop.f32.mrf.mxu0
        %v2169 = vadd.f32 %v1829, %v2168
        %2170 = vmatmul.bf16.gmra.mxu0 %v1909
        %v2171 = vpop.f32.mrf.mxu0
        %v2172 = vadd.f32 %v1829, %v2171
        %v2173 = vpop.f32.mrf.mxu0
        %v2174 = vadd.f32 %v1829, %v2173
        %2175 = vmatmul.bf16.gmra.mxu0 %v1910
        %v2176 = vpop.f32.mrf.mxu0
        %v2177 = vadd.f32 %v1829, %v2176
        %v2178 = vpop.f32.mrf.mxu0
        %v2179 = vadd.f32 %v1829, %v2178
        %2180 = vmatmul.bf16.gmra.mxu0 %v1911
        %v2181 = vpop.f32.mrf.mxu0
        %v2182 = vadd.f32 %v1829, %v2181
        %v2183 = vpop.f32.mrf.mxu0
        %v2184 = vadd.f32 %v1829, %v2183
        %2185 = vdwg.mxu0
        %v2186 = vmul.f32 %v2018, %v2018
        %v2187 = vmul.f32 %v2107, %v2107
        %v2188 = vmul.f32 %v2020, %v2020
        %v2189 = vmul.f32 %v2109, %v2109
        %v2190 = vmul.f32 %v2023, %v2023
        %v2191 = vmul.f32 %v2112, %v2112
        %v2192 = vmul.f32 %v2025, %v2025
        %v2193 = vmul.f32 %v2114, %v2114
        %v2194 = vmul.f32 %v2028, %v2028
        %v2195 = vmul.f32 %v2117, %v2117
        %v2196 = vmul.f32 %v2030, %v2030
        %v2197 = vmul.f32 %v2119, %v2119
        %v2198 = vmul.f32 %v2033, %v2033
        %v2199 = vmul.f32 %v2122, %v2122
        %v2200 = vmul.f32 %v2035, %v2035
        %v2201 = vmul.f32 %v2124, %v2124
        %v2202 = vmul.f32 %v2038, %v2038
        %v2203 = vmul.f32 %v2127, %v2127
        %v2204 = vmul.f32 %v2040, %v2040
        %v2205 = vmul.f32 %v2129, %v2129
        %v2206 = vmul.f32 %v2043, %v2043
        %v2207 = vmul.f32 %v2132, %v2132
        %v2208 = vmul.f32 %v2045, %v2045
        %v2209 = vmul.f32 %v2134, %v2134
        %v2210 = vmul.f32 %v2048, %v2048
        %v2211 = vmul.f32 %v2137, %v2137
        %v2212 = vmul.f32 %v2050, %v2050
        %v2213 = vmul.f32 %v2139, %v2139
        %v2214 = vmul.f32 %v2053, %v2053
        %v2215 = vmul.f32 %v2142, %v2142
        %v2216 = vmul.f32 %v2055, %v2055
        %v2217 = vmul.f32 %v2144, %v2144
        %v2218 = vmul.f32 %v2058, %v2058
        %v2219 = vmul.f32 %v2147, %v2147
        %v2220 = vmul.f32 %v2060, %v2060
        %v2221 = vmul.f32 %v2149, %v2149
        %v2222 = vmul.f32 %v2063, %v2063
        %v2223 = vmul.f32 %v2152, %v2152
        %v2224 = vmul.f32 %v2065, %v2065
        %v2225 = vmul.f32 %v2154, %v2154
        %v2226 = vmul.f32 %v2068, %v2068
        %v2227 = vmul.f32 %v2157, %v2157
        %v2228 = vmul.f32 %v2070, %v2070
        %v2229 = vmul.f32 %v2159, %v2159
        %v2230 = vmul.f32 %v2073, %v2073
        %v2231 = vmul.f32 %v2162, %v2162
        %v2232 = vmul.f32 %v2075, %v2075
        %v2233 = vmul.f32 %v2164, %v2164
        %v2234 = vmul.f32 %v2078, %v2078
        %v2235 = vmul.f32 %v2167, %v2167
        %v2236 = vmul.f32 %v2080, %v2080
        %v2237 = vmul.f32 %v2169, %v2169
        %v2238 = vmul.f32 %v2083, %v2083
        %v2239 = vmul.f32 %v2172, %v2172
        %v2240 = vmul.f32 %v2085, %v2085
        %v2241 = vmul.f32 %v2174, %v2174
        %v2242 = vmul.f32 %v2088, %v2088
        %v2243 = vmul.f32 %v2177, %v2177
        %v2244 = vmul.f32 %v2090, %v2090
        %v2245 = vmul.f32 %v2179, %v2179
        %v2246 = vmul.f32 %v2093, %v2093
        %v2247 = vmul.f32 %v2182, %v2182
        %v2248 = vmul.f32 %v2095, %v2095
        %v2249 = vmul.f32 %v2184, %v2184
        %v2250 = vmul.f32 %v2018, %v2186
        %v2251 = vmul.f32 %v2107, %v2187
        %v2252 = vmul.f32 %v2020, %v2188
        %v2253 = vmul.f32 %v2109, %v2189
        %v2254 = vmul.f32 %v2023, %v2190
        %v2255 = vmul.f32 %v2112, %v2191
        %v2256 = vmul.f32 %v2025, %v2192
        %v2257 = vmul.f32 %v2114, %v2193
        %v2258 = vmul.f32 %v2028, %v2194
        %v2259 = vmul.f32 %v2117, %v2195
        %v2260 = vmul.f32 %v2030, %v2196
        %v2261 = vmul.f32 %v2119, %v2197
        %v2262 = vmul.f32 %v2033, %v2198
        %v2263 = vmul.f32 %v2122, %v2199
        %v2264 = vmul.f32 %v2035, %v2200
        %v2265 = vmul.f32 %v2124, %v2201
        %v2266 = vmul.f32 %v2038, %v2202
        %v2267 = vmul.f32 %v2127, %v2203
        %v2268 = vmul.f32 %v2040, %v2204
        %v2269 = vmul.f32 %v2129, %v2205
        %v2270 = vmul.f32 %v2043, %v2206
        %v2271 = vmul.f32 %v2132, %v2207
        %v2272 = vmul.f32 %v2045, %v2208
        %v2273 = vmul.f32 %v2134, %v2209
        %v2274 = vmul.f32 %v2048, %v2210
        %v2275 = vmul.f32 %v2137, %v2211
        %v2276 = vmul.f32 %v2050, %v2212
        %v2277 = vmul.f32 %v2139, %v2213
        %v2278 = vmul.f32 %v2053, %v2214
        %v2279 = vmul.f32 %v2142, %v2215
        %v2280 = vmul.f32 %v2055, %v2216
        %v2281 = vmul.f32 %v2144, %v2217
        %v2282 = vmul.f32 %v2058, %v2218
        %v2283 = vmul.f32 %v2147, %v2219
        %v2284 = vmul.f32 %v2060, %v2220
        %v2285 = vmul.f32 %v2149, %v2221
        %v2286 = vmul.f32 %v2063, %v2222
        %v2287 = vmul.f32 %v2152, %v2223
        %v2288 = vmul.f32 %v2065, %v2224
        %v2289 = vmul.f32 %v2154, %v2225
        %v2290 = vmul.f32 %v2068, %v2226
        %v2291 = vmul.f32 %v2157, %v2227
        %v2292 = vmul.f32 %v2070, %v2228
        %v2293 = vmul.f32 %v2159, %v2229
        %v2294 = vmul.f32 %v2073, %v2230
        %v2295 = vmul.f32 %v2162, %v2231
        %v2296 = vmul.f32 %v2075, %v2232
        %v2297 = vmul.f32 %v2164, %v2233
        %v2298 = vmul.f32 %v2078, %v2234
        %v2299 = vmul.f32 %v2167, %v2235
        %v2300 = vmul.f32 %v2080, %v2236
        %v2301 = vmul.f32 %v2169, %v2237
        %v2302 = vmul.f32 %v2083, %v2238
        %v2303 = vmul.f32 %v2172, %v2239
        %v2304 = vmul.f32 %v2085, %v2240
        %v2305 = vmul.f32 %v2174, %v2241
        %v2306 = vmul.f32 %v2088, %v2242
        %v2307 = vmul.f32 %v2177, %v2243
        %v2308 = vmul.f32 %v2090, %v2244
        %v2309 = vmul.f32 %v2179, %v2245
        %v2310 = vmul.f32 %v2093, %v2246
        %v2311 = vmul.f32 %v2182, %v2247
        %v2312 = vmul.f32 %v2095, %v2248
        %v2313 = vmul.f32 %v2184, %v2249
        %v2314 = vmul.f32 %v2250, 0.044715
        %v2315 = vmul.f32 %v2251, 0.044715
        %v2316 = vmul.f32 %v2252, 0.044715
        %v2317 = vmul.f32 %v2253, 0.044715
        %v2318 = vmul.f32 %v2254, 0.044715
        %v2319 = vmul.f32 %v2255, 0.044715
        %v2320 = vmul.f32 %v2256, 0.044715
        %v2321 = vmul.f32 %v2257, 0.044715
        %v2322 = vmul.f32 %v2258, 0.044715
        %v2323 = vmul.f32 %v2259, 0.044715
        %v2324 = vmul.f32 %v2260, 0.044715
        %v2325 = vmul.f32 %v2261, 0.044715
        %v2326 = vmul.f32 %v2262, 0.044715
        %v2327 = vmul.f32 %v2263, 0.044715
        %v2328 = vmul.f32 %v2264, 0.044715
        %v2329 = vmul.f32 %v2265, 0.044715
        %v2330 = vmul.f32 %v2266, 0.044715
        %v2331 = vmul.f32 %v2267, 0.044715
        %v2332 = vmul.f32 %v2268, 0.044715
        %v2333 = vmul.f32 %v2269, 0.044715
        %v2334 = vmul.f32 %v2270, 0.044715
        %v2335 = vmul.f32 %v2271, 0.044715
        %v2336 = vmul.f32 %v2272, 0.044715
        %v2337 = vmul.f32 %v2273, 0.044715
        %v2338 = vmul.f32 %v2274, 0.044715
        %v2339 = vmul.f32 %v2275, 0.044715
        %v2340 = vmul.f32 %v2276, 0.044715
        %v2341 = vmul.f32 %v2277, 0.044715
        %v2342 = vmul.f32 %v2278, 0.044715
        %v2343 = vmul.f32 %v2279, 0.044715
        %v2344 = vmul.f32 %v2280, 0.044715
        %v2345 = vmul.f32 %v2281, 0.044715
        %v2346 = vmul.f32 %v2282, 0.044715
        %v2347 = vmul.f32 %v2283, 0.044715
        %v2348 = vmul.f32 %v2284, 0.044715
        %v2349 = vmul.f32 %v2285, 0.044715
        %v2350 = vmul.f32 %v2286, 0.044715
        %v2351 = vmul.f32 %v2287, 0.044715
        %v2352 = vmul.f32 %v2288, 0.044715
        %v2353 = vmul.f32 %v2289, 0.044715
        %v2354 = vmul.f32 %v2290, 0.044715
        %v2355 = vmul.f32 %v2291, 0.044715
        %v2356 = vmul.f32 %v2292, 0.044715
        %v2357 = vmul.f32 %v2293, 0.044715
        %v2358 = vmul.f32 %v2294, 0.044715
        %v2359 = vmul.f32 %v2295, 0.044715
        %v2360 = vmul.f32 %v2296, 0.044715
        %v2361 = vmul.f32 %v2297, 0.044715
        %v2362 = vmul.f32 %v2298, 0.044715
        %v2363 = vmul.f32 %v2299, 0.044715
        %v2364 = vmul.f32 %v2300, 0.044715
        %v2365 = vmul.f32 %v2301, 0.044715
        %v2366 = vmul.f32 %v2302, 0.044715
        %v2367 = vmul.f32 %v2303, 0.044715
        %v2368 = vmul.f32 %v2304, 0.044715
        %v2369 = vmul.f32 %v2305, 0.044715
        %v2370 = vmul.f32 %v2306, 0.044715
        %v2371 = vmul.f32 %v2307, 0.044715
        %v2372 = vmul.f32 %v2308, 0.044715
        %v2373 = vmul.f32 %v2309, 0.044715
        %v2374 = vmul.f32 %v2310, 0.044715
        %v2375 = vmul.f32 %v2311, 0.044715
        %v2376 = vmul.f32 %v2312, 0.044715
        %v2377 = vmul.f32 %v2313, 0.044715
        %v2378 = vadd.f32 %v2018, %v2314
        %v2379 = vadd.f32 %v2107, %v2315
        %v2380 = vadd.f32 %v2020, %v2316
        %v2381 = vadd.f32 %v2109, %v2317
        %v2382 = vadd.f32 %v2023, %v2318
        %v2383 = vadd.f32 %v2112, %v2319
        %v2384 = vadd.f32 %v2025, %v2320
        %v2385 = vadd.f32 %v2114, %v2321
        %v2386 = vadd.f32 %v2028, %v2322
        %v2387 = vadd.f32 %v2117, %v2323
        %v2388 = vadd.f32 %v2030, %v2324
        %v2389 = vadd.f32 %v2119, %v2325
        %v2390 = vadd.f32 %v2033, %v2326
        %v2391 = vadd.f32 %v2122, %v2327
        %v2392 = vadd.f32 %v2035, %v2328
        %v2393 = vadd.f32 %v2124, %v2329
        %v2394 = vadd.f32 %v2038, %v2330
        %v2395 = vadd.f32 %v2127, %v2331
        %v2396 = vadd.f32 %v2040, %v2332
        %v2397 = vadd.f32 %v2129, %v2333
        %v2398 = vadd.f32 %v2043, %v2334
        %v2399 = vadd.f32 %v2132, %v2335
        %v2400 = vadd.f32 %v2045, %v2336
        %v2401 = vadd.f32 %v2134, %v2337
        %v2402 = vadd.f32 %v2048, %v2338
        %v2403 = vadd.f32 %v2137, %v2339
        %v2404 = vadd.f32 %v2050, %v2340
        %v2405 = vadd.f32 %v2139, %v2341
        %v2406 = vadd.f32 %v2053, %v2342
        %v2407 = vadd.f32 %v2142, %v2343
        %v2408 = vadd.f32 %v2055, %v2344
        %v2409 = vadd.f32 %v2144, %v2345
        %v2410 = vadd.f32 %v2058, %v2346
        %v2411 = vadd.f32 %v2147, %v2347
        %v2412 = vadd.f32 %v2060, %v2348
        %v2413 = vadd.f32 %v2149, %v2349
        %v2414 = vadd.f32 %v2063, %v2350
        %v2415 = vadd.f32 %v2152, %v2351
        %v2416 = vadd.f32 %v2065, %v2352
        %v2417 = vadd.f32 %v2154, %v2353
        %v2418 = vadd.f32 %v2068, %v2354
        %v2419 = vadd.f32 %v2157, %v2355
        %v2420 = vadd.f32 %v2070, %v2356
        %v2421 = vadd.f32 %v2159, %v2357
        %v2422 = vadd.f32 %v2073, %v2358
        %v2423 = vadd.f32 %v2162, %v2359
        %v2424 = vadd.f32 %v2075, %v2360
        %v2425 = vadd.f32 %v2164, %v2361
        %v2426 = vadd.f32 %v2078, %v2362
        %v2427 = vadd.f32 %v2167, %v2363
        %v2428 = vadd.f32 %v2080, %v2364
        %v2429 = vadd.f32 %v2169, %v2365
        %v2430 = vadd.f32 %v2083, %v2366
        %v2431 = vadd.f32 %v2172, %v2367
        %v2432 = vadd.f32 %v2085, %v2368
        %v2433 = vadd.f32 %v2174, %v2369
        %v2434 = vadd.f32 %v2088, %v2370
        %v2435 = vadd.f32 %v2177, %v2371
        %v2436 = vadd.f32 %v2090, %v2372
        %v2437 = vadd.f32 %v2179, %v2373
        %v2438 = vadd.f32 %v2093, %v2374
        %v2439 = vadd.f32 %v2182, %v2375
        %v2440 = vadd.f32 %v2095, %v2376
        %v2441 = vadd.f32 %v2184, %v2377
        %v2442 = vmul.f32 %v2378, 0.7978846
        %v2443 = vmul.f32 %v2379, 0.7978846
        %v2444 = vmul.f32 %v2380, 0.7978846
        %v2445 = vmul.f32 %v2381, 0.7978846
        %v2446 = vmul.f32 %v2382, 0.7978846
        %v2447 = vmul.f32 %v2383, 0.7978846
        %v2448 = vmul.f32 %v2384, 0.7978846
        %v2449 = vmul.f32 %v2385, 0.7978846
        %v2450 = vmul.f32 %v2386, 0.7978846
        %v2451 = vmul.f32 %v2387, 0.7978846
        %v2452 = vmul.f32 %v2388, 0.7978846
        %v2453 = vmul.f32 %v2389, 0.7978846
        %v2454 = vmul.f32 %v2390, 0.7978846
        %v2455 = vmul.f32 %v2391, 0.7978846
        %v2456 = vmul.f32 %v2392, 0.7978846
        %v2457 = vmul.f32 %v2393, 0.7978846
        %v2458 = vmul.f32 %v2394, 0.7978846
        %v2459 = vmul.f32 %v2395, 0.7978846
        %v2460 = vmul.f32 %v2396, 0.7978846
        %v2461 = vmul.f32 %v2397, 0.7978846
        %v2462 = vmul.f32 %v2398, 0.7978846
        %v2463 = vmul.f32 %v2399, 0.7978846
        %v2464 = vmul.f32 %v2400, 0.7978846
        %v2465 = vmul.f32 %v2401, 0.7978846
        %v2466 = vmul.f32 %v2402, 0.7978846
        %v2467 = vmul.f32 %v2403, 0.7978846
        %v2468 = vmul.f32 %v2404, 0.7978846
        %v2469 = vmul.f32 %v2405, 0.7978846
        %v2470 = vmul.f32 %v2406, 0.7978846
        %v2471 = vmul.f32 %v2407, 0.7978846
        %v2472 = vmul.f32 %v2408, 0.7978846
        %v2473 = vmul.f32 %v2409, 0.7978846
        %v2474 = vmul.f32 %v2410, 0.7978846
        %v2475 = vmul.f32 %v2411, 0.7978846
        %v2476 = vmul.f32 %v2412, 0.7978846
        %v2477 = vmul.f32 %v2413, 0.7978846
        %v2478 = vmul.f32 %v2414, 0.7978846
        %v2479 = vmul.f32 %v2415, 0.7978846
        %v2480 = vmul.f32 %v2416, 0.7978846
        %v2481 = vmul.f32 %v2417, 0.7978846
        %v2482 = vmul.f32 %v2418, 0.7978846
        %v2483 = vmul.f32 %v2419, 0.7978846
        %v2484 = vmul.f32 %v2420, 0.7978846
        %v2485 = vmul.f32 %v2421, 0.7978846
        %v2486 = vmul.f32 %v2422, 0.7978846
        %v2487 = vmul.f32 %v2423, 0.7978846
        %v2488 = vmul.f32 %v2424, 0.7978846
        %v2489 = vmul.f32 %v2425, 0.7978846
        %v2490 = vmul.f32 %v2426, 0.7978846
        %v2491 = vmul.f32 %v2427, 0.7978846
        %v2492 = vmul.f32 %v2428, 0.7978846
        %v2493 = vmul.f32 %v2429, 0.7978846
        %v2494 = vmul.f32 %v2430, 0.7978846
        %v2495 = vmul.f32 %v2431, 0.7978846
        %v2496 = vmul.f32 %v2432, 0.7978846
        %v2497 = vmul.f32 %v2433, 0.7978846
        %v2498 = vmul.f32 %v2434, 0.7978846
        %v2499 = vmul.f32 %v2435, 0.7978846
        %v2500 = vmul.f32 %v2436, 0.7978846
        %v2501 = vmul.f32 %v2437, 0.7978846
        %v2502 = vmul.f32 %v2438, 0.7978846
        %v2503 = vmul.f32 %v2439, 0.7978846
        %v2504 = vmul.f32 %v2440, 0.7978846
        %v2505 = vmul.f32 %v2441, 0.7978846
        %v2506 = vtanh.pop %v2442
        %v2507 = vtanh.pop %v2443
        %v2508 = vtanh.pop %v2444
        %v2509 = vtanh.pop %v2445
        %v2510 = vtanh.pop %v2446
        %v2511 = vtanh.pop %v2447
        %v2512 = vtanh.pop %v2448
        %v2513 = vtanh.pop %v2449
        %v2514 = vtanh.pop %v2450
        %v2515 = vtanh.pop %v2451
        %v2516 = vtanh.pop %v2452
        %v2517 = vtanh.pop %v2453
        %v2518 = vtanh.pop %v2454
        %v2519 = vtanh.pop %v2455
        %v2520 = vtanh.pop %v2456
        %v2521 = vtanh.pop %v2457
        %v2522 = vtanh.pop %v2458
        %v2523 = vtanh.pop %v2459
        %v2524 = vtanh.pop %v2460
        %v2525 = vtanh.pop %v2461
        %v2526 = vtanh.pop %v2462
        %v2527 = vtanh.pop %v2463
        %v2528 = vtanh.pop %v2464
        %v2529 = vtanh.pop %v2465
        %v2530 = vtanh.pop %v2466
        %v2531 = vtanh.pop %v2467
        %v2532 = vtanh.pop %v2468
        %v2533 = vtanh.pop %v2469
        %v2534 = vtanh.pop %v2470
        %v2535 = vtanh.pop %v2471
        %v2536 = vtanh.pop %v2472
        %v2537 = vtanh.pop %v2473
        %v2538 = vtanh.pop %v2474
        %v2539 = vtanh.pop %v2475
        %v2540 = vtanh.pop %v2476
        %v2541 = vtanh.pop %v2477
        %v2542 = vtanh.pop %v2478
        %v2543 = vtanh.pop %v2479
        %v2544 = vtanh.pop %v2480
        %v2545 = vtanh.pop %v2481
        %v2546 = vtanh.pop %v2482
        %v2547 = vtanh.pop %v2483
        %v2548 = vtanh.pop %v2484
        %v2549 = vtanh.pop %v2485
        %v2550 = vtanh.pop %v2486
        %v2551 = vtanh.pop %v2487
        %v2552 = vtanh.pop %v2488
        %v2553 = vtanh.pop %v2489
        %v2554 = vtanh.pop %v2490
        %v2555 = vtanh.pop %v2491
        %v2556 = vtanh.pop %v2492
        %v2557 = vtanh.pop %v2493
        %v2558 = vtanh.pop %v2494
        %v2559 = vtanh.pop %v2495
        %v2560 = vtanh.pop %v2496
        %v2561 = vtanh.pop %v2497
        %v2562 = vtanh.pop %v2498
        %v2563 = vtanh.pop %v2499
        %v2564 = vtanh.pop %v2500
        %v2565 = vtanh.pop %v2501
        %v2566 = vtanh.pop %v2502
        %v2567 = vtanh.pop %v2503
        %v2568 = vtanh.pop %v2504
        %v2569 = vtanh.pop %v2505
        %v2570 = vadd.f32 %v2506, 1.0
        %v2571 = vadd.f32 %v2507, 1.0
        %v2572 = vadd.f32 %v2508, 1.0
        %v2573 = vadd.f32 %v2509, 1.0
        %v2574 = vadd.f32 %v2510, 1.0
        %v2575 = vadd.f32 %v2511, 1.0
        %v2576 = vadd.f32 %v2512, 1.0
        %v2577 = vadd.f32 %v2513, 1.0
        %v2578 = vadd.f32 %v2514, 1.0
        %v2579 = vadd.f32 %v2515, 1.0
        %v2580 = vadd.f32 %v2516, 1.0
        %v2581 = vadd.f32 %v2517, 1.0
        %v2582 = vadd.f32 %v2518, 1.0
        %v2583 = vadd.f32 %v2519, 1.0
        %v2584 = vadd.f32 %v2520, 1.0
        %v2585 = vadd.f32 %v2521, 1.0
        %v2586 = vadd.f32 %v2522, 1.0
        %v2587 = vadd.f32 %v2523, 1.0
        %v2588 = vadd.f32 %v2524, 1.0
        %v2589 = vadd.f32 %v2525, 1.0
        %v2590 = vadd.f32 %v2526, 1.0
        %v2591 = vadd.f32 %v2527, 1.0
        %v2592 = vadd.f32 %v2528, 1.0
        %v2593 = vadd.f32 %v2529, 1.0
        %v2594 = vadd.f32 %v2530, 1.0
        %v2595 = vadd.f32 %v2531, 1.0
        %v2596 = vadd.f32 %v2532, 1.0
        %v2597 = vadd.f32 %v2533, 1.0
        %v2598 = vadd.f32 %v2534, 1.0
        %v2599 = vadd.f32 %v2535, 1.0
        %v2600 = vadd.f32 %v2536, 1.0
        %v2601 = vadd.f32 %v2537, 1.0
        %v2602 = vadd.f32 %v2538, 1.0
        %v2603 = vadd.f32 %v2539, 1.0
        %v2604 = vadd.f32 %v2540, 1.0
        %v2605 = vadd.f32 %v2541, 1.0
        %v2606 = vadd.f32 %v2542, 1.0
        %v2607 = vadd.f32 %v2543, 1.0
        %v2608 = vadd.f32 %v2544, 1.0
        %v2609 = vadd.f32 %v2545, 1.0
        %v2610 = vadd.f32 %v2546, 1.0
        %v2611 = vadd.f32 %v2547, 1.0
        %v2612 = vadd.f32 %v2548, 1.0
        %v2613 = vadd.f32 %v2549, 1.0
        %v2614 = vadd.f32 %v2550, 1.0
        %v2615 = vadd.f32 %v2551, 1.0
        %v2616 = vadd.f32 %v2552, 1.0
        %v2617 = vadd.f32 %v2553, 1.0
        %v2618 = vadd.f32 %v2554, 1.0
        %v2619 = vadd.f32 %v2555, 1.0
        %v2620 = vadd.f32 %v2556, 1.0
        %v2621 = vadd.f32 %v2557, 1.0
        %v2622 = vadd.f32 %v2558, 1.0
        %v2623 = vadd.f32 %v2559, 1.0
        %v2624 = vadd.f32 %v2560, 1.0
        %v2625 = vadd.f32 %v2561, 1.0
        %v2626 = vadd.f32 %v2562, 1.0
        %v2627 = vadd.f32 %v2563, 1.0
        %v2628 = vadd.f32 %v2564, 1.0
        %v2629 = vadd.f32 %v2565, 1.0
        %v2630 = vadd.f32 %v2566, 1.0
        %v2631 = vadd.f32 %v2567, 1.0
        %v2632 = vadd.f32 %v2568, 1.0
        %v2633 = vadd.f32 %v2569, 1.0
        %v2634 = vmul.f32 %v2570, 0.5
        %v2635 = vmul.f32 %v2571, 0.5
        %v2636 = vmul.f32 %v2572, 0.5
        %v2637 = vmul.f32 %v2573, 0.5
        %v2638 = vmul.f32 %v2574, 0.5
        %v2639 = vmul.f32 %v2575, 0.5
        %v2640 = vmul.f32 %v2576, 0.5
        %v2641 = vmul.f32 %v2577, 0.5
        %v2642 = vmul.f32 %v2578, 0.5
        %v2643 = vmul.f32 %v2579, 0.5
        %v2644 = vmul.f32 %v2580, 0.5
        %v2645 = vmul.f32 %v2581, 0.5
        %v2646 = vmul.f32 %v2582, 0.5
        %v2647 = vmul.f32 %v2583, 0.5
        %v2648 = vmul.f32 %v2584, 0.5
        %v2649 = vmul.f32 %v2585, 0.5
        %v2650 = vmul.f32 %v2586, 0.5
        %v2651 = vmul.f32 %v2587, 0.5
        %v2652 = vmul.f32 %v2588, 0.5
        %v2653 = vmul.f32 %v2589, 0.5
        %v2654 = vmul.f32 %v2590, 0.5
        %v2655 = vmul.f32 %v2591, 0.5
        %v2656 = vmul.f32 %v2592, 0.5
        %v2657 = vmul.f32 %v2593, 0.5
        %v2658 = vmul.f32 %v2594, 0.5
        %v2659 = vmul.f32 %v2595, 0.5
        %v2660 = vmul.f32 %v2596, 0.5
        %v2661 = vmul.f32 %v2597, 0.5
        %v2662 = vmul.f32 %v2598, 0.5
        %v2663 = vmul.f32 %v2599, 0.5
        %v2664 = vmul.f32 %v2600, 0.5
        %v2665 = vmul.f32 %v2601, 0.5
        %v2666 = vmul.f32 %v2602, 0.5
        %v2667 = vmul.f32 %v2603, 0.5
        %v2668 = vmul.f32 %v2604, 0.5
        %v2669 = vmul.f32 %v2605, 0.5
        %v2670 = vmul.f32 %v2606, 0.5
        %v2671 = vmul.f32 %v2607, 0.5
        %v2672 = vmul.f32 %v2608, 0.5
        %v2673 = vmul.f32 %v2609, 0.5
        %v2674 = vmul.f32 %v2610, 0.5
        %v2675 = vmul.f32 %v2611, 0.5
        %v2676 = vmul.f32 %v2612, 0.5
        %v2677 = vmul.f32 %v2613, 0.5
        %v2678 = vmul.f32 %v2614, 0.5
        %v2679 = vmul.f32 %v2615, 0.5
        %v2680 = vmul.f32 %v2616, 0.5
        %v2681 = vmul.f32 %v2617, 0.5
        %v2682 = vmul.f32 %v2618, 0.5
        %v2683 = vmul.f32 %v2619, 0.5
        %v2684 = vmul.f32 %v2620, 0.5
        %v2685 = vmul.f32 %v2621, 0.5
        %v2686 = vmul.f32 %v2622, 0.5
        %v2687 = vmul.f32 %v2623, 0.5
        %v2688 = vmul.f32 %v2624, 0.5
        %v2689 = vmul.f32 %v2625, 0.5
        %v2690 = vmul.f32 %v2626, 0.5
        %v2691 = vmul.f32 %v2627, 0.5
        %v2692 = vmul.f32 %v2628, 0.5
        %v2693 = vmul.f32 %v2629, 0.5
        %v2694 = vmul.f32 %v2630, 0.5
        %v2695 = vmul.f32 %v2631, 0.5
        %v2696 = vmul.f32 %v2632, 0.5
        %v2697 = vmul.f32 %v2633, 0.5
        %v2698 = vmul.f32 %v2018, %v2634
        %v2699 = vmul.f32 %v2107, %v2635
        %v2700 = vmul.f32 %v2020, %v2636
        %v2701 = vmul.f32 %v2109, %v2637
        %v2702 = vmul.f32 %v2023, %v2638
        %v2703 = vmul.f32 %v2112, %v2639
        %v2704 = vmul.f32 %v2025, %v2640
        %v2705 = vmul.f32 %v2114, %v2641
        %v2706 = vmul.f32 %v2028, %v2642
        %v2707 = vmul.f32 %v2117, %v2643
        %v2708 = vmul.f32 %v2030, %v2644
        %v2709 = vmul.f32 %v2119, %v2645
        %v2710 = vmul.f32 %v2033, %v2646
        %v2711 = vmul.f32 %v2122, %v2647
        %v2712 = vmul.f32 %v2035, %v2648
        %v2713 = vmul.f32 %v2124, %v2649
        %v2714 = vmul.f32 %v2038, %v2650
        %v2715 = vmul.f32 %v2127, %v2651
        %v2716 = vmul.f32 %v2040, %v2652
        %v2717 = vmul.f32 %v2129, %v2653
        %v2718 = vmul.f32 %v2043, %v2654
        %v2719 = vmul.f32 %v2132, %v2655
        %v2720 = vmul.f32 %v2045, %v2656
        %v2721 = vmul.f32 %v2134, %v2657
        %v2722 = vmul.f32 %v2048, %v2658
        %v2723 = vmul.f32 %v2137, %v2659
        %v2724 = vmul.f32 %v2050, %v2660
        %v2725 = vmul.f32 %v2139, %v2661
        %v2726 = vmul.f32 %v2053, %v2662
        %v2727 = vmul.f32 %v2142, %v2663
        %v2728 = vmul.f32 %v2055, %v2664
        %v2729 = vmul.f32 %v2144, %v2665
        %v2730 = vmul.f32 %v2058, %v2666
        %v2731 = vmul.f32 %v2147, %v2667
        %v2732 = vmul.f32 %v2060, %v2668
        %v2733 = vmul.f32 %v2149, %v2669
        %v2734 = vmul.f32 %v2063, %v2670
        %v2735 = vmul.f32 %v2152, %v2671
        %v2736 = vmul.f32 %v2065, %v2672
        %v2737 = vmul.f32 %v2154, %v2673
        %v2738 = vmul.f32 %v2068, %v2674
        %v2739 = vmul.f32 %v2157, %v2675
        %v2740 = vmul.f32 %v2070, %v2676
        %v2741 = vmul.f32 %v2159, %v2677
        %v2742 = vmul.f32 %v2073, %v2678
        %v2743 = vmul.f32 %v2162, %v2679
        %v2744 = vmul.f32 %v2075, %v2680
        %v2745 = vmul.f32 %v2164, %v2681
        %v2746 = vmul.f32 %v2078, %v2682
        %v2747 = vmul.f32 %v2167, %v2683
        %v2748 = vmul.f32 %v2080, %v2684
        %v2749 = vmul.f32 %v2169, %v2685
        %v2750 = vmul.f32 %v2083, %v2686
        %v2751 = vmul.f32 %v2172, %v2687
        %v2752 = vmul.f32 %v2085, %v2688
        %v2753 = vmul.f32 %v2174, %v2689
        %v2754 = vmul.f32 %v2088, %v2690
        %v2755 = vmul.f32 %v2177, %v2691
        %v2756 = vmul.f32 %v2090, %v2692
        %v2757 = vmul.f32 %v2179, %v2693
        %v2758 = vmul.f32 %v2093, %v2694
        %v2759 = vmul.f32 %v2182, %v2695
        %v2760 = vmul.f32 %v2095, %v2696
        %v2761 = vmul.f32 %v2184, %v2697
        %v2762 = vpack.c.bf16 %v2700, %v2698
        %v2763 = vpack.c.bf16 %v2701, %v2699
        %v2764 = vpack.c.bf16 %v2704, %v2702
        %v2765 = vpack.c.bf16 %v2705, %v2703
        %v2766 = vpack.c.bf16 %v2708, %v2706
        %v2767 = vpack.c.bf16 %v2709, %v2707
        %v2768 = vpack.c.bf16 %v2712, %v2710
        %v2769 = vpack.c.bf16 %v2713, %v2711
        %v2770 = vpack.c.bf16 %v2716, %v2714
        %v2771 = vpack.c.bf16 %v2717, %v2715
        %v2772 = vpack.c.bf16 %v2720, %v2718
        %v2773 = vpack.c.bf16 %v2721, %v2719
        %v2774 = vpack.c.bf16 %v2724, %v2722
        %v2775 = vpack.c.bf16 %v2725, %v2723
        %v2776 = vpack.c.bf16 %v2728, %v2726
        %v2777 = vpack.c.bf16 %v2729, %v2727
        %v2778 = vpack.c.bf16 %v2732, %v2730
        %v2779 = vpack.c.bf16 %v2733, %v2731
        %v2780 = vpack.c.bf16 %v2736, %v2734
        %v2781 = vpack.c.bf16 %v2737, %v2735
        %v2782 = vpack.c.bf16 %v2740, %v2738
        %v2783 = vpack.c.bf16 %v2741, %v2739
        %v2784 = vpack.c.bf16 %v2744, %v2742
        %v2785 = vpack.c.bf16 %v2745, %v2743
        %v2786 = vpack.c.bf16 %v2748, %v2746
        %v2787 = vpack.c.bf16 %v2749, %v2747
        %v2788 = vpack.c.bf16 %v2752, %v2750
        %v2789 = vpack.c.bf16 %v2753, %v2751
        %v2790 = vpack.c.bf16 %v2756, %v2754
        %v2791 = vpack.c.bf16 %v2757, %v2755
        %v2792 = vpack.c.bf16 %v2760, %v2758
        %v2793 = vpack.c.bf16 %v2761, %v2759
        %v2794 = vld [vmem:[%s7] sm:$0xf]
        %v2795 = vld [vmem:[%s7 + $0x4] sm:$0xf]
        %v2796 = vld [vmem:[%s7 + $0x8] sm:$0xf]
        %v2797 = vld [vmem:[%s7 + $0xc] sm:$0xf]
        %v2798 = vld [vmem:[%s7 + $0x10] sm:$0xf]
        %v2799 = vld [vmem:[%s7 + $0x14] sm:$0xf]
        %v2800 = vld [vmem:[%s7 + $0x18] sm:$0xf]
        %v2801 = vld [vmem:[%s7 + $0x1c] sm:$0xf]
        %v2802 = vld [vmem:[%s7 + $0x20] sm:$0xf]
        %v2803 = vld [vmem:[%s7 + $0x24] sm:$0xf]
        %v2804 = vld [vmem:[%s7 + $0x28] sm:$0xf]
        %v2805 = vld [vmem:[%s7 + $0x2c] sm:$0xf]
        %v2806 = vld [vmem:[%s7 + $0x30] sm:$0xf]
        %v2807 = vld [vmem:[%s7 + $0x34] sm:$0xf]
        %v2808 = vld [vmem:[%s7 + $0x38] sm:$0xf]
        %v2809 = vld [vmem:[%s7 + $0x3c] sm:$0xf]
        %v2810 = vld [vmem:[%s7 + $0x40] sm:$0xf]
        %v2811 = vld [vmem:[%s7 + $0x44] sm:$0xf]
        %v2812 = vld [vmem:[%s7 + $0x48] sm:$0xf]
        %v2813 = vld [vmem:[%s7 + $0x4c] sm:$0xf]
        %v2814 = vld [vmem:[%s7 + $0x50] sm:$0xf]
        %v2815 = vld [vmem:[%s7 + $0x54] sm:$0xf]
        %v2816 = vld [vmem:[%s7 + $0x58] sm:$0xf]
        %v2817 = vld [vmem:[%s7 + $0x5c] sm:$0xf]
        %v2818 = vld [vmem:[%s7 + $0x60] sm:$0xf]
        %v2819 = vld [vmem:[%s7 + $0x64] sm:$0xf]
        %v2820 = vld [vmem:[%s7 + $0x68] sm:$0xf]
        %v2821 = vld [vmem:[%s7 + $0x6c] sm:$0xf]
        %v2822 = vld [vmem:[%s7 + $0x70] sm:$0xf]
        %v2823 = vld [vmem:[%s7 + $0x74] sm:$0xf]
        %v2824 = vld [vmem:[%s7 + $0x78] sm:$0xf]
        %v2825 = vld [vmem:[%s7 + $0x7c] sm:$0xf]
        %v2826 = vld [vmem:[%s8] sm:$0x1]
        %v2828 = vperm.slane %v2826, 0
        %v2862 = vunpack.c.l.b16 %v2794
        %v2863 = vunpack.c.l.b16 %v2795
        %v2864 = vunpack.c.l.b16 %v2796
        %v2865 = vunpack.c.l.b16 %v2797
        %v2866 = vunpack.c.l.b16 %v2798
        %v2867 = vunpack.c.l.b16 %v2799
        %v2868 = vunpack.c.l.b16 %v2800
        %v2869 = vunpack.c.l.b16 %v2801
        %v2870 = vunpack.c.l.b16 %v2802
        %v2871 = vunpack.c.l.b16 %v2803
        %v2872 = vunpack.c.l.b16 %v2804
        %v2873 = vunpack.c.l.b16 %v2805
        %v2874 = vunpack.c.l.b16 %v2806
        %v2875 = vunpack.c.l.b16 %v2807
        %v2876 = vunpack.c.l.b16 %v2808
        %v2877 = vunpack.c.l.b16 %v2809
        %v2878 = vunpack.c.l.b16 %v2810
        %v2879 = vunpack.c.l.b16 %v2811
        %v2880 = vunpack.c.l.b16 %v2812
        %v2881 = vunpack.c.l.b16 %v2813
        %v2882 = vunpack.c.l.b16 %v2814
        %v2883 = vunpack.c.l.b16 %v2815
        %v2884 = vunpack.c.l.b16 %v2816
        %v2885 = vunpack.c.l.b16 %v2817
        %v2886 = vunpack.c.l.b16 %v2818
        %v2887 = vunpack.c.l.b16 %v2819
        %v2888 = vunpack.c.l.b16 %v2820
        %v2889 = vunpack.c.l.b16 %v2821
        %v2890 = vunpack.c.l.b16 %v2822
        %v2891 = vunpack.c.l.b16 %v2823
        %v2892 = vunpack.c.l.b16 %v2824
        %v2893 = vunpack.c.l.b16 %v2825
        %v2894 = vpack.c.b16 %v2863, %v2862
        %v2895 = vpack.c.b16 %v2865, %v2864
        %v2896 = vpack.c.b16 %v2867, %v2866
        %v2897 = vpack.c.b16 %v2869, %v2868
        %v2898 = vpack.c.b16 %v2871, %v2870
        %v2899 = vpack.c.b16 %v2873, %v2872
        %v2900 = vpack.c.b16 %v2875, %v2874
        %v2901 = vpack.c.b16 %v2877, %v2876
        %v2902 = vpack.c.b16 %v2879, %v2878
        %v2903 = vpack.c.b16 %v2881, %v2880
        %v2904 = vpack.c.b16 %v2883, %v2882
        %v2905 = vpack.c.b16 %v2885, %v2884
        %v2906 = vpack.c.b16 %v2887, %v2886
        %v2907 = vpack.c.b16 %v2889, %v2888
        %v2908 = vpack.c.b16 %v2891, %v2890
        %v2909 = vpack.c.b16 %v2893, %v2892
        %2926 = vmatpush.bf16.msra.mxu0 %v2901
        %2927 = vmatpush.bf16.msra.mxu0 %v2900
        %2928 = vmatpush.bf16.msra.mxu0 %v2899
        %2929 = vmatpush.bf16.msra.mxu0 %v2898
        %2930 = vmatpush.bf16.msra.mxu0 %v2897
        %2931 = vmatpush.bf16.msra.mxu0 %v2896
        %2932 = vmatpush.bf16.msra.mxu0 %v2895
        %2933 = vmatpush.bf16.msra.mxu0 %v2894
        %2934 = vmatmul.bf16.gmra.mxu0 %v2762
        %v2935 = vpop.f32.mrf.mxu0
        %v2936 = vadd.f32 %v2828, %v2935
        %v2937 = vpop.f32.mrf.mxu0
        %v2938 = vadd.f32 %v2828, %v2937
        %2939 = vmatmul.bf16.gmra.mxu0 %v2764
        %v2940 = vpop.f32.mrf.mxu0
        %v2941 = vadd.f32 %v2828, %v2940
        %v2942 = vpop.f32.mrf.mxu0
        %v2943 = vadd.f32 %v2828, %v2942
        %2944 = vmatmul.bf16.gmra.mxu0 %v2766
        %v2945 = vpop.f32.mrf.mxu0
        %v2946 = vadd.f32 %v2828, %v2945
        %v2947 = vpop.f32.mrf.mxu0
        %v2948 = vadd.f32 %v2828, %v2947
        %2949 = vmatmul.bf16.gmra.mxu0 %v2768
        %v2950 = vpop.f32.mrf.mxu0
        %v2951 = vadd.f32 %v2828, %v2950
        %v2952 = vpop.f32.mrf.mxu0
        %v2953 = vadd.f32 %v2828, %v2952
        %2954 = vmatmul.bf16.gmra.mxu0 %v2770
        %v2955 = vpop.f32.mrf.mxu0
        %v2956 = vadd.f32 %v2828, %v2955
        %v2957 = vpop.f32.mrf.mxu0
        %v2958 = vadd.f32 %v2828, %v2957
        %2959 = vmatmul.bf16.gmra.mxu0 %v2772
        %v2960 = vpop.f32.mrf.mxu0
        %v2961 = vadd.f32 %v2828, %v2960
        %v2962 = vpop.f32.mrf.mxu0
        %v2963 = vadd.f32 %v2828, %v2962
        %2964 = vmatmul.bf16.gmra.mxu0 %v2774
        %v2965 = vpop.f32.mrf.mxu0
        %v2966 = vadd.f32 %v2828, %v2965
        %v2967 = vpop.f32.mrf.mxu0
        %v2968 = vadd.f32 %v2828, %v2967
        %2969 = vmatmul.bf16.gmra.mxu0 %v2776
        %v2970 = vpop.f32.mrf.mxu0
        %v2971 = vadd.f32 %v2828, %v2970
        %v2972 = vpop.f32.mrf.mxu0
        %v2973 = vadd.f32 %v2828, %v2972
        %2974 = vmatmul.bf16.gmra.mxu0 %v2778
        %v2975 = vpop.f32.mrf.mxu0
        %v2976 = vadd.f32 %v2828, %v2975
        %v2977 = vpop.f32.mrf.mxu0
        %v2978 = vadd.f32 %v2828, %v2977
        %2979 = vmatmul.bf16.gmra.mxu0 %v2780
        %v2980 = vpop.f32.mrf.mxu0
        %v2981 = vadd.f32 %v2828, %v2980
        %v2982 = vpop.f32.mrf.mxu0
        %v2983 = vadd.f32 %v2828, %v2982
        %2984 = vmatmul.bf16.gmra.mxu0 %v2782
        %v2985 = vpop.f32.mrf.mxu0
        %v2986 = vadd.f32 %v2828, %v2985
        %v2987 = vpop.f32.mrf.mxu0
        %v2988 = vadd.f32 %v2828, %v2987
        %2989 = vmatmul.bf16.gmra.mxu0 %v2784
        %v2990 = vpop.f32.mrf.mxu0
        %v2991 = vadd.f32 %v2828, %v2990
        %v2992 = vpop.f32.mrf.mxu0
        %v2993 = vadd.f32 %v2828, %v2992
        %2994 = vmatmul.bf16.gmra.mxu0 %v2786
        %v2995 = vpop.f32.mrf.mxu0
        %v2996 = vadd.f32 %v2828, %v2995
        %v2997 = vpop.f32.mrf.mxu0
        %v2998 = vadd.f32 %v2828, %v2997
        %2999 = vmatmul.bf16.gmra.mxu0 %v2788
        %v3000 = vpop.f32.mrf.mxu0
        %v3001 = vadd.f32 %v2828, %v3000
        %v3002 = vpop.f32.mrf.mxu0
        %v3003 = vadd.f32 %v2828, %v3002
        %3004 = vmatmul.bf16.gmra.mxu0 %v2790
        %v3005 = vpop.f32.mrf.mxu0
        %v3006 = vadd.f32 %v2828, %v3005
        %v3007 = vpop.f32.mrf.mxu0
        %v3008 = vadd.f32 %v2828, %v3007
        %3009 = vmatmul.bf16.gmra.mxu0 %v2792
        %v3010 = vpop.f32.mrf.mxu0
        %v3011 = vadd.f32 %v2828, %v3010
        %v3012 = vpop.f32.mrf.mxu0
        %v3013 = vadd.f32 %v2828, %v3012
        %3014 = vdwg.mxu0
        %3015 = vmatpush.bf16.msra.mxu0 %v2909
        %3016 = vmatpush.bf16.msra.mxu0 %v2908
        %3017 = vmatpush.bf16.msra.mxu0 %v2907
        %3018 = vmatpush.bf16.msra.mxu0 %v2906
        %3019 = vmatpush.bf16.msra.mxu0 %v2905
        %3020 = vmatpush.bf16.msra.mxu0 %v2904
        %3021 = vmatpush.bf16.msra.mxu0 %v2903
        %3022 = vmatpush.bf16.msra.mxu0 %v2902
        %3023 = vmatmul.bf16.gmra.mxu0 %v2763
        %v3024 = vpop.f32.mrf.mxu0
        %v3025 = vadd.f32 %v2936, %v3024
        %v3026 = vpop.f32.mrf.mxu0
        %v3027 = vadd.f32 %v2938, %v3026
        %3028 = vmatmul.bf16.gmra.mxu0 %v2765
        %v3029 = vpop.f32.mrf.mxu0
        %v3030 = vadd.f32 %v2941, %v3029
        %v3031 = vpop.f32.mrf.mxu0
        %v3032 = vadd.f32 %v2943, %v3031
        %3033 = vmatmul.bf16.gmra.mxu0 %v2767
        %v3034 = vpop.f32.mrf.mxu0
        %v3035 = vadd.f32 %v2946, %v3034
        %v3036 = vpop.f32.mrf.mxu0
        %v3037 = vadd.f32 %v2948, %v3036
        %3038 = vmatmul.bf16.gmra.mxu0 %v2769
        %v3039 = vpop.f32.mrf.mxu0
        %v3040 = vadd.f32 %v2951, %v3039
        %v3041 = vpop.f32.mrf.mxu0
        %v3042 = vadd.f32 %v2953, %v3041
        %3043 = vmatmul.bf16.gmra.mxu0 %v2771
        %v3044 = vpop.f32.mrf.mxu0
        %v3045 = vadd.f32 %v2956, %v3044
        %v3046 = vpop.f32.mrf.mxu0
        %v3047 = vadd.f32 %v2958, %v3046
        %3048 = vmatmul.bf16.gmra.mxu0 %v2773
        %v3049 = vpop.f32.mrf.mxu0
        %v3050 = vadd.f32 %v2961, %v3049
        %v3051 = vpop.f32.mrf.mxu0
        %v3052 = vadd.f32 %v2963, %v3051
        %3053 = vmatmul.bf16.gmra.mxu0 %v2775
        %v3054 = vpop.f32.mrf.mxu0
        %v3055 = vadd.f32 %v2966, %v3054
        %v3056 = vpop.f32.mrf.mxu0
        %v3057 = vadd.f32 %v2968, %v3056
        %3058 = vmatmul.bf16.gmra.mxu0 %v2777
        %v3059 = vpop.f32.mrf.mxu0
        %v3060 = vadd.f32 %v2971, %v3059
        %v3061 = vpop.f32.mrf.mxu0
        %v3062 = vadd.f32 %v2973, %v3061
        %3063 = vmatmul.bf16.gmra.mxu0 %v2779
        %v3064 = vpop.f32.mrf.mxu0
        %v3065 = vadd.f32 %v2976, %v3064
        %v3066 = vpop.f32.mrf.mxu0
        %v3067 = vadd.f32 %v2978, %v3066
        %3068 = vmatmul.bf16.gmra.mxu0 %v2781
        %v3069 = vpop.f32.mrf.mxu0
        %v3070 = vadd.f32 %v2981, %v3069
        %v3071 = vpop.f32.mrf.mxu0
        %v3072 = vadd.f32 %v2983, %v3071
        %3073 = vmatmul.bf16.gmra.mxu0 %v2783
        %v3074 = vpop.f32.mrf.mxu0
        %v3075 = vadd.f32 %v2986, %v3074
        %v3076 = vpop.f32.mrf.mxu0
        %v3077 = vadd.f32 %v2988, %v3076
        %3078 = vmatmul.bf16.gmra.mxu0 %v2785
        %v3079 = vpop.f32.mrf.mxu0
        %v3080 = vadd.f32 %v2991, %v3079
        %v3081 = vpop.f32.mrf.mxu0
        %v3082 = vadd.f32 %v2993, %v3081
        %3083 = vmatmul.bf16.gmra.mxu0 %v2787
        %v3084 = vpop.f32.mrf.mxu0
        %v3085 = vadd.f32 %v2996, %v3084
        %v3086 = vpop.f32.mrf.mxu0
        %v3087 = vadd.f32 %v2998, %v3086
        %3088 = vmatmul.bf16.gmra.mxu0 %v2789
        %v3089 = vpop.f32.mrf.mxu0
        %v3090 = vadd.f32 %v3001, %v3089
        %v3091 = vpop.f32.mrf.mxu0
        %v3092 = vadd.f32 %v3003, %v3091
        %3093 = vmatmul.bf16.gmra.mxu0 %v2791
        %v3094 = vpop.f32.mrf.mxu0
        %v3095 = vadd.f32 %v3006, %v3094
        %v3096 = vpop.f32.mrf.mxu0
        %v3097 = vadd.f32 %v3008, %v3096
        %3098 = vmatmul.bf16.gmra.mxu0 %v2793
        %v3099 = vpop.f32.mrf.mxu0
        %v3100 = vadd.f32 %v3011, %v3099
        %v3101 = vpop.f32.mrf.mxu0
        %v3102 = vadd.f32 %v3013, %v3101
        %3103 = vdwg.mxu0
        %v3104 = vunpack.c.l.bf16 %v388
        %v3105 = vunpack.c.l.bf16 %v389
        %v3106 = vunpack.c.l.bf16 %v390
        %v3107 = vunpack.c.l.bf16 %v391
        %v3108 = vunpack.c.l.bf16 %v392
        %v3109 = vunpack.c.l.bf16 %v393
        %v3110 = vunpack.c.l.bf16 %v394
        %v3111 = vunpack.c.l.bf16 %v395
        %v3112 = vunpack.c.l.bf16 %v396
        %v3113 = vunpack.c.l.bf16 %v397
        %v3114 = vunpack.c.l.bf16 %v398
        %v3115 = vunpack.c.l.bf16 %v399
        %v3116 = vunpack.c.l.bf16 %v400
        %v3117 = vunpack.c.l.bf16 %v401
        %v3118 = vunpack.c.l.bf16 %v402
        %v3119 = vunpack.c.l.bf16 %v403
        %v3120 = vunpack.c.l.bf16 %v404
        %v3121 = vunpack.c.l.bf16 %v405
        %v3122 = vunpack.c.l.bf16 %v406
        %v3123 = vunpack.c.l.bf16 %v407
        %v3124 = vunpack.c.l.bf16 %v408
        %v3125 = vunpack.c.l.bf16 %v409
        %v3126 = vunpack.c.l.bf16 %v410
        %v3127 = vunpack.c.l.bf16 %v411
        %v3128 = vunpack.c.l.bf16 %v412
        %v3129 = vunpack.c.l.bf16 %v413
        %v3130 = vunpack.c.l.bf16 %v414
        %v3131 = vunpack.c.l.bf16 %v415
        %v3132 = vunpack.c.l.bf16 %v416
        %v3133 = vunpack.c.l.bf16 %v417
        %v3134 = vunpack.c.l.bf16 %v418
        %v3135 = vunpack.c.l.bf16 %v419
        %v3136 = vadd.f32 %v3104, %v3025
        %v3137 = vadd.f32 %v3105, %v3027
        %v3138 = vadd.f32 %v3106, %v3030
        %v3139 = vadd.f32 %v3107, %v3032
        %v3140 = vadd.f32 %v3108, %v3035
        %v3141 = vadd.f32 %v3109, %v3037
        %v3142 = vadd.f32 %v3110, %v3040
        %v3143 = vadd.f32 %v3111, %v3042
        %v3144 = vadd.f32 %v3112, %v3045
        %v3145 = vadd.f32 %v3113, %v3047
        %v3146 = vadd.f32 %v3114, %v3050
        %v3147 = vadd.f32 %v3115, %v3052
        %v3148 = vadd.f32 %v3116, %v3055
        %v3149 = vadd.f32 %v3117, %v3057
        %v3150 = vadd.f32 %v3118, %v3060
        %v3151 = vadd.f32 %v3119, %v3062
        %v3152 = vadd.f32 %v3120, %v3065
        %v3153 = vadd.f32 %v3121, %v3067
        %v3154 = vadd.f32 %v3122, %v3070
        %v3155 = vadd.f32 %v3123, %v3072
        %v3156 = vadd.f32 %v3124, %v3075
        %v3157 = vadd.f32 %v3125, %v3077
        %v3158 = vadd.f32 %v3126, %v3080
        %v3159 = vadd.f32 %v3127, %v3082
        %v3160 = vadd.f32 %v3128, %v3085
        %v3161 = vadd.f32 %v3129, %v3087
        %v3162 = vadd.f32 %v3130, %v3090
        %v3163 = vadd.f32 %v3131, %v3092
        %v3164 = vadd.f32 %v3132, %v3095
        %v3165 = vadd.f32 %v3133, %v3097
        %v3166 = vadd.f32 %v3134, %v3100
        %v3167 = vadd.f32 %v3135, %v3102
        %v3168 = vpack.c.bf16 %v3136, %v3136
        %v3169 = vpack.c.bf16 %v3137, %v3137
        %v3170 = vpack.c.bf16 %v3138, %v3138
        %v3171 = vpack.c.bf16 %v3139, %v3139
        %v3172 = vpack.c.bf16 %v3140, %v3140
        %v3173 = vpack.c.bf16 %v3141, %v3141
        %v3174 = vpack.c.bf16 %v3142, %v3142
        %v3175 = vpack.c.bf16 %v3143, %v3143
        %v3176 = vpack.c.bf16 %v3144, %v3144
        %v3177 = vpack.c.bf16 %v3145, %v3145
        %v3178 = vpack.c.bf16 %v3146, %v3146
        %v3179 = vpack.c.bf16 %v3147, %v3147
        %v3180 = vpack.c.bf16 %v3148, %v3148
        %v3181 = vpack.c.bf16 %v3149, %v3149
        %v3182 = vpack.c.bf16 %v3150, %v3150
        %v3183 = vpack.c.bf16 %v3151, %v3151
        %v3184 = vpack.c.bf16 %v3152, %v3152
        %v3185 = vpack.c.bf16 %v3153, %v3153
        %v3186 = vpack.c.bf16 %v3154, %v3154
        %v3187 = vpack.c.bf16 %v3155, %v3155
        %v3188 = vpack.c.bf16 %v3156, %v3156
        %v3189 = vpack.c.bf16 %v3157, %v3157
        %v3190 = vpack.c.bf16 %v3158, %v3158
        %v3191 = vpack.c.bf16 %v3159, %v3159
        %v3192 = vpack.c.bf16 %v3160, %v3160
        %v3193 = vpack.c.bf16 %v3161, %v3161
        %v3194 = vpack.c.bf16 %v3162, %v3162
        %v3195 = vpack.c.bf16 %v3163, %v3163
        %v3196 = vpack.c.bf16 %v3164, %v3164
        %v3197 = vpack.c.bf16 %v3165, %v3165
        %v3198 = vpack.c.bf16 %v3166, %v3166
        %v3199 = vpack.c.bf16 %v3167, %v3167
        %3200 = vst [vmem:[%s353] sm:$0xf] %v1778
        %3201 = vst [vmem:[%s353 + $0x8] sm:$0xf] %v1779
        %3202 = vst [vmem:[%s353 + $0x10] sm:$0xf] %v1780
        %3203 = vst [vmem:[%s353 + $0x18] sm:$0xf] %v1781
        %3204 = vst [vmem:[%s353 + $0x20] sm:$0xf] %v1782
        %3205 = vst [vmem:[%s353 + $0x28] sm:$0xf] %v1783
        %3206 = vst [vmem:[%s353 + $0x30] sm:$0xf] %v1784
        %3207 = vst [vmem:[%s353 + $0x38] sm:$0xf] %v1785
        %3208 = vst [vmem:[%s353 + $0x40] sm:$0xf] %v1786
        %3209 = vst [vmem:[%s353 + $0x48] sm:$0xf] %v1787
        %3210 = vst [vmem:[%s353 + $0x50] sm:$0xf] %v1788
        %3211 = vst [vmem:[%s353 + $0x58] sm:$0xf] %v1789
        %3212 = vst [vmem:[%s353 + $0x60] sm:$0xf] %v1790
        %3213 = vst [vmem:[%s353 + $0x68] sm:$0xf] %v1791
        %3214 = vst [vmem:[%s353 + $0x70] sm:$0xf] %v1792
        %3215 = vst [vmem:[%s353 + $0x78] sm:$0xf] %v1793
        %3216 = vst [vmem:[%s353 + $0x80] sm:$0xf] %v1794
        %3217 = vst [vmem:[%s353 + $0x88] sm:$0xf] %v1795
        %3218 = vst [vmem:[%s353 + $0x90] sm:$0xf] %v1796
        %3219 = vst [vmem:[%s353 + $0x98] sm:$0xf] %v1797
        %3220 = vst [vmem:[%s353 + $0xa0] sm:$0xf] %v1798
        %3221 = vst [vmem:[%s353 + $0xa8] sm:$0xf] %v1799
        %3222 = vst [vmem:[%s353 + $0xb0] sm:$0xf] %v1800
        %3223 = vst [vmem:[%s353 + $0xb8] sm:$0xf] %v1801
        %3224 = vst [vmem:[%s353 + $0xc0] sm:$0xf] %v1802
        %3225 = vst [vmem:[%s353 + $0xc8] sm:$0xf] %v1803
        %3226 = vst [vmem:[%s353 + $0xd0] sm:$0xf] %v1804
        %3227 = vst [vmem:[%s353 + $0xd8] sm:$0xf] %v1805
        %3228 = vst [vmem:[%s353 + $0xe0] sm:$0xf] %v1806
        %3229 = vst [vmem:[%s353 + $0xe8] sm:$0xf] %v1807
        %3230 = vst [vmem:[%s353 + $0xf0] sm:$0xf] %v1808
        %3231 = vst [vmem:[%s353 + $0xf8] sm:$0xf] %v1809
        %3232 = vst [vmem:[%s353 + $0x4] sm:$0xf] %v3168
        %3233 = vst [vmem:[%s353 + $0xc] sm:$0xf] %v3169
        %3234 = vst [vmem:[%s353 + $0x14] sm:$0xf] %v3170
        %3235 = vst [vmem:[%s353 + $0x1c] sm:$0xf] %v3171
        %3236 = vst [vmem:[%s353 + $0x24] sm:$0xf] %v3172
        %3237 = vst [vmem:[%s353 + $0x2c] sm:$0xf] %v3173
        %3238 = vst [vmem:[%s353 + $0x34] sm:$0xf] %v3174
        %3239 = vst [vmem:[%s353 + $0x3c] sm:$0xf] %v3175
        %3240 = vst [vmem:[%s353 + $0x44] sm:$0xf] %v3176
        %3241 = vst [vmem:[%s353 + $0x4c] sm:$0xf] %v3177
        %3242 = vst [vmem:[%s353 + $0x54] sm:$0xf] %v3178
        %3243 = vst [vmem:[%s353 + $0x5c] sm:$0xf] %v3179
        %3244 = vst [vmem:[%s353 + $0x64] sm:$0xf] %v3180
        %3245 = vst [vmem:[%s353 + $0x6c] sm:$0xf] %v3181
        %3246 = vst [vmem:[%s353 + $0x74] sm:$0xf] %v3182
        %3247 = vst [vmem:[%s353 + $0x7c] sm:$0xf] %v3183
        %3248 = vst [vmem:[%s353 + $0x84] sm:$0xf] %v3184
        %3249 = vst [vmem:[%s353 + $0x8c] sm:$0xf] %v3185
        %3250 = vst [vmem:[%s353 + $0x94] sm:$0xf] %v3186
        %3251 = vst [vmem:[%s353 + $0x9c] sm:$0xf] %v3187
        %3252 = vst [vmem:[%s353 + $0xa4] sm:$0xf] %v3188
        %3253 = vst [vmem:[%s353 + $0xac] sm:$0xf] %v3189
        %3254 = vst [vmem:[%s353 + $0xb4] sm:$0xf] %v3190
        %3255 = vst [vmem:[%s353 + $0xbc] sm:$0xf] %v3191
        %3256 = vst [vmem:[%s353 + $0xc4] sm:$0xf] %v3192
        %3257 = vst [vmem:[%s353 + $0xcc] sm:$0xf] %v3193
        %3258 = vst [vmem:[%s353 + $0xd4] sm:$0xf] %v3194
        %3259 = vst [vmem:[%s353 + $0xdc] sm:$0xf] %v3195
        %3260 = vst [vmem:[%s353 + $0xe4] sm:$0xf] %v3196
        %3261 = vst [vmem:[%s353 + $0xec] sm:$0xf] %v3197
        %3262 = vst [vmem:[%s353 + $0xf4] sm:$0xf] %v3198
        %3263 = vst [vmem:[%s353 + $0xfc] sm:$0xf] %v3199
        %s3264 = sand.u32 %s228, 1
        %s3265 = scalar_lea.sflag [#allocation4], %s3264
        %s3266 = sand.u32 %s228, 1
        %s3267 = smul.addr %s3266, 256
        %s3268 = scalar_lea.vmem [#allocation5], %s3267
        // Predicated region
        $region61: #{tpu_custom_call.1} parent=55 // pred_check
          %p3269 = pneg %p238
        $region62: #{tpu_custom_call.1} parent=55 // pred_check_branch
          %3271 = sbr.rel (%p3269) target = $region64
        $region63: #{tpu_custom_call.1} parent=55 // pred_region
          %s3272 = smul.u32 32, %s26
          %3274 = vsyncadd %s3265, 0
          %s3275 = smul.addr %s3272, 2
          %s3276 = smul.addr %s3275, 4
          %s3277 = scalar_lea.hbm %s9, %s3276
          %s3278 = sshll.u32 %s3268, 4
          %s3279 = int_to_ptr.vmem [resolvable:$true] %s3278
          %s3280 = sshll.u32 %s3277, 4
          %s3281 = int_to_ptr.hbm [resolvable:$true] %s3280
          %3286 = dma.vmem_to_hbm [thread:$0]  %s3279, 4096, %s3281, %s3265, 128, 128, 8
        $region64: #{tpu_custom_call.1} parent=55 // pred_fallthru
          _
      $region56: #{tpu_custom_call.1} parent=5 // pred_fallthru
        _
      %p3287 = scmp.le.s32.totalorder 2, %s21
      // Predicated region
      $region65: #{tpu_custom_call.1} parent=5 // pred_check
        %p3288 = pneg %p3287
      $region66: #{tpu_custom_call.1} parent=5 // pred_check_branch
        %3290 = sbr.rel (%p3288) target = $region68
      $region67: #{tpu_custom_call.1} parent=5 // pred_region
        %s3291 = ssub.s32 %s21, 2
        // Predicated region
        $region69: #{tpu_custom_call.1} parent=67 // pred_check
          %p3292 = pneg %p244
        $region70: #{tpu_custom_call.1} parent=67 // pred_check_branch
          %3294 = sbr.rel (%p3292) target = $region72
        $region71: #{tpu_custom_call.1} parent=67 // pred_region
          %s3295 = sand.u32 %s229, 1
          %s3296 = scalar_lea.sflag [#allocation4], %s3295
          %s3297 = sand.u32 %s229, 1
          %s3298 = smul.addr %s3297, 256
          %s3299 = scalar_lea.vmem [#allocation5], %s3298
          %3301 = dma.done %s3296, 4096
        $region72: #{tpu_custom_call.1} parent=67 // pred_fallthru
          _
      $region68: #{tpu_custom_call.1} parent=5 // pred_fallthru
        _
    $region6: #{tpu_custom_call.1} parent=1 // loop_footer
      %s25 = sadd.s32 1, %s21
    $region7: #{tpu_custom_call.1} parent=1 // loop_footer_branch
      %20 = sbr.rel target = $region3
    $region8: #{tpu_custom_call.1} parent=1 // loop_exit
      _
    %3302 = vsyncpa [#allocation3], 1
    %s3303 = scalar_lea.sflag [#allocation3], 1
    %3304 = vsyncpa %s3303, 1
    %3305 = vsyncpa [#allocation4], 1
    %s3306 = scalar_lea.sflag [#allocation4], 1
    %3307 = vsyncpa %s3306, 1

</llo_original>
